<compile_context>
chip_gen: v6e
topology: v6e:2x2x1
jax: 0.10.0
libtpu: 0.0.40
codegen_flags: <defaults>
</compile_context>

<pallas_src>
import jax
import jax.numpy as jnp
from jax import lax
from jax.experimental import pallas as pl
from jax.experimental.pallas import tpu as pltpu


_COMPILER_PARAMS = pltpu.CompilerParams(vmem_limit_bytes=32 * 1024 * 1024)


# ----------------------------- Pallas kernels -------------------------------

def conv_relu_pool_kernel(p_ref, w_ref, b_ref, o_ref):
    """Fused conv(as matmul) + bias + ReLU + 2x2/stride-2 max-pool.

    p_ref: (4, M, K)   im2col patches; leading axis = the 4 taps of each
                       2x2 pooling window, M = N * Ho * Wo of the pooled grid.
    w_ref: (K, Cout)
    b_ref: (1, Cout)
    o_ref: (M, Cout)   pooled, ReLU'd conv output.
    """
    w = w_ref[...]
    b = b_ref[...]
    out = None
    for t in range(4):  # unrolled: 4 small MXU matmuls + VPU max, all in VMEM
        y = jnp.dot(p_ref[t], w, preferred_element_type=jnp.float32) + b
        y = jnp.maximum(y, 0.0)
        out = y if out is None else jnp.maximum(out, y)
    o_ref[...] = out


def conv_relu_pool(patches, w, b):
    _, m, _ = patches.shape
    cout = w.shape[1]
    return pl.pallas_call(
        conv_relu_pool_kernel,
        out_shape=jax.ShapeDtypeStruct((m, cout), jnp.float32),
        compiler_params=_COMPILER_PARAMS,
    )(patches, w, b.reshape(1, cout))


def fc_fused_kernel(x_ref, w1_ref, b1_ref, w2_ref, b2_ref, o_ref):
    """relu(x @ w1 + b1) @ w2 + b2, entirely resident in VMEM.

    x_ref/w1_ref are bf16 (halved HBM stream); accumulation and all bias /
    activation / fc2 math are f32.
    """
    h = jnp.dot(x_ref[...], w1_ref[...],
                preferred_element_type=jnp.float32) + b1_ref[...]
    h = jnp.maximum(h, 0.0)
    o_ref[...] = jnp.dot(h, w2_ref[...],
                         preferred_element_type=jnp.float32) + b2_ref[...]


def fc_fused(x, w1, b1, w2, b2):
    m = x.shape[0]
    n = w2.shape[1]
    return pl.pallas_call(
        fc_fused_kernel,
        out_shape=jax.ShapeDtypeStruct((m, n), jnp.float32),
        compiler_params=_COMPILER_PARAMS,
    )(x.astype(jnp.bfloat16), w1.astype(jnp.bfloat16),
      b1.reshape(1, -1), w2, b2.reshape(1, -1))


# --------------------------------- Glue --------------------------------------

def im2col_3x3_same(x):
    """(N,H,W,C) -> (N,H,W,9*C); zero pad 1; tap order (kh,kw) major, C minor."""
    n, h, w, c = x.shape
    xp = jnp.pad(x, ((0, 0), (1, 1), (1, 1), (0, 0)))
    cols = [xp[:, kh:kh + h, kw:kw + w, :]
            for kh in range(3) for kw in range(3)]
    return jnp.concatenate(cols, axis=-1)


def pool_window_stack(patches):
    """(N,H,W,K) with even H,W -> (4, N*(H//2)*(W//2), K).

    Leading axis enumerates the 2x2 max-pool window taps so the pooling max
    can be fused into the conv kernel.
    """
    n, h, w, k = patches.shape
    m = n * (h // 2) * (w // 2)
    taps = [patches[:, di::2, dj::2, :].reshape(m, k)
            for di in range(2) for dj in range(2)]
    return jnp.stack(taps, axis=0)


def cnn_fmnist_forward(x_nchw, params):
    x = jnp.transpose(x_nchw, (0, 2, 3, 1)).astype(jnp.float32)  # (N,28,28,1)
    n = x.shape[0]

    # conv1 (1->32, k=3, pad=1) + ReLU + maxpool(2,2): one fused kernel.
    p1 = pool_window_stack(im2col_3x3_same(x))             # (4, N*14*14, 9)
    y1 = conv_relu_pool(p1, params["w1"], params["b1"])    # (N*14*14, 32)
    y1 = y1.reshape(n, 14, 14, 32)

    # conv2 (32->64, k=3, pad=1) + ReLU + maxpool(2,2): one fused kernel.
    p2 = pool_window_stack(im2col_3x3_same(y1))            # (4, N*7*7, 288)
    y2 = conv_relu_pool(p2, params["w2"], params["b2"])    # (N*7*7, 64)

    # flatten (H,W,C) + fc1 + ReLU + fc2: one fused kernel (raw logits).
    flat = y2.reshape(n, 7 * 7 * 64)                       # (N, 3136)
    return fc_fused(flat, params["wf1"], params["bf1"],
                    params["wf2"], params["bf2"])          # (N, 10)


# ------------------------ Params & pure-JAX reference ------------------------

def init_params(key):
    ks = jax.random.split(key, 8)

    def u(k, shape, fan_in):
        bound = 1.0 / jnp.sqrt(jnp.float32(fan_in))
        return jax.random.uniform(k, shape, jnp.float32, -bound, bound)

    return dict(
        w1=u(ks[0], (9, 32), 9),          b1=u(ks[1], (32,), 9),
        w2=u(ks[2], (288, 64), 288),      b2=u(ks[3], (64,), 288),
        wf1=u(ks[4], (3136, 128), 3136),  bf1=u(ks[5], (128,), 3136),
        wf2=u(ks[6], (128, 10), 128),     bf2=u(ks[7], (10,), 128),
    )


def _conv_relu_pool_ref(x, w_hwio, b):
    y = lax.conv_general_dilated(
        x, w_hwio, (1, 1), ((1, 1), (1, 1)),
        dimension_numbers=("NHWC", "HWIO", "NHWC"))
    y = jax.nn.relu(y + b)
    return lax.reduce_window(y, -jnp.inf, lax.max,
                             (1, 2, 2, 1), (1, 2, 2, 1), "VALID")


def reference_forward(x_nchw, params, *, bf16_fc1=False):
    x = jnp.transpose(x_nchw, (0, 2, 3, 1)).astype(jnp.float32)
    y = _conv_relu_pool_ref(x, params["w1"].reshape(3, 3, 1, 32), params["b1"])
    y = _conv_relu_pool_ref(y, params["w2"].reshape(3, 3, 32, 64), params["b2"])
    flat = y.reshape(y.shape[0], -1)
    if bf16_fc1:
        # Mirror the kernel's bf16-input / f32-accumulate fc1 matmul.
        h = jnp.dot(flat.astype(jnp.bfloat16), params["wf1"].astype(jnp.bfloat16),
                    preferred_element_type=jnp.float32) + params["bf1"]
    else:
        h = flat @ params["wf1"] + params["bf1"]
    h = jax.nn.relu(h)
    return h @ params["wf2"] + params["bf2"]


# ---------------------------------- Main --------------------------------------

if __name__ == "__main__":
    key = jax.random.PRNGKey(0)
    kp, kx = jax.random.split(key)
    params = init_params(kp)

    # PyTorch-style NCHW input; 28x28 is required by fc1 (64*7*7 = 3136).
    x = jax.random.normal(kx, (2, 1, 28, 28), jnp.float32)

    fwd = jax.jit(cnn_fmnist_forward)
    out = jax.block_until_ready(fwd(x, params))
    assert out.shape == (2, 10), out.shape

    # Tight structural check against a reference using the same bf16 rounding
    # on the fc1 matmul inputs.
    ref_bf16 = reference_forward(x, params, bf16_fc1=True)
    err_bf16 = float(jnp.max(jnp.abs(out - ref_bf16)))
    assert jnp.allclose(out, ref_bf16, atol=5e-4, rtol=5e-4), err_bf16

    # Looser semantic check against the full-f32 reference (bf16 fc1 weights
    # introduce ~1e-3 absolute error on the logits; tolerance widened).
    ref_f32 = reference_forward(x, params, bf16_fc1=False)
    err_f32 = float(jnp.max(jnp.abs(out - ref_f32)))
    assert jnp.allclose(out, ref_f32, atol=3e-2, rtol=3e-2), err_f32

    print("KERNEL_OK")
</pallas_src>

<mosaic_0001>
module attributes {stable_mosaic.version = 11 : i64} {
  func.func @conv_relu_pool_kernel(%arg0: memref<4x392x9xf32, #tpu.memory_space<vmem>>, %arg1: memref<9x32xf32, #tpu.memory_space<vmem>>, %arg2: memref<1x32xf32, #tpu.memory_space<vmem>>, %arg3: memref<392x32xf32, #tpu.memory_space<vmem>>) attributes {dimension_semantics = [], scalar_prefetch = 0 : i64, scratch_operands = 0 : i64, tpu.core_type = #tpu.core_type<tc>} {
    %c0 = arith.constant 0 : index
    %c0_0 = arith.constant 0 : index
    %0 = vector.load %arg1[%c0, %c0_0] : memref<9x32xf32, #tpu.memory_space<vmem>>, vector<9x32xf32>
    %c0_1 = arith.constant 0 : index
    %c0_2 = arith.constant 0 : index
    %1 = vector.load %arg2[%c0_1, %c0_2] : memref<1x32xf32, #tpu.memory_space<vmem>>, vector<1x32xf32>
    %c0_3 = arith.constant 0 : index
    %c0_4 = arith.constant 0 : index
    %c0_5 = arith.constant 0 : index
    %2 = vector.load %arg0[%c0_3, %c0_4, %c0_5] : memref<4x392x9xf32, #tpu.memory_space<vmem>>, vector<1x392x9xf32>
    %3 = vector.shape_cast %2 : vector<1x392x9xf32> to vector<392x9xf32>
    %cst = arith.constant dense<0.000000e+00> : vector<392x32xf32>
    %4 = tpu.matmul %3, %0, %cst {dimension_numbers = #tpu.dot_dimension_numbers<[1], [0], [0], [1], [0, 0, 1, 1], [], []>} : vector<392x9xf32>, vector<9x32xf32>, vector<392x32xf32> -> vector<392x32xf32>
    %5 = vector.broadcast %1 : vector<1x32xf32> to vector<392x32xf32>
    %6 = arith.addf %4, %5 : vector<392x32xf32>
    %cst_6 = arith.constant 0.000000e+00 : f32
    %7 = vector.broadcast %cst_6 : f32 to vector<392x32xf32>
    %8 = arith.maximumf %6, %7 : vector<392x32xf32>
    %c1 = arith.constant 1 : index
    %c0_7 = arith.constant 0 : index
    %c0_8 = arith.constant 0 : index
    %9 = vector.load %arg0[%c1, %c0_7, %c0_8] : memref<4x392x9xf32, #tpu.memory_space<vmem>>, vector<1x392x9xf32>
    %10 = vector.shape_cast %9 : vector<1x392x9xf32> to vector<392x9xf32>
    %cst_9 = arith.constant dense<0.000000e+00> : vector<392x32xf32>
    %11 = tpu.matmul %10, %0, %cst_9 {dimension_numbers = #tpu.dot_dimension_numbers<[1], [0], [0], [1], [0, 0, 1, 1], [], []>} : vector<392x9xf32>, vector<9x32xf32>, vector<392x32xf32> -> vector<392x32xf32>
    %12 = vector.broadcast %1 : vector<1x32xf32> to vector<392x32xf32>
    %13 = arith.addf %11, %12 : vector<392x32xf32>
    %cst_10 = arith.constant 0.000000e+00 : f32
    %14 = vector.broadcast %cst_10 : f32 to vector<392x32xf32>
    %15 = arith.maximumf %13, %14 : vector<392x32xf32>
    %16 = arith.maximumf %8, %15 : vector<392x32xf32>
    %c2 = arith.constant 2 : index
    %c0_11 = arith.constant 0 : index
    %c0_12 = arith.constant 0 : index
    %17 = vector.load %arg0[%c2, %c0_11, %c0_12] : memref<4x392x9xf32, #tpu.memory_space<vmem>>, vector<1x392x9xf32>
    %18 = vector.shape_cast %17 : vector<1x392x9xf32> to vector<392x9xf32>
    %cst_13 = arith.constant dense<0.000000e+00> : vector<392x32xf32>
    %19 = tpu.matmul %18, %0, %cst_13 {dimension_numbers = #tpu.dot_dimension_numbers<[1], [0], [0], [1], [0, 0, 1, 1], [], []>} : vector<392x9xf32>, vector<9x32xf32>, vector<392x32xf32> -> vector<392x32xf32>
    %20 = vector.broadcast %1 : vector<1x32xf32> to vector<392x32xf32>
    %21 = arith.addf %19, %20 : vector<392x32xf32>
    %cst_14 = arith.constant 0.000000e+00 : f32
    %22 = vector.broadcast %cst_14 : f32 to vector<392x32xf32>
    %23 = arith.maximumf %21, %22 : vector<392x32xf32>
    %24 = arith.maximumf %16, %23 : vector<392x32xf32>
    %c3 = arith.constant 3 : index
    %c0_15 = arith.constant 0 : index
    %c0_16 = arith.constant 0 : index
    %25 = vector.load %arg0[%c3, %c0_15, %c0_16] : memref<4x392x9xf32, #tpu.memory_space<vmem>>, vector<1x392x9xf32>
    %26 = vector.shape_cast %25 : vector<1x392x9xf32> to vector<392x9xf32>
    %cst_17 = arith.constant dense<0.000000e+00> : vector<392x32xf32>
    %27 = tpu.matmul %26, %0, %cst_17 {dimension_numbers = #tpu.dot_dimension_numbers<[1], [0], [0], [1], [0, 0, 1, 1], [], []>} : vector<392x9xf32>, vector<9x32xf32>, vector<392x32xf32> -> vector<392x32xf32>
    %28 = vector.broadcast %1 : vector<1x32xf32> to vector<392x32xf32>
    %29 = arith.addf %27, %28 : vector<392x32xf32>
    %cst_18 = arith.constant 0.000000e+00 : f32
    %30 = vector.broadcast %cst_18 : f32 to vector<392x32xf32>
    %31 = arith.maximumf %29, %30 : vector<392x32xf32>
    %32 = arith.maximumf %24, %31 : vector<392x32xf32>
    %c0_19 = arith.constant 0 : index
    %c0_20 = arith.constant 0 : index
    %33 = vector.load %arg3[%c0_19, %c0_20] : memref<392x32xf32, #tpu.memory_space<vmem>>, vector<392x32xf32>
    tpu.vector_store %arg3[%c0_19, %c0_20], %32 {strides = array<i32>} : memref<392x32xf32, #tpu.memory_space<vmem>>, vector<392x32xf32>,
    return
  }
}

module attributes {stable_mosaic.version = 11 : i64} {
  func.func @conv_relu_pool_kernel(%arg0: memref<4x98x288xf32, #tpu.memory_space<vmem>>, %arg1: memref<288x64xf32, #tpu.memory_space<vmem>>, %arg2: memref<1x64xf32, #tpu.memory_space<vmem>>, %arg3: memref<98x64xf32, #tpu.memory_space<vmem>>) attributes {dimension_semantics = [], scalar_prefetch = 0 : i64, scratch_operands = 0 : i64, tpu.core_type = #tpu.core_type<tc>} {
    %c0 = arith.constant 0 : index
    %c0_0 = arith.constant 0 : index
    %0 = vector.load %arg1[%c0, %c0_0] : memref<288x64xf32, #tpu.memory_space<vmem>>, vector<288x64xf32>
    %c0_1 = arith.constant 0 : index
    %c0_2 = arith.constant 0 : index
    %1 = vector.load %arg2[%c0_1, %c0_2] : memref<1x64xf32, #tpu.memory_space<vmem>>, vector<1x64xf32>
    %c0_3 = arith.constant 0 : index
    %c0_4 = arith.constant 0 : index
    %c0_5 = arith.constant 0 : index
    %2 = vector.load %arg0[%c0_3, %c0_4, %c0_5] : memref<4x98x288xf32, #tpu.memory_space<vmem>>, vector<1x98x288xf32>
    %3 = vector.shape_cast %2 : vector<1x98x288xf32> to vector<98x288xf32>
    %cst = arith.constant dense<0.000000e+00> : vector<98x64xf32>
    %4 = tpu.matmul %3, %0, %cst {dimension_numbers = #tpu.dot_dimension_numbers<[1], [0], [0], [1], [0, 0, 1, 1], [], []>} : vector<98x288xf32>, vector<288x64xf32>, vector<98x64xf32> -> vector<98x64xf32>
    %5 = vector.broadcast %1 : vector<1x64xf32> to vector<98x64xf32>
    %6 = arith.addf %4, %5 : vector<98x64xf32>
    %cst_6 = arith.constant 0.000000e+00 : f32
    %7 = vector.broadcast %cst_6 : f32 to vector<98x64xf32>
    %8 = arith.maximumf %6, %7 : vector<98x64xf32>
    %c1 = arith.constant 1 : index
    %c0_7 = arith.constant 0 : index
    %c0_8 = arith.constant 0 : index
    %9 = vector.load %arg0[%c1, %c0_7, %c0_8] : memref<4x98x288xf32, #tpu.memory_space<vmem>>, vector<1x98x288xf32>
    %10 = vector.shape_cast %9 : vector<1x98x288xf32> to vector<98x288xf32>
    %cst_9 = arith.constant dense<0.000000e+00> : vector<98x64xf32>
    %11 = tpu.matmul %10, %0, %cst_9 {dimension_numbers = #tpu.dot_dimension_numbers<[1], [0], [0], [1], [0, 0, 1, 1], [], []>} : vector<98x288xf32>, vector<288x64xf32>, vector<98x64xf32> -> vector<98x64xf32>
    %12 = vector.broadcast %1 : vector<1x64xf32> to vector<98x64xf32>
    %13 = arith.addf %11, %12 : vector<98x64xf32>
    %cst_10 = arith.constant 0.000000e+00 : f32
    %14 = vector.broadcast %cst_10 : f32 to vector<98x64xf32>
    %15 = arith.maximumf %13, %14 : vector<98x64xf32>
    %16 = arith.maximumf %8, %15 : vector<98x64xf32>
    %c2 = arith.constant 2 : index
    %c0_11 = arith.constant 0 : index
    %c0_12 = arith.constant 0 : index
    %17 = vector.load %arg0[%c2, %c0_11, %c0_12] : memref<4x98x288xf32, #tpu.memory_space<vmem>>, vector<1x98x288xf32>
    %18 = vector.shape_cast %17 : vector<1x98x288xf32> to vector<98x288xf32>
    %cst_13 = arith.constant dense<0.000000e+00> : vector<98x64xf32>
    %19 = tpu.matmul %18, %0, %cst_13 {dimension_numbers = #tpu.dot_dimension_numbers<[1], [0], [0], [1], [0, 0, 1, 1], [], []>} : vector<98x288xf32>, vector<288x64xf32>, vector<98x64xf32> -> vector<98x64xf32>
    %20 = vector.broadcast %1 : vector<1x64xf32> to vector<98x64xf32>
    %21 = arith.addf %19, %20 : vector<98x64xf32>
    %cst_14 = arith.constant 0.000000e+00 : f32
    %22 = vector.broadcast %cst_14 : f32 to vector<98x64xf32>
    %23 = arith.maximumf %21, %22 : vector<98x64xf32>
    %24 = arith.maximumf %16, %23 : vector<98x64xf32>
    %c3 = arith.constant 3 : index
    %c0_15 = arith.constant 0 : index
    %c0_16 = arith.constant 0 : index
    %25 = vector.load %arg0[%c3, %c0_15, %c0_16] : memref<4x98x288xf32, #tpu.memory_space<vmem>>, vector<1x98x288xf32>
    %26 = vector.shape_cast %25 : vector<1x98x288xf32> to vector<98x288xf32>
    %cst_17 = arith.constant dense<0.000000e+00> : vector<98x64xf32>
    %27 = tpu.matmul %26, %0, %cst_17 {dimension_numbers = #tpu.dot_dimension_numbers<[1], [0], [0], [1], [0, 0, 1, 1], [], []>} : vector<98x288xf32>, vector<288x64xf32>, vector<98x64xf32> -> vector<98x64xf32>
    %28 = vector.broadcast %1 : vector<1x64xf32> to vector<98x64xf32>
    %29 = arith.addf %27, %28 : vector<98x64xf32>
    %cst_18 = arith.constant 0.000000e+00 : f32
    %30 = vector.broadcast %cst_18 : f32 to vector<98x64xf32>
    %31 = arith.maximumf %29, %30 : vector<98x64xf32>
    %32 = arith.maximumf %24, %31 : vector<98x64xf32>
    %c0_19 = arith.constant 0 : index
    %c0_20 = arith.constant 0 : index
    %33 = vector.load %arg3[%c0_19, %c0_20] : memref<98x64xf32, #tpu.memory_space<vmem>>, vector<98x64xf32>
    tpu.vector_store %arg3[%c0_19, %c0_20], %32 {strides = array<i32>} : memref<98x64xf32, #tpu.memory_space<vmem>>, vector<98x64xf32>,
    return
  }
}

module attributes {stable_mosaic.version = 11 : i64} {
  func.func @fc_fused_kernel(%arg0: memref<2x3136xbf16, #tpu.memory_space<vmem>>, %arg1: memref<3136x128xbf16, #tpu.memory_space<vmem>>, %arg2: memref<1x128xf32, #tpu.memory_space<vmem>>, %arg3: memref<128x10xf32, #tpu.memory_space<vmem>>, %arg4: memref<1x10xf32, #tpu.memory_space<vmem>>, %arg5: memref<2x10xf32, #tpu.memory_space<vmem>>) attributes {dimension_semantics = [], scalar_prefetch = 0 : i64, scratch_operands = 0 : i64, tpu.core_type = #tpu.core_type<tc>} {
    %c0 = arith.constant 0 : index
    %c0_0 = arith.constant 0 : index
    %0 = vector.load %arg0[%c0, %c0_0] : memref<2x3136xbf16, #tpu.memory_space<vmem>>, vector<2x3136xbf16>
    %c0_1 = arith.constant 0 : index
    %c0_2 = arith.constant 0 : index
    %1 = vector.load %arg1[%c0_1, %c0_2] : memref<3136x128xbf16, #tpu.memory_space<vmem>>, vector<3136x128xbf16>
    %cst = arith.constant dense<0.000000e+00> : vector<2x128xf32>
    %2 = tpu.matmul %0, %1, %cst {dimension_numbers = #tpu.dot_dimension_numbers<[1], [0], [0], [1], [0, 0, 1, 1], [], []>} : vector<2x3136xbf16>, vector<3136x128xbf16>, vector<2x128xf32> -> vector<2x128xf32>
    %c0_3 = arith.constant 0 : index
    %c0_4 = arith.constant 0 : index
    %3 = vector.load %arg2[%c0_3, %c0_4] : memref<1x128xf32, #tpu.memory_space<vmem>>, vector<1x128xf32>
    %4 = vector.broadcast %3 : vector<1x128xf32> to vector<2x128xf32>
    %5 = arith.addf %2, %4 : vector<2x128xf32>
    %cst_5 = arith.constant 0.000000e+00 : f32
    %6 = vector.broadcast %cst_5 : f32 to vector<2x128xf32>
    %7 = arith.maximumf %5, %6 : vector<2x128xf32>
    %c0_6 = arith.constant 0 : index
    %c0_7 = arith.constant 0 : index
    %8 = vector.load %arg3[%c0_6, %c0_7] : memref<128x10xf32, #tpu.memory_space<vmem>>, vector<128x10xf32>
    %cst_8 = arith.constant dense<0.000000e+00> : vector<2x10xf32>
    %9 = tpu.matmul %7, %8, %cst_8 {dimension_numbers = #tpu.dot_dimension_numbers<[1], [0], [0], [1], [0, 0, 1, 1], [], []>} : vector<2x128xf32>, vector<128x10xf32>, vector<2x10xf32> -> vector<2x10xf32>
    %c0_9 = arith.constant 0 : index
    %c0_10 = arith.constant 0 : index
    %10 = vector.load %arg4[%c0_9, %c0_10] : memref<1x10xf32, #tpu.memory_space<vmem>>, vector<1x10xf32>
    %11 = vector.broadcast %10 : vector<1x10xf32> to vector<2x10xf32>
    %12 = arith.addf %9, %11 : vector<2x10xf32>
    %c0_11 = arith.constant 0 : index
    %c0_12 = arith.constant 0 : index
    %13 = vector.load %arg5[%c0_11, %c0_12] : memref<2x10xf32, #tpu.memory_space<vmem>>, vector<2x10xf32>
    tpu.vector_store %arg5[%c0_11, %c0_12], %12 {strides = array<i32>} : memref<2x10xf32, #tpu.memory_space<vmem>>, vector<2x10xf32>,
    return
  }
}

</mosaic_0001>

<llo_original>
// kernel: cnn_fmnist_forward.3
$region0: #{cnn_fmnist_forward.3}
  #allocation0 [shape = 'u32[]', space=smem, size = 0x4, offset = 0x4, fixed_abs, tag = 'smem constant byte address 0x4 - core index']
  #allocation1 [shape = 'u32[144,128]{1,0:T(1,128)}', space=vmem, size = 0x12000, scoped, tag = 'internal scratch']
  %s0 = inlined_call_operand.vmem [shape: f32[4,392,9], index: 0, kind: input, shape index: {}]
  %s1 = inlined_call_operand.vmem [shape: f32[9,32], index: 1, kind: input, shape index: {}]
  %s2 = inlined_call_operand.vmem [shape: f32[1,32], index: 2, kind: input, shape index: {}]
  %s3 = inlined_call_operand.vmem [shape: f32[392,32], index: 3, kind: output, shape index: {}]
  %s4 = sld [smem:[#allocation0]]
  $region22: #{cnn_fmnist_forward.3} parent=0
    _
  %s6 = ssub.s32 1, %s4
  %s7 = scalar_select 0, %s6, %s4
  // Predicated region
  $region2: #{cnn_fmnist_forward.3} parent=0 // pred_check
    _
  $region3: #{cnn_fmnist_forward.3} parent=0 // pred_check_branch
    %9 = sbr.rel (0) target = $region5
  $region4: #{cnn_fmnist_forward.3} parent=0 // pred_region
    _
  $region5: #{cnn_fmnist_forward.3} parent=0 // pred_fallthru
    _
  // Predicated region
  $region6: #{cnn_fmnist_forward.3} parent=0 // pred_check
    _
  $region7: #{cnn_fmnist_forward.3} parent=0 // pred_check_branch
    %11 = sbr.rel (0) target = $region9
  $region8: #{cnn_fmnist_forward.3} parent=0 // pred_region
    _
  $region9: #{cnn_fmnist_forward.3} parent=0 // pred_fallthru
    _
  // Predicated region
  $region10: #{cnn_fmnist_forward.3} parent=0 // pred_check
    _
  $region11: #{cnn_fmnist_forward.3} parent=0 // pred_check_branch
    %13 = sbr.rel (0) target = $region13
  $region12: #{cnn_fmnist_forward.3} parent=0 // pred_region
    _
  $region13: #{cnn_fmnist_forward.3} parent=0 // pred_fallthru
    _
  %v14 = vld [vmem:[%s1] sm:$0xff]
  %v15 = vld [vmem:[%s1 + $0x8] sm:$0x1]
  %v16 = vld [vmem:[%s2] sm:$0x1]
  %v17 = vld [vmem:[%s0] sm:$0xff]
  %v18 = vld [vmem:[%s0 + $0x8] sm:$0xff]
  %v19 = vld [vmem:[%s0 + $0x10] sm:$0xff]
  %v20 = vld [vmem:[%s0 + $0x18] sm:$0xff]
  %v21 = vld [vmem:[%s0 + $0x20] sm:$0xff]
  %v22 = vld [vmem:[%s0 + $0x28] sm:$0xff]
  %v23 = vld [vmem:[%s0 + $0x30] sm:$0xff]
  %v24 = vld [vmem:[%s0 + $0x38] sm:$0xff]
  %v25 = vld [vmem:[%s0 + $0x40] sm:$0xff]
  %v26 = vld [vmem:[%s0 + $0x48] sm:$0xff]
  %v27 = vld [vmem:[%s0 + $0x50] sm:$0xff]
  %v28 = vld [vmem:[%s0 + $0x58] sm:$0xff]
  %v29 = vld [vmem:[%s0 + $0x60] sm:$0xff]
  %v30 = vld [vmem:[%s0 + $0x68] sm:$0xff]
  %v31 = vld [vmem:[%s0 + $0x70] sm:$0xff]
  %v32 = vld [vmem:[%s0 + $0x78] sm:$0xff]
  %v33 = vld [vmem:[%s0 + $0x80] sm:$0xff]
  %v34 = vld [vmem:[%s0 + $0x88] sm:$0xff]
  %v35 = vld [vmem:[%s0 + $0x90] sm:$0xff]
  %v36 = vld [vmem:[%s0 + $0x98] sm:$0xff]
  %v37 = vld [vmem:[%s0 + $0xa0] sm:$0xff]
  %v38 = vld [vmem:[%s0 + $0xa8] sm:$0xff]
  %v39 = vld [vmem:[%s0 + $0xb0] sm:$0xff]
  %v40 = vld [vmem:[%s0 + $0xb8] sm:$0xff]
  %v41 = vld [vmem:[%s0 + $0xc0] sm:$0xff]
  %v42 = vld [vmem:[%s0 + $0xc8] sm:$0xff]
  %v43 = vld [vmem:[%s0 + $0xd0] sm:$0xff]
  %v44 = vld [vmem:[%s0 + $0xd8] sm:$0xff]
  %v45 = vld [vmem:[%s0 + $0xe0] sm:$0xff]
  %v46 = vld [vmem:[%s0 + $0xe8] sm:$0xff]
  %v47 = vld [vmem:[%s0 + $0xf0] sm:$0xff]
  %v48 = vld [vmem:[%s0 + $0xf8] sm:$0xff]
  %v49 = vld [vmem:[%s0 + $0x100] sm:$0xff]
  %v50 = vld [vmem:[%s0 + $0x108] sm:$0xff]
  %v51 = vld [vmem:[%s0 + $0x110] sm:$0xff]
  %v52 = vld [vmem:[%s0 + $0x118] sm:$0xff]
  %v53 = vld [vmem:[%s0 + $0x120] sm:$0xff]
  %v54 = vld [vmem:[%s0 + $0x128] sm:$0xff]
  %v55 = vld [vmem:[%s0 + $0x130] sm:$0xff]
  %v56 = vld [vmem:[%s0 + $0x138] sm:$0xff]
  %v57 = vld [vmem:[%s0 + $0x140] sm:$0xff]
  %v58 = vld [vmem:[%s0 + $0x148] sm:$0xff]
  %v59 = vld [vmem:[%s0 + $0x150] sm:$0xff]
  %v60 = vld [vmem:[%s0 + $0x158] sm:$0xff]
  %v61 = vld [vmem:[%s0 + $0x160] sm:$0xff]
  %v62 = vld [vmem:[%s0 + $0x168] sm:$0xff]
  %v63 = vld [vmem:[%s0 + $0x170] sm:$0xff]
  %v64 = vld [vmem:[%s0 + $0x178] sm:$0xff]
  %v65 = vld [vmem:[%s0 + $0x180] sm:$0xff]
  %v67 = vlaneseq
  %v68 = vshrl.u32 %v67, 7
  %v69 = vsub.s32 0, %v68
  %v70 = vrot.slane %v16, %v69
  %vm72 = vcmask 72704
  %v74 = vsel %vm72, %v17, 0
  %v77 = vsel %vm72, %v18, 0
  %v80 = vsel %vm72, %v19, 0
  %v83 = vsel %vm72, %v20, 0
  %v86 = vsel %vm72, %v21, 0
  %v89 = vsel %vm72, %v22, 0
  %v92 = vsel %vm72, %v23, 0
  %v95 = vsel %vm72, %v24, 0
  %v98 = vsel %vm72, %v25, 0
  %v101 = vsel %vm72, %v26, 0
  %v104 = vsel %vm72, %v27, 0
  %v107 = vsel %vm72, %v28, 0
  %v110 = vsel %vm72, %v29, 0
  %v113 = vsel %vm72, %v30, 0
  %v116 = vsel %vm72, %v31, 0
  %v119 = vsel %vm72, %v32, 0
  %v122 = vsel %vm72, %v33, 0
  %v125 = vsel %vm72, %v34, 0
  %v128 = vsel %vm72, %v35, 0
  %v131 = vsel %vm72, %v36, 0
  %v134 = vsel %vm72, %v37, 0
  %v137 = vsel %vm72, %v38, 0
  %v140 = vsel %vm72, %v39, 0
  %v143 = vsel %vm72, %v40, 0
  %v146 = vsel %vm72, %v41, 0
  %v149 = vsel %vm72, %v42, 0
  %v152 = vsel %vm72, %v43, 0
  %v155 = vsel %vm72, %v44, 0
  %v158 = vsel %vm72, %v45, 0
  %v161 = vsel %vm72, %v46, 0
  %v164 = vsel %vm72, %v47, 0
  %v167 = vsel %vm72, %v48, 0
  %v170 = vsel %vm72, %v49, 0
  %v173 = vsel %vm72, %v50, 0
  %v176 = vsel %vm72, %v51, 0
  %v179 = vsel %vm72, %v52, 0
  %v182 = vsel %vm72, %v53, 0
  %v185 = vsel %vm72, %v54, 0
  %v188 = vsel %vm72, %v55, 0
  %v191 = vsel %vm72, %v56, 0
  %v194 = vsel %vm72, %v57, 0
  %v197 = vsel %vm72, %v58, 0
  %v200 = vsel %vm72, %v59, 0
  %v203 = vsel %vm72, %v60, 0
  %v206 = vsel %vm72, %v61, 0
  %v209 = vsel %vm72, %v62, 0
  %v212 = vsel %vm72, %v63, 0
  %v215 = vsel %vm72, %v64, 0
  %v218 = vsel %vm72, %v65, 0
  %vm220 = vcmask 1040384
  %v222 = vsel %vm220, %v15, 0
  %224 = vmatprep.subr.mxu0 0.0
  %225 = vmatpush1.msra.mxu0 0.0
  %226 = vmatprep.subr.mxu0 0.0
  %227 = vmatpush1.msra.mxu0 0.0
  %228 = vmatprep.subr.mxu0 0.0
  %229 = vmatpush1.msra.mxu0 0.0
  %230 = vmatprep.subr.mxu0 0.0
  %231 = vmatpush1.msra.mxu0 0.0
  %232 = vmatprep.subr.mxu0 0.0
  %233 = vmatpush1.msra.mxu0 0.0
  %234 = vmatprep.subr.mxu0 0.0
  %235 = vmatpush1.msra.mxu0 0.0
  %236 = vmatprep.subr.mxu0 0.0
  %237 = vmatpush1.msra.mxu0 0.0
  %238 = vmatprep.subr.mxu0 0.0
  %239 = vmatpush1.msra.mxu0 0.0
  %240 = vmatprep.subr.mxu0 0.0
  %241 = vmatpush1.msra.mxu0 0.0
  %242 = vmatprep.subr.mxu0 0.0
  %243 = vmatpush1.msra.mxu0 0.0
  %244 = vmatprep.subr.mxu0 0.0
  %245 = vmatpush1.msra.mxu0 0.0
  %246 = vmatprep.subr.mxu0 0.0
  %247 = vmatpush1.msra.mxu0 0.0
  %248 = vmatprep.subr.mxu0 0.0
  %249 = vmatpush1.msra.mxu0 0.0
  %250 = vmatprep.subr.mxu0 0.0
  %251 = vmatpush1.msra.mxu0 0.0
  %252 = vmatprep.subr.mxu0 0.0
  %253 = vmatpush1.msra.mxu0 %v222
  %254 = vmatprep.subr.mxu0 0.0
  %255 = vmatpush1.msra.mxu0 %v14
  %256 = vmatprep.subr.mxu0 0.0
  %257 = vmatpush2.msra.mxu0 0.0
  %258 = vmatprep.subr.mxu0 0.0
  %259 = vmatpush2.msra.mxu0 0.0
  %260 = vmatprep.subr.mxu0 0.0
  %261 = vmatpush2.msra.mxu0 0.0
  %262 = vmatprep.subr.mxu0 0.0
  %263 = vmatpush2.msra.mxu0 0.0
  %264 = vmatprep.subr.mxu0 0.0
  %265 = vmatpush2.msra.mxu0 0.0
  %266 = vmatprep.subr.mxu0 0.0
  %267 = vmatpush2.msra.mxu0 0.0
  %268 = vmatprep.subr.mxu0 0.0
  %269 = vmatpush2.msra.mxu0 0.0
  %270 = vmatprep.subr.mxu0 0.0
  %271 = vmatpush2.msra.mxu0 0.0
  %272 = vmatprep.subr.mxu0 0.0
  %273 = vmatpush2.msra.mxu0 0.0
  %274 = vmatprep.subr.mxu0 0.0
  %275 = vmatpush2.msra.mxu0 0.0
  %276 = vmatprep.subr.mxu0 0.0
  %277 = vmatpush2.msra.mxu0 0.0
  %278 = vmatprep.subr.mxu0 0.0
  %279 = vmatpush2.msra.mxu0 0.0
  %280 = vmatprep.subr.mxu0 0.0
  %281 = vmatpush2.msra.mxu0 0.0
  %282 = vmatprep.subr.mxu0 0.0
  %283 = vmatpush2.msra.mxu0 0.0
  %284 = vmatprep.subr.mxu0 0.0
  %285 = vmatpush2.msra.mxu0 0.0
  %286 = vmatprep.subr.mxu0 0.0
  %287 = vmatpush2.msra.mxu0 0.0
  %288 = vmatprep.mubr.f32.mxu0 0.0
  %289 = vmatmul.mubr.f32.gmra.mxu0 %v74
  %v290 = vpop.f32.mrf.mxu0
  %v291 = vadd.f32 %v70, %v290
  %v292 = vpop.f32.mrf.mxu0
  %293 = vmatprep.mubr.f32.mxu0 0.0
  %294 = vmatmul.mubr.f32.gmra.mxu0 %v77
  %v295 = vpop.f32.mrf.mxu0
  %v296 = vadd.f32 %v70, %v295
  %v297 = vpop.f32.mrf.mxu0
  %298 = vmatprep.mubr.f32.mxu0 0.0
  %299 = vmatmul.mubr.f32.gmra.mxu0 %v80
  %v300 = vpop.f32.mrf.mxu0
  %v301 = vadd.f32 %v70, %v300
  %v302 = vpop.f32.mrf.mxu0
  %303 = vmatprep.mubr.f32.mxu0 0.0
  %304 = vmatmul.mubr.f32.gmra.mxu0 %v83
  %v305 = vpop.f32.mrf.mxu0
  %v306 = vadd.f32 %v70, %v305
  %v307 = vpop.f32.mrf.mxu0
  %308 = vmatprep.mubr.f32.mxu0 0.0
  %309 = vmatmul.mubr.f32.gmra.mxu0 %v86
  %v310 = vpop.f32.mrf.mxu0
  %v311 = vadd.f32 %v70, %v310
  %v312 = vpop.f32.mrf.mxu0
  %313 = vmatprep.mubr.f32.mxu0 0.0
  %314 = vmatmul.mubr.f32.gmra.mxu0 %v89
  %v315 = vpop.f32.mrf.mxu0
  %v316 = vadd.f32 %v70, %v315
  %v317 = vpop.f32.mrf.mxu0
  %318 = vmatprep.mubr.f32.mxu0 0.0
  %319 = vmatmul.mubr.f32.gmra.mxu0 %v92
  %v320 = vpop.f32.mrf.mxu0
  %v321 = vadd.f32 %v70, %v320
  %v322 = vpop.f32.mrf.mxu0
  %323 = vmatprep.mubr.f32.mxu0 0.0
  %324 = vmatmul.mubr.f32.gmra.mxu0 %v95
  %v325 = vpop.f32.mrf.mxu0
  %v326 = vadd.f32 %v70, %v325
  %v327 = vpop.f32.mrf.mxu0
  %328 = vmatprep.mubr.f32.mxu0 0.0
  %329 = vmatmul.mubr.f32.gmra.mxu0 %v98
  %v330 = vpop.f32.mrf.mxu0
  %v331 = vadd.f32 %v70, %v330
  %v332 = vpop.f32.mrf.mxu0
  %333 = vmatprep.mubr.f32.mxu0 0.0
  %334 = vmatmul.mubr.f32.gmra.mxu0 %v101
  %v335 = vpop.f32.mrf.mxu0
  %v336 = vadd.f32 %v70, %v335
  %v337 = vpop.f32.mrf.mxu0
  %338 = vmatprep.mubr.f32.mxu0 0.0
  %339 = vmatmul.mubr.f32.gmra.mxu0 %v104
  %v340 = vpop.f32.mrf.mxu0
  %v341 = vadd.f32 %v70, %v340
  %v342 = vpop.f32.mrf.mxu0
  %343 = vmatprep.mubr.f32.mxu0 0.0
  %344 = vmatmul.mubr.f32.gmra.mxu0 %v107
  %v345 = vpop.f32.mrf.mxu0
  %v346 = vadd.f32 %v70, %v345
  %v347 = vpop.f32.mrf.mxu0
  %348 = vmatprep.mubr.f32.mxu0 0.0
  %349 = vmatmul.mubr.f32.gmra.mxu0 %v110
  %v350 = vpop.f32.mrf.mxu0
  %v351 = vadd.f32 %v70, %v350
  %v352 = vpop.f32.mrf.mxu0
  %353 = vmatprep.mubr.f32.mxu0 0.0
  %354 = vmatmul.mubr.f32.gmra.mxu0 %v113
  %v355 = vpop.f32.mrf.mxu0
  %v356 = vadd.f32 %v70, %v355
  %v357 = vpop.f32.mrf.mxu0
  %358 = vmatprep.mubr.f32.mxu0 0.0
  %359 = vmatmul.mubr.f32.gmra.mxu0 %v116
  %v360 = vpop.f32.mrf.mxu0
  %v361 = vadd.f32 %v70, %v360
  %v362 = vpop.f32.mrf.mxu0
  %363 = vmatprep.mubr.f32.mxu0 0.0
  %364 = vmatmul.mubr.f32.gmra.mxu0 %v119
  %v365 = vpop.f32.mrf.mxu0
  %v366 = vadd.f32 %v70, %v365
  %v367 = vpop.f32.mrf.mxu0
  %368 = vmatprep.mubr.f32.mxu0 0.0
  %369 = vmatmul.mubr.f32.gmra.mxu0 %v122
  %v370 = vpop.f32.mrf.mxu0
  %v371 = vadd.f32 %v70, %v370
  %v372 = vpop.f32.mrf.mxu0
  %373 = vmatprep.mubr.f32.mxu0 0.0
  %374 = vmatmul.mubr.f32.gmra.mxu0 %v125
  %v375 = vpop.f32.mrf.mxu0
  %v376 = vadd.f32 %v70, %v375
  %v377 = vpop.f32.mrf.mxu0
  %378 = vmatprep.mubr.f32.mxu0 0.0
  %379 = vmatmul.mubr.f32.gmra.mxu0 %v128
  %v380 = vpop.f32.mrf.mxu0
  %v381 = vadd.f32 %v70, %v380
  %v382 = vpop.f32.mrf.mxu0
  %383 = vmatprep.mubr.f32.mxu0 0.0
  %384 = vmatmul.mubr.f32.gmra.mxu0 %v131
  %v385 = vpop.f32.mrf.mxu0
  %v386 = vadd.f32 %v70, %v385
  %v387 = vpop.f32.mrf.mxu0
  %388 = vmatprep.mubr.f32.mxu0 0.0
  %389 = vmatmul.mubr.f32.gmra.mxu0 %v134
  %v390 = vpop.f32.mrf.mxu0
  %v391 = vadd.f32 %v70, %v390
  %v392 = vpop.f32.mrf.mxu0
  %393 = vmatprep.mubr.f32.mxu0 0.0
  %394 = vmatmul.mubr.f32.gmra.mxu0 %v137
  %v395 = vpop.f32.mrf.mxu0
  %v396 = vadd.f32 %v70, %v395
  %v397 = vpop.f32.mrf.mxu0
  %398 = vmatprep.mubr.f32.mxu0 0.0
  %399 = vmatmul.mubr.f32.gmra.mxu0 %v140
  %v400 = vpop.f32.mrf.mxu0
  %v401 = vadd.f32 %v70, %v400
  %v402 = vpop.f32.mrf.mxu0
  %403 = vmatprep.mubr.f32.mxu0 0.0
  %404 = vmatmul.mubr.f32.gmra.mxu0 %v143
  %v405 = vpop.f32.mrf.mxu0
  %v406 = vadd.f32 %v70, %v405
  %v407 = vpop.f32.mrf.mxu0
  %408 = vmatprep.mubr.f32.mxu0 0.0
  %409 = vmatmul.mubr.f32.gmra.mxu0 %v146
  %v410 = vpop.f32.mrf.mxu0
  %v411 = vadd.f32 %v70, %v410
  %v412 = vpop.f32.mrf.mxu0
  %413 = vmatprep.mubr.f32.mxu0 0.0
  %414 = vmatmul.mubr.f32.gmra.mxu0 %v149
  %v415 = vpop.f32.mrf.mxu0
  %v416 = vadd.f32 %v70, %v415
  %v417 = vpop.f32.mrf.mxu0
  %418 = vmatprep.mubr.f32.mxu0 0.0
  %419 = vmatmul.mubr.f32.gmra.mxu0 %v152
  %v420 = vpop.f32.mrf.mxu0
  %v421 = vadd.f32 %v70, %v420
  %v422 = vpop.f32.mrf.mxu0
  %423 = vmatprep.mubr.f32.mxu0 0.0
  %424 = vmatmul.mubr.f32.gmra.mxu0 %v155
  %v425 = vpop.f32.mrf.mxu0
  %v426 = vadd.f32 %v70, %v425
  %v427 = vpop.f32.mrf.mxu0
  %428 = vmatprep.mubr.f32.mxu0 0.0
  %429 = vmatmul.mubr.f32.gmra.mxu0 %v158
  %v430 = vpop.f32.mrf.mxu0
  %v431 = vadd.f32 %v70, %v430
  %v432 = vpop.f32.mrf.mxu0
  %433 = vmatprep.mubr.f32.mxu0 0.0
  %434 = vmatmul.mubr.f32.gmra.mxu0 %v161
  %v435 = vpop.f32.mrf.mxu0
  %v436 = vadd.f32 %v70, %v435
  %v437 = vpop.f32.mrf.mxu0
  %438 = vmatprep.mubr.f32.mxu0 0.0
  %439 = vmatmul.mubr.f32.gmra.mxu0 %v164
  %v440 = vpop.f32.mrf.mxu0
  %v441 = vadd.f32 %v70, %v440
  %v442 = vpop.f32.mrf.mxu0
  %443 = vmatprep.mubr.f32.mxu0 0.0
  %444 = vmatmul.mubr.f32.gmra.mxu0 %v167
  %v445 = vpop.f32.mrf.mxu0
  %v446 = vadd.f32 %v70, %v445
  %v447 = vpop.f32.mrf.mxu0
  %448 = vmatprep.mubr.f32.mxu0 0.0
  %449 = vmatmul.mubr.f32.gmra.mxu0 %v170
  %v450 = vpop.f32.mrf.mxu0
  %v451 = vadd.f32 %v70, %v450
  %v452 = vpop.f32.mrf.mxu0
  %453 = vmatprep.mubr.f32.mxu0 0.0
  %454 = vmatmul.mubr.f32.gmra.mxu0 %v173
  %v455 = vpop.f32.mrf.mxu0
  %v456 = vadd.f32 %v70, %v455
  %v457 = vpop.f32.mrf.mxu0
  %458 = vmatprep.mubr.f32.mxu0 0.0
  %459 = vmatmul.mubr.f32.gmra.mxu0 %v176
  %v460 = vpop.f32.mrf.mxu0
  %v461 = vadd.f32 %v70, %v460
  %v462 = vpop.f32.mrf.mxu0
  %463 = vmatprep.mubr.f32.mxu0 0.0
  %464 = vmatmul.mubr.f32.gmra.mxu0 %v179
  %v465 = vpop.f32.mrf.mxu0
  %v466 = vadd.f32 %v70, %v465
  %v467 = vpop.f32.mrf.mxu0
  %468 = vmatprep.mubr.f32.mxu0 0.0
  %469 = vmatmul.mubr.f32.gmra.mxu0 %v182
  %v470 = vpop.f32.mrf.mxu0
  %v471 = vadd.f32 %v70, %v470
  %v472 = vpop.f32.mrf.mxu0
  %473 = vmatprep.mubr.f32.mxu0 0.0
  %474 = vmatmul.mubr.f32.gmra.mxu0 %v185
  %v475 = vpop.f32.mrf.mxu0
  %v476 = vadd.f32 %v70, %v475
  %v477 = vpop.f32.mrf.mxu0
  %478 = vmatprep.mubr.f32.mxu0 0.0
  %479 = vmatmul.mubr.f32.gmra.mxu0 %v188
  %v480 = vpop.f32.mrf.mxu0
  %v481 = vadd.f32 %v70, %v480
  %v482 = vpop.f32.mrf.mxu0
  %483 = vmatprep.mubr.f32.mxu0 0.0
  %484 = vmatmul.mubr.f32.gmra.mxu0 %v191
  %v485 = vpop.f32.mrf.mxu0
  %v486 = vadd.f32 %v70, %v485
  %v487 = vpop.f32.mrf.mxu0
  %488 = vmatprep.mubr.f32.mxu0 0.0
  %489 = vmatmul.mubr.f32.gmra.mxu0 %v194
  %v490 = vpop.f32.mrf.mxu0
  %v491 = vadd.f32 %v70, %v490
  %v492 = vpop.f32.mrf.mxu0
  %493 = vmatprep.mubr.f32.mxu0 0.0
  %494 = vmatmul.mubr.f32.gmra.mxu0 %v197
  %v495 = vpop.f32.mrf.mxu0
  %v496 = vadd.f32 %v70, %v495
  %v497 = vpop.f32.mrf.mxu0
  %498 = vmatprep.mubr.f32.mxu0 0.0
  %499 = vmatmul.mubr.f32.gmra.mxu0 %v200
  %v500 = vpop.f32.mrf.mxu0
  %v501 = vadd.f32 %v70, %v500
  %v502 = vpop.f32.mrf.mxu0
  %503 = vmatprep.mubr.f32.mxu0 0.0
  %504 = vmatmul.mubr.f32.gmra.mxu0 %v203
  %v505 = vpop.f32.mrf.mxu0
  %v506 = vadd.f32 %v70, %v505
  %v507 = vpop.f32.mrf.mxu0
  %508 = vmatprep.mubr.f32.mxu0 0.0
  %509 = vmatmul.mubr.f32.gmra.mxu0 %v206
  %v510 = vpop.f32.mrf.mxu0
  %v511 = vadd.f32 %v70, %v510
  %v512 = vpop.f32.mrf.mxu0
  %513 = vmatprep.mubr.f32.mxu0 0.0
  %514 = vmatmul.mubr.f32.gmra.mxu0 %v209
  %v515 = vpop.f32.mrf.mxu0
  %v516 = vadd.f32 %v70, %v515
  %v517 = vpop.f32.mrf.mxu0
  %518 = vmatprep.mubr.f32.mxu0 0.0
  %519 = vmatmul.mubr.f32.gmra.mxu0 %v212
  %v520 = vpop.f32.mrf.mxu0
  %v521 = vadd.f32 %v70, %v520
  %v522 = vpop.f32.mrf.mxu0
  %523 = vmatprep.mubr.f32.mxu0 0.0
  %524 = vmatmul.mubr.f32.gmra.mxu0 %v215
  %v525 = vpop.f32.mrf.mxu0
  %v526 = vadd.f32 %v70, %v525
  %v527 = vpop.f32.mrf.mxu0
  %528 = vmatprep.mubr.f32.mxu0 0.0
  %529 = vmatmul.mubr.f32.gmra.mxu0 %v218
  %v530 = vpop.f32.mrf.mxu0
  %v531 = vadd.f32 %v70, %v530
  %v532 = vpop.f32.mrf.mxu0
  %533 = vdwg.mxu0
  %v534 = vmax.f32 %v291, 0.0
  %v535 = vmax.f32 %v296, 0.0
  %v536 = vmax.f32 %v301, 0.0
  %v537 = vmax.f32 %v306, 0.0
  %v538 = vmax.f32 %v311, 0.0
  %v539 = vmax.f32 %v316, 0.0
  %v540 = vmax.f32 %v321, 0.0
  %v541 = vmax.f32 %v326, 0.0
  %v542 = vmax.f32 %v331, 0.0
  %v543 = vmax.f32 %v336, 0.0
  %v544 = vmax.f32 %v341, 0.0
  %v545 = vmax.f32 %v346, 0.0
  %v546 = vmax.f32 %v351, 0.0
  %v547 = vmax.f32 %v356, 0.0
  %v548 = vmax.f32 %v361, 0.0
  %v549 = vmax.f32 %v366, 0.0
  %v550 = vmax.f32 %v371, 0.0
  %v551 = vmax.f32 %v376, 0.0
  %v552 = vmax.f32 %v381, 0.0
  %v553 = vmax.f32 %v386, 0.0
  %v554 = vmax.f32 %v391, 0.0
  %v555 = vmax.f32 %v396, 0.0
  %v556 = vmax.f32 %v401, 0.0
  %v557 = vmax.f32 %v406, 0.0
  %v558 = vmax.f32 %v411, 0.0
  %v559 = vmax.f32 %v416, 0.0
  %v560 = vmax.f32 %v421, 0.0
  %v561 = vmax.f32 %v426, 0.0
  %v562 = vmax.f32 %v431, 0.0
  %v563 = vmax.f32 %v436, 0.0
  %v564 = vmax.f32 %v441, 0.0
  %v565 = vmax.f32 %v446, 0.0
  %v566 = vmax.f32 %v451, 0.0
  %v567 = vmax.f32 %v456, 0.0
  %v568 = vmax.f32 %v461, 0.0
  %v569 = vmax.f32 %v466, 0.0
  %v570 = vmax.f32 %v471, 0.0
  %v571 = vmax.f32 %v476, 0.0
  %v572 = vmax.f32 %v481, 0.0
  %v573 = vmax.f32 %v486, 0.0
  %v574 = vmax.f32 %v491, 0.0
  %v575 = vmax.f32 %v496, 0.0
  %v576 = vmax.f32 %v501, 0.0
  %v577 = vmax.f32 %v506, 0.0
  %v578 = vmax.f32 %v511, 0.0
  %v579 = vmax.f32 %v516, 0.0
  %v580 = vmax.f32 %v521, 0.0
  %v581 = vmax.f32 %v526, 0.0
  %v582 = vmax.f32 %v531, 0.0
  %s583 = scalar_lea.vmem %s0, 392
  %v584 = vld [vmem:[%s583] sm:$0xff]
  %v585 = vld [vmem:[%s583 + $0x8] sm:$0xff]
  %v586 = vld [vmem:[%s583 + $0x10] sm:$0xff]
  %v587 = vld [vmem:[%s583 + $0x18] sm:$0xff]
  %v588 = vld [vmem:[%s583 + $0x20] sm:$0xff]
  %v589 = vld [vmem:[%s583 + $0x28] sm:$0xff]
  %v590 = vld [vmem:[%s583 + $0x30] sm:$0xff]
  %v591 = vld [vmem:[%s583 + $0x38] sm:$0xff]
  %v592 = vld [vmem:[%s583 + $0x40] sm:$0xff]
  %v593 = vld [vmem:[%s583 + $0x48] sm:$0xff]
  %v594 = vld [vmem:[%s583 + $0x50] sm:$0xff]
  %v595 = vld [vmem:[%s583 + $0x58] sm:$0xff]
  %v596 = vld [vmem:[%s583 + $0x60] sm:$0xff]
  %v597 = vld [vmem:[%s583 + $0x68] sm:$0xff]
  %v598 = vld [vmem:[%s583 + $0x70] sm:$0xff]
  %v599 = vld [vmem:[%s583 + $0x78] sm:$0xff]
  %v600 = vld [vmem:[%s583 + $0x80] sm:$0xff]
  %v601 = vld [vmem:[%s583 + $0x88] sm:$0xff]
  %v602 = vld [vmem:[%s583 + $0x90] sm:$0xff]
  %v603 = vld [vmem:[%s583 + $0x98] sm:$0xff]
  %v604 = vld [vmem:[%s583 + $0xa0] sm:$0xff]
  %v605 = vld [vmem:[%s583 + $0xa8] sm:$0xff]
  %v606 = vld [vmem:[%s583 + $0xb0] sm:$0xff]
  %v607 = vld [vmem:[%s583 + $0xb8] sm:$0xff]
  %v608 = vld [vmem:[%s583 + $0xc0] sm:$0xff]
  %v609 = vld [vmem:[%s583 + $0xc8] sm:$0xff]
  %v610 = vld [vmem:[%s583 + $0xd0] sm:$0xff]
  %v611 = vld [vmem:[%s583 + $0xd8] sm:$0xff]
  %v612 = vld [vmem:[%s583 + $0xe0] sm:$0xff]
  %v613 = vld [vmem:[%s583 + $0xe8] sm:$0xff]
  %v614 = vld [vmem:[%s583 + $0xf0] sm:$0xff]
  %v615 = vld [vmem:[%s583 + $0xf8] sm:$0xff]
  %v616 = vld [vmem:[%s583 + $0x100] sm:$0xff]
  %v617 = vld [vmem:[%s583 + $0x108] sm:$0xff]
  %v618 = vld [vmem:[%s583 + $0x110] sm:$0xff]
  %v619 = vld [vmem:[%s583 + $0x118] sm:$0xff]
  %v620 = vld [vmem:[%s583 + $0x120] sm:$0xff]
  %v621 = vld [vmem:[%s583 + $0x128] sm:$0xff]
  %v622 = vld [vmem:[%s583 + $0x130] sm:$0xff]
  %v623 = vld [vmem:[%s583 + $0x138] sm:$0xff]
  %v624 = vld [vmem:[%s583 + $0x140] sm:$0xff]
  %v625 = vld [vmem:[%s583 + $0x148] sm:$0xff]
  %v626 = vld [vmem:[%s583 + $0x150] sm:$0xff]
  %v627 = vld [vmem:[%s583 + $0x158] sm:$0xff]
  %v628 = vld [vmem:[%s583 + $0x160] sm:$0xff]
  %v629 = vld [vmem:[%s583 + $0x168] sm:$0xff]
  %v630 = vld [vmem:[%s583 + $0x170] sm:$0xff]
  %v631 = vld [vmem:[%s583 + $0x178] sm:$0xff]
  %v632 = vld [vmem:[%s583 + $0x180] sm:$0xff]
  %v634 = vsel %vm72, %v584, 0
  %v637 = vsel %vm72, %v585, 0
  %v640 = vsel %vm72, %v586, 0
  %v643 = vsel %vm72, %v587, 0
  %v646 = vsel %vm72, %v588, 0
  %v649 = vsel %vm72, %v589, 0
  %v652 = vsel %vm72, %v590, 0
  %v655 = vsel %vm72, %v591, 0
  %v658 = vsel %vm72, %v592, 0
  %v661 = vsel %vm72, %v593, 0
  %v664 = vsel %vm72, %v594, 0
  %v667 = vsel %vm72, %v595, 0
  %v670 = vsel %vm72, %v596, 0
  %v673 = vsel %vm72, %v597, 0
  %v676 = vsel %vm72, %v598, 0
  %v679 = vsel %vm72, %v599, 0
  %v682 = vsel %vm72, %v600, 0
  %v685 = vsel %vm72, %v601, 0
  %v688 = vsel %vm72, %v602, 0
  %v691 = vsel %vm72, %v603, 0
  %v694 = vsel %vm72, %v604, 0
  %v697 = vsel %vm72, %v605, 0
  %v700 = vsel %vm72, %v606, 0
  %v703 = vsel %vm72, %v607, 0
  %v706 = vsel %vm72, %v608, 0
  %v709 = vsel %vm72, %v609, 0
  %v712 = vsel %vm72, %v610, 0
  %v715 = vsel %vm72, %v611, 0
  %v718 = vsel %vm72, %v612, 0
  %v721 = vsel %vm72, %v613, 0
  %v724 = vsel %vm72, %v614, 0
  %v727 = vsel %vm72, %v615, 0
  %v730 = vsel %vm72, %v616, 0
  %v733 = vsel %vm72, %v617, 0
  %v736 = vsel %vm72, %v618, 0
  %v739 = vsel %vm72, %v619, 0
  %v742 = vsel %vm72, %v620, 0
  %v745 = vsel %vm72, %v621, 0
  %v748 = vsel %vm72, %v622, 0
  %v751 = vsel %vm72, %v623, 0
  %v754 = vsel %vm72, %v624, 0
  %v757 = vsel %vm72, %v625, 0
  %v760 = vsel %vm72, %v626, 0
  %v763 = vsel %vm72, %v627, 0
  %v766 = vsel %vm72, %v628, 0
  %v769 = vsel %vm72, %v629, 0
  %v772 = vsel %vm72, %v630, 0
  %v775 = vsel %vm72, %v631, 0
  %v778 = vsel %vm72, %v632, 0
  %780 = vmatprep.subr.mxu0 0.0
  %781 = vmatpush1.msra.mxu0 0.0
  %782 = vmatprep.subr.mxu0 0.0
  %783 = vmatpush1.msra.mxu0 0.0
  %784 = vmatprep.subr.mxu0 0.0
  %785 = vmatpush1.msra.mxu0 0.0
  %786 = vmatprep.subr.mxu0 0.0
  %787 = vmatpush1.msra.mxu0 0.0
  %788 = vmatprep.subr.mxu0 0.0
  %789 = vmatpush1.msra.mxu0 0.0
  %790 = vmatprep.subr.mxu0 0.0
  %791 = vmatpush1.msra.mxu0 0.0
  %792 = vmatprep.subr.mxu0 0.0
  %793 = vmatpush1.msra.mxu0 0.0
  %794 = vmatprep.subr.mxu0 0.0
  %795 = vmatpush1.msra.mxu0 0.0
  %796 = vmatprep.subr.mxu0 0.0
  %797 = vmatpush1.msra.mxu0 0.0
  %798 = vmatprep.subr.mxu0 0.0
  %799 = vmatpush1.msra.mxu0 0.0
  %800 = vmatprep.subr.mxu0 0.0
  %801 = vmatpush1.msra.mxu0 0.0
  %802 = vmatprep.subr.mxu0 0.0
  %803 = vmatpush1.msra.mxu0 0.0
  %804 = vmatprep.subr.mxu0 0.0
  %805 = vmatpush1.msra.mxu0 0.0
  %806 = vmatprep.subr.mxu0 0.0
  %807 = vmatpush1.msra.mxu0 0.0
  %808 = vmatprep.subr.mxu0 0.0
  %809 = vmatpush1.msra.mxu0 %v222
  %810 = vmatprep.subr.mxu0 0.0
  %811 = vmatpush1.msra.mxu0 %v14
  %812 = vmatprep.subr.mxu0 0.0
  %813 = vmatpush2.msra.mxu0 0.0
  %814 = vmatprep.subr.mxu0 0.0
  %815 = vmatpush2.msra.mxu0 0.0
  %816 = vmatprep.subr.mxu0 0.0
  %817 = vmatpush2.msra.mxu0 0.0
  %818 = vmatprep.subr.mxu0 0.0
  %819 = vmatpush2.msra.mxu0 0.0
  %820 = vmatprep.subr.mxu0 0.0
  %821 = vmatpush2.msra.mxu0 0.0
  %822 = vmatprep.subr.mxu0 0.0
  %823 = vmatpush2.msra.mxu0 0.0
  %824 = vmatprep.subr.mxu0 0.0
  %825 = vmatpush2.msra.mxu0 0.0
  %826 = vmatprep.subr.mxu0 0.0
  %827 = vmatpush2.msra.mxu0 0.0
  %828 = vmatprep.subr.mxu0 0.0
  %829 = vmatpush2.msra.mxu0 0.0
  %830 = vmatprep.subr.mxu0 0.0
  %831 = vmatpush2.msra.mxu0 0.0
  %832 = vmatprep.subr.mxu0 0.0
  %833 = vmatpush2.msra.mxu0 0.0
  %834 = vmatprep.subr.mxu0 0.0
  %835 = vmatpush2.msra.mxu0 0.0
  %836 = vmatprep.subr.mxu0 0.0
  %837 = vmatpush2.msra.mxu0 0.0
  %838 = vmatprep.subr.mxu0 0.0
  %839 = vmatpush2.msra.mxu0 0.0
  %840 = vmatprep.subr.mxu0 0.0
  %841 = vmatpush2.msra.mxu0 0.0
  %842 = vmatprep.subr.mxu0 0.0
  %843 = vmatpush2.msra.mxu0 0.0
  %844 = vmatprep.mubr.f32.mxu0 0.0
  %845 = vmatmul.mubr.f32.gmra.mxu0 %v634
  %v846 = vpop.f32.mrf.mxu0
  %v847 = vadd.f32 %v70, %v846
  %v848 = vpop.f32.mrf.mxu0
  %849 = vmatprep.mubr.f32.mxu0 0.0
  %850 = vmatmul.mubr.f32.gmra.mxu0 %v637
  %v851 = vpop.f32.mrf.mxu0
  %v852 = vadd.f32 %v70, %v851
  %v853 = vpop.f32.mrf.mxu0
  %854 = vmatprep.mubr.f32.mxu0 0.0
  %855 = vmatmul.mubr.f32.gmra.mxu0 %v640
  %v856 = vpop.f32.mrf.mxu0
  %v857 = vadd.f32 %v70, %v856
  %v858 = vpop.f32.mrf.mxu0
  %859 = vmatprep.mubr.f32.mxu0 0.0
  %860 = vmatmul.mubr.f32.gmra.mxu0 %v643
  %v861 = vpop.f32.mrf.mxu0
  %v862 = vadd.f32 %v70, %v861
  %v863 = vpop.f32.mrf.mxu0
  %864 = vmatprep.mubr.f32.mxu0 0.0
  %865 = vmatmul.mubr.f32.gmra.mxu0 %v646
  %v866 = vpop.f32.mrf.mxu0
  %v867 = vadd.f32 %v70, %v866
  %v868 = vpop.f32.mrf.mxu0
  %869 = vmatprep.mubr.f32.mxu0 0.0
  %870 = vmatmul.mubr.f32.gmra.mxu0 %v649
  %v871 = vpop.f32.mrf.mxu0
  %v872 = vadd.f32 %v70, %v871
  %v873 = vpop.f32.mrf.mxu0
  %874 = vmatprep.mubr.f32.mxu0 0.0
  %875 = vmatmul.mubr.f32.gmra.mxu0 %v652
  %v876 = vpop.f32.mrf.mxu0
  %v877 = vadd.f32 %v70, %v876
  %v878 = vpop.f32.mrf.mxu0
  %879 = vmatprep.mubr.f32.mxu0 0.0
  %880 = vmatmul.mubr.f32.gmra.mxu0 %v655
  %v881 = vpop.f32.mrf.mxu0
  %v882 = vadd.f32 %v70, %v881
  %v883 = vpop.f32.mrf.mxu0
  %884 = vmatprep.mubr.f32.mxu0 0.0
  %885 = vmatmul.mubr.f32.gmra.mxu0 %v658
  %v886 = vpop.f32.mrf.mxu0
  %v887 = vadd.f32 %v70, %v886
  %v888 = vpop.f32.mrf.mxu0
  %889 = vmatprep.mubr.f32.mxu0 0.0
  %890 = vmatmul.mubr.f32.gmra.mxu0 %v661
  %v891 = vpop.f32.mrf.mxu0
  %v892 = vadd.f32 %v70, %v891
  %v893 = vpop.f32.mrf.mxu0
  %894 = vmatprep.mubr.f32.mxu0 0.0
  %895 = vmatmul.mubr.f32.gmra.mxu0 %v664
  %v896 = vpop.f32.mrf.mxu0
  %v897 = vadd.f32 %v70, %v896
  %v898 = vpop.f32.mrf.mxu0
  %899 = vmatprep.mubr.f32.mxu0 0.0
  %900 = vmatmul.mubr.f32.gmra.mxu0 %v667
  %v901 = vpop.f32.mrf.mxu0
  %v902 = vadd.f32 %v70, %v901
  %v903 = vpop.f32.mrf.mxu0
  %904 = vmatprep.mubr.f32.mxu0 0.0
  %905 = vmatmul.mubr.f32.gmra.mxu0 %v670
  %v906 = vpop.f32.mrf.mxu0
  %v907 = vadd.f32 %v70, %v906
  %v908 = vpop.f32.mrf.mxu0
  %909 = vmatprep.mubr.f32.mxu0 0.0
  %910 = vmatmul.mubr.f32.gmra.mxu0 %v673
  %v911 = vpop.f32.mrf.mxu0
  %v912 = vadd.f32 %v70, %v911
  %v913 = vpop.f32.mrf.mxu0
  %914 = vmatprep.mubr.f32.mxu0 0.0
  %915 = vmatmul.mubr.f32.gmra.mxu0 %v676
  %v916 = vpop.f32.mrf.mxu0
  %v917 = vadd.f32 %v70, %v916
  %v918 = vpop.f32.mrf.mxu0
  %919 = vmatprep.mubr.f32.mxu0 0.0
  %920 = vmatmul.mubr.f32.gmra.mxu0 %v679
  %v921 = vpop.f32.mrf.mxu0
  %v922 = vadd.f32 %v70, %v921
  %v923 = vpop.f32.mrf.mxu0
  %924 = vmatprep.mubr.f32.mxu0 0.0
  %925 = vmatmul.mubr.f32.gmra.mxu0 %v682
  %v926 = vpop.f32.mrf.mxu0
  %v927 = vadd.f32 %v70, %v926
  %v928 = vpop.f32.mrf.mxu0
  %929 = vmatprep.mubr.f32.mxu0 0.0
  %930 = vmatmul.mubr.f32.gmra.mxu0 %v685
  %v931 = vpop.f32.mrf.mxu0
  %v932 = vadd.f32 %v70, %v931
  %v933 = vpop.f32.mrf.mxu0
  %934 = vmatprep.mubr.f32.mxu0 0.0
  %935 = vmatmul.mubr.f32.gmra.mxu0 %v688
  %v936 = vpop.f32.mrf.mxu0
  %v937 = vadd.f32 %v70, %v936
  %v938 = vpop.f32.mrf.mxu0
  %939 = vmatprep.mubr.f32.mxu0 0.0
  %940 = vmatmul.mubr.f32.gmra.mxu0 %v691
  %v941 = vpop.f32.mrf.mxu0
  %v942 = vadd.f32 %v70, %v941
  %v943 = vpop.f32.mrf.mxu0
  %944 = vmatprep.mubr.f32.mxu0 0.0
  %945 = vmatmul.mubr.f32.gmra.mxu0 %v694
  %v946 = vpop.f32.mrf.mxu0
  %v947 = vadd.f32 %v70, %v946
  %v948 = vpop.f32.mrf.mxu0
  %949 = vmatprep.mubr.f32.mxu0 0.0
  %950 = vmatmul.mubr.f32.gmra.mxu0 %v697
  %v951 = vpop.f32.mrf.mxu0
  %v952 = vadd.f32 %v70, %v951
  %v953 = vpop.f32.mrf.mxu0
  %954 = vmatprep.mubr.f32.mxu0 0.0
  %955 = vmatmul.mubr.f32.gmra.mxu0 %v700
  %v956 = vpop.f32.mrf.mxu0
  %v957 = vadd.f32 %v70, %v956
  %v958 = vpop.f32.mrf.mxu0
  %959 = vmatprep.mubr.f32.mxu0 0.0
  %960 = vmatmul.mubr.f32.gmra.mxu0 %v703
  %v961 = vpop.f32.mrf.mxu0
  %v962 = vadd.f32 %v70, %v961
  %v963 = vpop.f32.mrf.mxu0
  %964 = vmatprep.mubr.f32.mxu0 0.0
  %965 = vmatmul.mubr.f32.gmra.mxu0 %v706
  %v966 = vpop.f32.mrf.mxu0
  %v967 = vadd.f32 %v70, %v966
  %v968 = vpop.f32.mrf.mxu0
  %969 = vmatprep.mubr.f32.mxu0 0.0
  %970 = vmatmul.mubr.f32.gmra.mxu0 %v709
  %v971 = vpop.f32.mrf.mxu0
  %v972 = vadd.f32 %v70, %v971
  %v973 = vpop.f32.mrf.mxu0
  %974 = vmatprep.mubr.f32.mxu0 0.0
  %975 = vmatmul.mubr.f32.gmra.mxu0 %v712
  %v976 = vpop.f32.mrf.mxu0
  %v977 = vadd.f32 %v70, %v976
  %v978 = vpop.f32.mrf.mxu0
  %979 = vmatprep.mubr.f32.mxu0 0.0
  %980 = vmatmul.mubr.f32.gmra.mxu0 %v715
  %v981 = vpop.f32.mrf.mxu0
  %v982 = vadd.f32 %v70, %v981
  %v983 = vpop.f32.mrf.mxu0
  %984 = vmatprep.mubr.f32.mxu0 0.0
  %985 = vmatmul.mubr.f32.gmra.mxu0 %v718
  %v986 = vpop.f32.mrf.mxu0
  %v987 = vadd.f32 %v70, %v986
  %v988 = vpop.f32.mrf.mxu0
  %989 = vmatprep.mubr.f32.mxu0 0.0
  %990 = vmatmul.mubr.f32.gmra.mxu0 %v721
  %v991 = vpop.f32.mrf.mxu0
  %v992 = vadd.f32 %v70, %v991
  %v993 = vpop.f32.mrf.mxu0
  %994 = vmatprep.mubr.f32.mxu0 0.0
  %995 = vmatmul.mubr.f32.gmra.mxu0 %v724
  %v996 = vpop.f32.mrf.mxu0
  %v997 = vadd.f32 %v70, %v996
  %v998 = vpop.f32.mrf.mxu0
  %999 = vmatprep.mubr.f32.mxu0 0.0
  %1000 = vmatmul.mubr.f32.gmra.mxu0 %v727
  %v1001 = vpop.f32.mrf.mxu0
  %v1002 = vadd.f32 %v70, %v1001
  %v1003 = vpop.f32.mrf.mxu0
  %1004 = vmatprep.mubr.f32.mxu0 0.0
  %1005 = vmatmul.mubr.f32.gmra.mxu0 %v730
  %v1006 = vpop.f32.mrf.mxu0
  %v1007 = vadd.f32 %v70, %v1006
  %v1008 = vpop.f32.mrf.mxu0
  %1009 = vmatprep.mubr.f32.mxu0 0.0
  %1010 = vmatmul.mubr.f32.gmra.mxu0 %v733
  %v1011 = vpop.f32.mrf.mxu0
  %v1012 = vadd.f32 %v70, %v1011
  %v1013 = vpop.f32.mrf.mxu0
  %1014 = vmatprep.mubr.f32.mxu0 0.0
  %1015 = vmatmul.mubr.f32.gmra.mxu0 %v736
  %v1016 = vpop.f32.mrf.mxu0
  %v1017 = vadd.f32 %v70, %v1016
  %v1018 = vpop.f32.mrf.mxu0
  %1019 = vmatprep.mubr.f32.mxu0 0.0
  %1020 = vmatmul.mubr.f32.gmra.mxu0 %v739
  %v1021 = vpop.f32.mrf.mxu0
  %v1022 = vadd.f32 %v70, %v1021
  %v1023 = vpop.f32.mrf.mxu0
  %1024 = vmatprep.mubr.f32.mxu0 0.0
  %1025 = vmatmul.mubr.f32.gmra.mxu0 %v742
  %v1026 = vpop.f32.mrf.mxu0
  %v1027 = vadd.f32 %v70, %v1026
  %v1028 = vpop.f32.mrf.mxu0
  %1029 = vmatprep.mubr.f32.mxu0 0.0
  %1030 = vmatmul.mubr.f32.gmra.mxu0 %v745
  %v1031 = vpop.f32.mrf.mxu0
  %v1032 = vadd.f32 %v70, %v1031
  %v1033 = vpop.f32.mrf.mxu0
  %1034 = vmatprep.mubr.f32.mxu0 0.0
  %1035 = vmatmul.mubr.f32.gmra.mxu0 %v748
  %v1036 = vpop.f32.mrf.mxu0
  %v1037 = vadd.f32 %v70, %v1036
  %v1038 = vpop.f32.mrf.mxu0
  %1039 = vmatprep.mubr.f32.mxu0 0.0
  %1040 = vmatmul.mubr.f32.gmra.mxu0 %v751
  %v1041 = vpop.f32.mrf.mxu0
  %v1042 = vadd.f32 %v70, %v1041
  %v1043 = vpop.f32.mrf.mxu0
  %1044 = vmatprep.mubr.f32.mxu0 0.0
  %1045 = vmatmul.mubr.f32.gmra.mxu0 %v754
  %v1046 = vpop.f32.mrf.mxu0
  %v1047 = vadd.f32 %v70, %v1046
  %v1048 = vpop.f32.mrf.mxu0
  %1049 = vmatprep.mubr.f32.mxu0 0.0
  %1050 = vmatmul.mubr.f32.gmra.mxu0 %v757
  %v1051 = vpop.f32.mrf.mxu0
  %v1052 = vadd.f32 %v70, %v1051
  %v1053 = vpop.f32.mrf.mxu0
  %1054 = vmatprep.mubr.f32.mxu0 0.0
  %1055 = vmatmul.mubr.f32.gmra.mxu0 %v760
  %v1056 = vpop.f32.mrf.mxu0
  %v1057 = vadd.f32 %v70, %v1056
  %v1058 = vpop.f32.mrf.mxu0
  %1059 = vmatprep.mubr.f32.mxu0 0.0
  %1060 = vmatmul.mubr.f32.gmra.mxu0 %v763
  %v1061 = vpop.f32.mrf.mxu0
  %v1062 = vadd.f32 %v70, %v1061
  %v1063 = vpop.f32.mrf.mxu0
  %1064 = vmatprep.mubr.f32.mxu0 0.0
  %1065 = vmatmul.mubr.f32.gmra.mxu0 %v766
  %v1066 = vpop.f32.mrf.mxu0
  %v1067 = vadd.f32 %v70, %v1066
  %v1068 = vpop.f32.mrf.mxu0
  %1069 = vmatprep.mubr.f32.mxu0 0.0
  %1070 = vmatmul.mubr.f32.gmra.mxu0 %v769
  %v1071 = vpop.f32.mrf.mxu0
  %v1072 = vadd.f32 %v70, %v1071
  %v1073 = vpop.f32.mrf.mxu0
  %1074 = vmatprep.mubr.f32.mxu0 0.0
  %1075 = vmatmul.mubr.f32.gmra.mxu0 %v772
  %v1076 = vpop.f32.mrf.mxu0
  %v1077 = vadd.f32 %v70, %v1076
  %v1078 = vpop.f32.mrf.mxu0
  %1079 = vmatprep.mubr.f32.mxu0 0.0
  %1080 = vmatmul.mubr.f32.gmra.mxu0 %v775
  %v1081 = vpop.f32.mrf.mxu0
  %v1082 = vadd.f32 %v70, %v1081
  %v1083 = vpop.f32.mrf.mxu0
  %1084 = vmatprep.mubr.f32.mxu0 0.0
  %1085 = vmatmul.mubr.f32.gmra.mxu0 %v778
  %v1086 = vpop.f32.mrf.mxu0
  %v1087 = vadd.f32 %v70, %v1086
  %v1088 = vpop.f32.mrf.mxu0
  %1089 = vdwg.mxu0
  %v1090 = vmax.f32 %v847, 0.0
  %v1091 = vmax.f32 %v852, 0.0
  %v1092 = vmax.f32 %v857, 0.0
  %v1093 = vmax.f32 %v862, 0.0
  %v1094 = vmax.f32 %v867, 0.0
  %v1095 = vmax.f32 %v872, 0.0
  %v1096 = vmax.f32 %v877, 0.0
  %v1097 = vmax.f32 %v882, 0.0
  %v1098 = vmax.f32 %v887, 0.0
  %v1099 = vmax.f32 %v892, 0.0
  %v1100 = vmax.f32 %v897, 0.0
  %v1101 = vmax.f32 %v902, 0.0
  %v1102 = vmax.f32 %v907, 0.0
  %v1103 = vmax.f32 %v912, 0.0
  %v1104 = vmax.f32 %v917, 0.0
  %v1105 = vmax.f32 %v922, 0.0
  %v1106 = vmax.f32 %v927, 0.0
  %v1107 = vmax.f32 %v932, 0.0
  %v1108 = vmax.f32 %v937, 0.0
  %v1109 = vmax.f32 %v942, 0.0
  %v1110 = vmax.f32 %v947, 0.0
  %v1111 = vmax.f32 %v952, 0.0
  %v1112 = vmax.f32 %v957, 0.0
  %v1113 = vmax.f32 %v962, 0.0
  %v1114 = vmax.f32 %v967, 0.0
  %v1115 = vmax.f32 %v972, 0.0
  %v1116 = vmax.f32 %v977, 0.0
  %v1117 = vmax.f32 %v982, 0.0
  %v1118 = vmax.f32 %v987, 0.0
  %v1119 = vmax.f32 %v992, 0.0
  %v1120 = vmax.f32 %v997, 0.0
  %v1121 = vmax.f32 %v1002, 0.0
  %v1122 = vmax.f32 %v1007, 0.0
  %v1123 = vmax.f32 %v1012, 0.0
  %v1124 = vmax.f32 %v1017, 0.0
  %v1125 = vmax.f32 %v1022, 0.0
  %v1126 = vmax.f32 %v1027, 0.0
  %v1127 = vmax.f32 %v1032, 0.0
  %v1128 = vmax.f32 %v1037, 0.0
  %v1129 = vmax.f32 %v1042, 0.0
  %v1130 = vmax.f32 %v1047, 0.0
  %v1131 = vmax.f32 %v1052, 0.0
  %v1132 = vmax.f32 %v1057, 0.0
  %v1133 = vmax.f32 %v1062, 0.0
  %v1134 = vmax.f32 %v1067, 0.0
  %v1135 = vmax.f32 %v1072, 0.0
  %v1136 = vmax.f32 %v1077, 0.0
  %v1137 = vmax.f32 %v1082, 0.0
  %v1138 = vmax.f32 %v1087, 0.0
  %v1139 = vmax.f32 %v534, %v1090
  %v1140 = vmax.f32 %v535, %v1091
  %v1141 = vmax.f32 %v536, %v1092
  %v1142 = vmax.f32 %v537, %v1093
  %v1143 = vmax.f32 %v538, %v1094
  %v1144 = vmax.f32 %v539, %v1095
  %v1145 = vmax.f32 %v540, %v1096
  %v1146 = vmax.f32 %v541, %v1097
  %v1147 = vmax.f32 %v542, %v1098
  %v1148 = vmax.f32 %v543, %v1099
  %v1149 = vmax.f32 %v544, %v1100
  %v1150 = vmax.f32 %v545, %v1101
  %v1151 = vmax.f32 %v546, %v1102
  %v1152 = vmax.f32 %v547, %v1103
  %v1153 = vmax.f32 %v548, %v1104
  %v1154 = vmax.f32 %v549, %v1105
  %v1155 = vmax.f32 %v550, %v1106
  %v1156 = vmax.f32 %v551, %v1107
  %v1157 = vmax.f32 %v552, %v1108
  %v1158 = vmax.f32 %v553, %v1109
  %v1159 = vmax.f32 %v554, %v1110
  %v1160 = vmax.f32 %v555, %v1111
  %v1161 = vmax.f32 %v556, %v1112
  %v1162 = vmax.f32 %v557, %v1113
  %v1163 = vmax.f32 %v558, %v1114
  %v1164 = vmax.f32 %v559, %v1115
  %v1165 = vmax.f32 %v560, %v1116
  %v1166 = vmax.f32 %v561, %v1117
  %v1167 = vmax.f32 %v562, %v1118
  %v1168 = vmax.f32 %v563, %v1119
  %v1169 = vmax.f32 %v564, %v1120
  %v1170 = vmax.f32 %v565, %v1121
  %v1171 = vmax.f32 %v566, %v1122
  %v1172 = vmax.f32 %v567, %v1123
  %v1173 = vmax.f32 %v568, %v1124
  %v1174 = vmax.f32 %v569, %v1125
  %v1175 = vmax.f32 %v570, %v1126
  %v1176 = vmax.f32 %v571, %v1127
  %v1177 = vmax.f32 %v572, %v1128
  %v1178 = vmax.f32 %v573, %v1129
  %v1179 = vmax.f32 %v574, %v1130
  %v1180 = vmax.f32 %v575, %v1131
  %v1181 = vmax.f32 %v576, %v1132
  %v1182 = vmax.f32 %v577, %v1133
  %v1183 = vmax.f32 %v578, %v1134
  %v1184 = vmax.f32 %v579, %v1135
  %v1185 = vmax.f32 %v580, %v1136
  %v1186 = vmax.f32 %v581, %v1137
  %v1187 = vmax.f32 %v582, %v1138
  %s1188 = scalar_lea.vmem %s0, 784
  %v1189 = vld [vmem:[%s1188] sm:$0xff]
  %v1190 = vld [vmem:[%s1188 + $0x8] sm:$0xff]
  %v1191 = vld [vmem:[%s1188 + $0x10] sm:$0xff]
  %v1192 = vld [vmem:[%s1188 + $0x18] sm:$0xff]
  %v1193 = vld [vmem:[%s1188 + $0x20] sm:$0xff]
  %v1194 = vld [vmem:[%s1188 + $0x28] sm:$0xff]
  %v1195 = vld [vmem:[%s1188 + $0x30] sm:$0xff]
  %v1196 = vld [vmem:[%s1188 + $0x38] sm:$0xff]
  %v1197 = vld [vmem:[%s1188 + $0x40] sm:$0xff]
  %v1198 = vld [vmem:[%s1188 + $0x48] sm:$0xff]
  %v1199 = vld [vmem:[%s1188 + $0x50] sm:$0xff]
  %v1200 = vld [vmem:[%s1188 + $0x58] sm:$0xff]
  %v1201 = vld [vmem:[%s1188 + $0x60] sm:$0xff]
  %v1202 = vld [vmem:[%s1188 + $0x68] sm:$0xff]
  %v1203 = vld [vmem:[%s1188 + $0x70] sm:$0xff]
  %v1204 = vld [vmem:[%s1188 + $0x78] sm:$0xff]
  %v1205 = vld [vmem:[%s1188 + $0x80] sm:$0xff]
  %v1206 = vld [vmem:[%s1188 + $0x88] sm:$0xff]
  %v1207 = vld [vmem:[%s1188 + $0x90] sm:$0xff]
  %v1208 = vld [vmem:[%s1188 + $0x98] sm:$0xff]
  %v1209 = vld [vmem:[%s1188 + $0xa0] sm:$0xff]
  %v1210 = vld [vmem:[%s1188 + $0xa8] sm:$0xff]
  %v1211 = vld [vmem:[%s1188 + $0xb0] sm:$0xff]
  %v1212 = vld [vmem:[%s1188 + $0xb8] sm:$0xff]
  %v1213 = vld [vmem:[%s1188 + $0xc0] sm:$0xff]
  %v1214 = vld [vmem:[%s1188 + $0xc8] sm:$0xff]
  %v1215 = vld [vmem:[%s1188 + $0xd0] sm:$0xff]
  %v1216 = vld [vmem:[%s1188 + $0xd8] sm:$0xff]
  %v1217 = vld [vmem:[%s1188 + $0xe0] sm:$0xff]
  %v1218 = vld [vmem:[%s1188 + $0xe8] sm:$0xff]
  %v1219 = vld [vmem:[%s1188 + $0xf0] sm:$0xff]
  %v1220 = vld [vmem:[%s1188 + $0xf8] sm:$0xff]
  %v1221 = vld [vmem:[%s1188 + $0x100] sm:$0xff]
  %v1222 = vld [vmem:[%s1188 + $0x108] sm:$0xff]
  %v1223 = vld [vmem:[%s1188 + $0x110] sm:$0xff]
  %v1224 = vld [vmem:[%s1188 + $0x118] sm:$0xff]
  %v1225 = vld [vmem:[%s1188 + $0x120] sm:$0xff]
  %v1226 = vld [vmem:[%s1188 + $0x128] sm:$0xff]
  %v1227 = vld [vmem:[%s1188 + $0x130] sm:$0xff]
  %v1228 = vld [vmem:[%s1188 + $0x138] sm:$0xff]
  %v1229 = vld [vmem:[%s1188 + $0x140] sm:$0xff]
  %v1230 = vld [vmem:[%s1188 + $0x148] sm:$0xff]
  %v1231 = vld [vmem:[%s1188 + $0x150] sm:$0xff]
  %v1232 = vld [vmem:[%s1188 + $0x158] sm:$0xff]
  %v1233 = vld [vmem:[%s1188 + $0x160] sm:$0xff]
  %v1234 = vld [vmem:[%s1188 + $0x168] sm:$0xff]
  %v1235 = vld [vmem:[%s1188 + $0x170] sm:$0xff]
  %v1236 = vld [vmem:[%s1188 + $0x178] sm:$0xff]
  %v1237 = vld [vmem:[%s1188 + $0x180] sm:$0xff]
  %v1239 = vsel %vm72, %v1189, 0
  %v1242 = vsel %vm72, %v1190, 0
  %v1245 = vsel %vm72, %v1191, 0
  %v1248 = vsel %vm72, %v1192, 0
  %v1251 = vsel %vm72, %v1193, 0
  %v1254 = vsel %vm72, %v1194, 0
  %v1257 = vsel %vm72, %v1195, 0
  %v1260 = vsel %vm72, %v1196, 0
  %v1263 = vsel %vm72, %v1197, 0
  %v1266 = vsel %vm72, %v1198, 0
  %v1269 = vsel %vm72, %v1199, 0
  %v1272 = vsel %vm72, %v1200, 0
  %v1275 = vsel %vm72, %v1201, 0
  %v1278 = vsel %vm72, %v1202, 0
  %v1281 = vsel %vm72, %v1203, 0
  %v1284 = vsel %vm72, %v1204, 0
  %v1287 = vsel %vm72, %v1205, 0
  %v1290 = vsel %vm72, %v1206, 0
  %v1293 = vsel %vm72, %v1207, 0
  %v1296 = vsel %vm72, %v1208, 0
  %v1299 = vsel %vm72, %v1209, 0
  %v1302 = vsel %vm72, %v1210, 0
  %v1305 = vsel %vm72, %v1211, 0
  %v1308 = vsel %vm72, %v1212, 0
  %v1311 = vsel %vm72, %v1213, 0
  %v1314 = vsel %vm72, %v1214, 0
  %v1317 = vsel %vm72, %v1215, 0
  %v1320 = vsel %vm72, %v1216, 0
  %v1323 = vsel %vm72, %v1217, 0
  %v1326 = vsel %vm72, %v1218, 0
  %v1329 = vsel %vm72, %v1219, 0
  %v1332 = vsel %vm72, %v1220, 0
  %v1335 = vsel %vm72, %v1221, 0
  %v1338 = vsel %vm72, %v1222, 0
  %v1341 = vsel %vm72, %v1223, 0
  %v1344 = vsel %vm72, %v1224, 0
  %v1347 = vsel %vm72, %v1225, 0
  %v1350 = vsel %vm72, %v1226, 0
  %v1353 = vsel %vm72, %v1227, 0
  %v1356 = vsel %vm72, %v1228, 0
  %v1359 = vsel %vm72, %v1229, 0
  %v1362 = vsel %vm72, %v1230, 0
  %v1365 = vsel %vm72, %v1231, 0
  %v1368 = vsel %vm72, %v1232, 0
  %v1371 = vsel %vm72, %v1233, 0
  %v1374 = vsel %vm72, %v1234, 0
  %v1377 = vsel %vm72, %v1235, 0
  %v1380 = vsel %vm72, %v1236, 0
  %v1383 = vsel %vm72, %v1237, 0
  %1385 = vmatprep.subr.mxu0 0.0
  %1386 = vmatpush1.msra.mxu0 0.0
  %1387 = vmatprep.subr.mxu0 0.0
  %1388 = vmatpush1.msra.mxu0 0.0
  %1389 = vmatprep.subr.mxu0 0.0
  %1390 = vmatpush1.msra.mxu0 0.0
  %1391 = vmatprep.subr.mxu0 0.0
  %1392 = vmatpush1.msra.mxu0 0.0
  %1393 = vmatprep.subr.mxu0 0.0
  %1394 = vmatpush1.msra.mxu0 0.0
  %1395 = vmatprep.subr.mxu0 0.0
  %1396 = vmatpush1.msra.mxu0 0.0
  %1397 = vmatprep.subr.mxu0 0.0
  %1398 = vmatpush1.msra.mxu0 0.0
  %1399 = vmatprep.subr.mxu0 0.0
  %1400 = vmatpush1.msra.mxu0 0.0
  %1401 = vmatprep.subr.mxu0 0.0
  %1402 = vmatpush1.msra.mxu0 0.0
  %1403 = vmatprep.subr.mxu0 0.0
  %1404 = vmatpush1.msra.mxu0 0.0
  %1405 = vmatprep.subr.mxu0 0.0
  %1406 = vmatpush1.msra.mxu0 0.0
  %1407 = vmatprep.subr.mxu0 0.0
  %1408 = vmatpush1.msra.mxu0 0.0
  %1409 = vmatprep.subr.mxu0 0.0
  %1410 = vmatpush1.msra.mxu0 0.0
  %1411 = vmatprep.subr.mxu0 0.0
  %1412 = vmatpush1.msra.mxu0 0.0
  %1413 = vmatprep.subr.mxu0 0.0
  %1414 = vmatpush1.msra.mxu0 %v222
  %1415 = vmatprep.subr.mxu0 0.0
  %1416 = vmatpush1.msra.mxu0 %v14
  %1417 = vmatprep.subr.mxu0 0.0
  %1418 = vmatpush2.msra.mxu0 0.0
  %1419 = vmatprep.subr.mxu0 0.0
  %1420 = vmatpush2.msra.mxu0 0.0
  %1421 = vmatprep.subr.mxu0 0.0
  %1422 = vmatpush2.msra.mxu0 0.0
  %1423 = vmatprep.subr.mxu0 0.0
  %1424 = vmatpush2.msra.mxu0 0.0
  %1425 = vmatprep.subr.mxu0 0.0
  %1426 = vmatpush2.msra.mxu0 0.0
  %1427 = vmatprep.subr.mxu0 0.0
  %1428 = vmatpush2.msra.mxu0 0.0
  %1429 = vmatprep.subr.mxu0 0.0
  %1430 = vmatpush2.msra.mxu0 0.0
  %1431 = vmatprep.subr.mxu0 0.0
  %1432 = vmatpush2.msra.mxu0 0.0
  %1433 = vmatprep.subr.mxu0 0.0
  %1434 = vmatpush2.msra.mxu0 0.0
  %1435 = vmatprep.subr.mxu0 0.0
  %1436 = vmatpush2.msra.mxu0 0.0
  %1437 = vmatprep.subr.mxu0 0.0
  %1438 = vmatpush2.msra.mxu0 0.0
  %1439 = vmatprep.subr.mxu0 0.0
  %1440 = vmatpush2.msra.mxu0 0.0
  %1441 = vmatprep.subr.mxu0 0.0
  %1442 = vmatpush2.msra.mxu0 0.0
  %1443 = vmatprep.subr.mxu0 0.0
  %1444 = vmatpush2.msra.mxu0 0.0
  %1445 = vmatprep.subr.mxu0 0.0
  %1446 = vmatpush2.msra.mxu0 0.0
  %1447 = vmatprep.subr.mxu0 0.0
  %1448 = vmatpush2.msra.mxu0 0.0
  %1449 = vmatprep.mubr.f32.mxu0 0.0
  %1450 = vmatmul.mubr.f32.gmra.mxu0 %v1239
  %v1451 = vpop.f32.mrf.mxu0
  %v1452 = vadd.f32 %v70, %v1451
  %v1453 = vpop.f32.mrf.mxu0
  %1454 = vmatprep.mubr.f32.mxu0 0.0
  %1455 = vmatmul.mubr.f32.gmra.mxu0 %v1242
  %v1456 = vpop.f32.mrf.mxu0
  %v1457 = vadd.f32 %v70, %v1456
  %v1458 = vpop.f32.mrf.mxu0
  %1459 = vmatprep.mubr.f32.mxu0 0.0
  %1460 = vmatmul.mubr.f32.gmra.mxu0 %v1245
  %v1461 = vpop.f32.mrf.mxu0
  %v1462 = vadd.f32 %v70, %v1461
  %v1463 = vpop.f32.mrf.mxu0
  %1464 = vmatprep.mubr.f32.mxu0 0.0
  %1465 = vmatmul.mubr.f32.gmra.mxu0 %v1248
  %v1466 = vpop.f32.mrf.mxu0
  %v1467 = vadd.f32 %v70, %v1466
  %v1468 = vpop.f32.mrf.mxu0
  %1469 = vmatprep.mubr.f32.mxu0 0.0
  %1470 = vmatmul.mubr.f32.gmra.mxu0 %v1251
  %v1471 = vpop.f32.mrf.mxu0
  %v1472 = vadd.f32 %v70, %v1471
  %v1473 = vpop.f32.mrf.mxu0
  %1474 = vmatprep.mubr.f32.mxu0 0.0
  %1475 = vmatmul.mubr.f32.gmra.mxu0 %v1254
  %v1476 = vpop.f32.mrf.mxu0
  %v1477 = vadd.f32 %v70, %v1476
  %v1478 = vpop.f32.mrf.mxu0
  %1479 = vmatprep.mubr.f32.mxu0 0.0
  %1480 = vmatmul.mubr.f32.gmra.mxu0 %v1257
  %v1481 = vpop.f32.mrf.mxu0
  %v1482 = vadd.f32 %v70, %v1481
  %v1483 = vpop.f32.mrf.mxu0
  %1484 = vmatprep.mubr.f32.mxu0 0.0
  %1485 = vmatmul.mubr.f32.gmra.mxu0 %v1260
  %v1486 = vpop.f32.mrf.mxu0
  %v1487 = vadd.f32 %v70, %v1486
  %v1488 = vpop.f32.mrf.mxu0
  %1489 = vmatprep.mubr.f32.mxu0 0.0
  %1490 = vmatmul.mubr.f32.gmra.mxu0 %v1263
  %v1491 = vpop.f32.mrf.mxu0
  %v1492 = vadd.f32 %v70, %v1491
  %v1493 = vpop.f32.mrf.mxu0
  %1494 = vmatprep.mubr.f32.mxu0 0.0
  %1495 = vmatmul.mubr.f32.gmra.mxu0 %v1266
  %v1496 = vpop.f32.mrf.mxu0
  %v1497 = vadd.f32 %v70, %v1496
  %v1498 = vpop.f32.mrf.mxu0
  %1499 = vmatprep.mubr.f32.mxu0 0.0
  %1500 = vmatmul.mubr.f32.gmra.mxu0 %v1269
  %v1501 = vpop.f32.mrf.mxu0
  %v1502 = vadd.f32 %v70, %v1501
  %v1503 = vpop.f32.mrf.mxu0
  %1504 = vmatprep.mubr.f32.mxu0 0.0
  %1505 = vmatmul.mubr.f32.gmra.mxu0 %v1272
  %v1506 = vpop.f32.mrf.mxu0
  %v1507 = vadd.f32 %v70, %v1506
  %v1508 = vpop.f32.mrf.mxu0
  %1509 = vmatprep.mubr.f32.mxu0 0.0
  %1510 = vmatmul.mubr.f32.gmra.mxu0 %v1275
  %v1511 = vpop.f32.mrf.mxu0
  %v1512 = vadd.f32 %v70, %v1511
  %v1513 = vpop.f32.mrf.mxu0
  %1514 = vmatprep.mubr.f32.mxu0 0.0
  %1515 = vmatmul.mubr.f32.gmra.mxu0 %v1278
  %v1516 = vpop.f32.mrf.mxu0
  %v1517 = vadd.f32 %v70, %v1516
  %v1518 = vpop.f32.mrf.mxu0
  %1519 = vmatprep.mubr.f32.mxu0 0.0
  %1520 = vmatmul.mubr.f32.gmra.mxu0 %v1281
  %v1521 = vpop.f32.mrf.mxu0
  %v1522 = vadd.f32 %v70, %v1521
  %v1523 = vpop.f32.mrf.mxu0
  %1524 = vmatprep.mubr.f32.mxu0 0.0
  %1525 = vmatmul.mubr.f32.gmra.mxu0 %v1284
  %v1526 = vpop.f32.mrf.mxu0
  %v1527 = vadd.f32 %v70, %v1526
  %v1528 = vpop.f32.mrf.mxu0
  %1529 = vmatprep.mubr.f32.mxu0 0.0
  %1530 = vmatmul.mubr.f32.gmra.mxu0 %v1287
  %v1531 = vpop.f32.mrf.mxu0
  %v1532 = vadd.f32 %v70, %v1531
  %v1533 = vpop.f32.mrf.mxu0
  %1534 = vmatprep.mubr.f32.mxu0 0.0
  %1535 = vmatmul.mubr.f32.gmra.mxu0 %v1290
  %v1536 = vpop.f32.mrf.mxu0
  %v1537 = vadd.f32 %v70, %v1536
  %v1538 = vpop.f32.mrf.mxu0
  %1539 = vmatprep.mubr.f32.mxu0 0.0
  %1540 = vmatmul.mubr.f32.gmra.mxu0 %v1293
  %v1541 = vpop.f32.mrf.mxu0
  %v1542 = vadd.f32 %v70, %v1541
  %v1543 = vpop.f32.mrf.mxu0
  %1544 = vmatprep.mubr.f32.mxu0 0.0
  %1545 = vmatmul.mubr.f32.gmra.mxu0 %v1296
  %v1546 = vpop.f32.mrf.mxu0
  %v1547 = vadd.f32 %v70, %v1546
  %v1548 = vpop.f32.mrf.mxu0
  %1549 = vmatprep.mubr.f32.mxu0 0.0
  %1550 = vmatmul.mubr.f32.gmra.mxu0 %v1299
  %v1551 = vpop.f32.mrf.mxu0
  %v1552 = vadd.f32 %v70, %v1551
  %v1553 = vpop.f32.mrf.mxu0
  %1554 = vmatprep.mubr.f32.mxu0 0.0
  %1555 = vmatmul.mubr.f32.gmra.mxu0 %v1302
  %v1556 = vpop.f32.mrf.mxu0
  %v1557 = vadd.f32 %v70, %v1556
  %v1558 = vpop.f32.mrf.mxu0
  %1559 = vmatprep.mubr.f32.mxu0 0.0
  %1560 = vmatmul.mubr.f32.gmra.mxu0 %v1305
  %v1561 = vpop.f32.mrf.mxu0
  %v1562 = vadd.f32 %v70, %v1561
  %v1563 = vpop.f32.mrf.mxu0
  %1564 = vmatprep.mubr.f32.mxu0 0.0
  %1565 = vmatmul.mubr.f32.gmra.mxu0 %v1308
  %v1566 = vpop.f32.mrf.mxu0
  %v1567 = vadd.f32 %v70, %v1566
  %v1568 = vpop.f32.mrf.mxu0
  %1569 = vmatprep.mubr.f32.mxu0 0.0
  %1570 = vmatmul.mubr.f32.gmra.mxu0 %v1311
  %v1571 = vpop.f32.mrf.mxu0
  %v1572 = vadd.f32 %v70, %v1571
  %v1573 = vpop.f32.mrf.mxu0
  %1574 = vmatprep.mubr.f32.mxu0 0.0
  %1575 = vmatmul.mubr.f32.gmra.mxu0 %v1314
  %v1576 = vpop.f32.mrf.mxu0
  %v1577 = vadd.f32 %v70, %v1576
  %v1578 = vpop.f32.mrf.mxu0
  %1579 = vmatprep.mubr.f32.mxu0 0.0
  %1580 = vmatmul.mubr.f32.gmra.mxu0 %v1317
  %v1581 = vpop.f32.mrf.mxu0
  %v1582 = vadd.f32 %v70, %v1581
  %v1583 = vpop.f32.mrf.mxu0
  %1584 = vmatprep.mubr.f32.mxu0 0.0
  %1585 = vmatmul.mubr.f32.gmra.mxu0 %v1320
  %v1586 = vpop.f32.mrf.mxu0
  %v1587 = vadd.f32 %v70, %v1586
  %v1588 = vpop.f32.mrf.mxu0
  %1589 = vmatprep.mubr.f32.mxu0 0.0
  %1590 = vmatmul.mubr.f32.gmra.mxu0 %v1323
  %v1591 = vpop.f32.mrf.mxu0
  %v1592 = vadd.f32 %v70, %v1591
  %v1593 = vpop.f32.mrf.mxu0
  %1594 = vmatprep.mubr.f32.mxu0 0.0
  %1595 = vmatmul.mubr.f32.gmra.mxu0 %v1326
  %v1596 = vpop.f32.mrf.mxu0
  %v1597 = vadd.f32 %v70, %v1596
  %v1598 = vpop.f32.mrf.mxu0
  %1599 = vmatprep.mubr.f32.mxu0 0.0
  %1600 = vmatmul.mubr.f32.gmra.mxu0 %v1329
  %v1601 = vpop.f32.mrf.mxu0
  %v1602 = vadd.f32 %v70, %v1601
  %v1603 = vpop.f32.mrf.mxu0
  %1604 = vmatprep.mubr.f32.mxu0 0.0
  %1605 = vmatmul.mubr.f32.gmra.mxu0 %v1332
  %v1606 = vpop.f32.mrf.mxu0
  %v1607 = vadd.f32 %v70, %v1606
  %v1608 = vpop.f32.mrf.mxu0
  %1609 = vmatprep.mubr.f32.mxu0 0.0
  %1610 = vmatmul.mubr.f32.gmra.mxu0 %v1335
  %v1611 = vpop.f32.mrf.mxu0
  %v1612 = vadd.f32 %v70, %v1611
  %v1613 = vpop.f32.mrf.mxu0
  %1614 = vmatprep.mubr.f32.mxu0 0.0
  %1615 = vmatmul.mubr.f32.gmra.mxu0 %v1338
  %v1616 = vpop.f32.mrf.mxu0
  %v1617 = vadd.f32 %v70, %v1616
  %v1618 = vpop.f32.mrf.mxu0
  %1619 = vmatprep.mubr.f32.mxu0 0.0
  %1620 = vmatmul.mubr.f32.gmra.mxu0 %v1341
  %v1621 = vpop.f32.mrf.mxu0
  %v1622 = vadd.f32 %v70, %v1621
  %v1623 = vpop.f32.mrf.mxu0
  %1624 = vmatprep.mubr.f32.mxu0 0.0
  %1625 = vmatmul.mubr.f32.gmra.mxu0 %v1344
  %v1626 = vpop.f32.mrf.mxu0
  %v1627 = vadd.f32 %v70, %v1626
  %v1628 = vpop.f32.mrf.mxu0
  %1629 = vmatprep.mubr.f32.mxu0 0.0
  %1630 = vmatmul.mubr.f32.gmra.mxu0 %v1347
  %v1631 = vpop.f32.mrf.mxu0
  %v1632 = vadd.f32 %v70, %v1631
  %v1633 = vpop.f32.mrf.mxu0
  %1634 = vmatprep.mubr.f32.mxu0 0.0
  %1635 = vmatmul.mubr.f32.gmra.mxu0 %v1350
  %v1636 = vpop.f32.mrf.mxu0
  %v1637 = vadd.f32 %v70, %v1636
  %v1638 = vpop.f32.mrf.mxu0
  %1639 = vmatprep.mubr.f32.mxu0 0.0
  %1640 = vmatmul.mubr.f32.gmra.mxu0 %v1353
  %v1641 = vpop.f32.mrf.mxu0
  %v1642 = vadd.f32 %v70, %v1641
  %v1643 = vpop.f32.mrf.mxu0
  %1644 = vmatprep.mubr.f32.mxu0 0.0
  %1645 = vmatmul.mubr.f32.gmra.mxu0 %v1356
  %v1646 = vpop.f32.mrf.mxu0
  %v1647 = vadd.f32 %v70, %v1646
  %v1648 = vpop.f32.mrf.mxu0
  %1649 = vmatprep.mubr.f32.mxu0 0.0
  %1650 = vmatmul.mubr.f32.gmra.mxu0 %v1359
  %v1651 = vpop.f32.mrf.mxu0
  %v1652 = vadd.f32 %v70, %v1651
  %v1653 = vpop.f32.mrf.mxu0
  %1654 = vmatprep.mubr.f32.mxu0 0.0
  %1655 = vmatmul.mubr.f32.gmra.mxu0 %v1362
  %v1656 = vpop.f32.mrf.mxu0
  %v1657 = vadd.f32 %v70, %v1656
  %v1658 = vpop.f32.mrf.mxu0
  %1659 = vmatprep.mubr.f32.mxu0 0.0
  %1660 = vmatmul.mubr.f32.gmra.mxu0 %v1365
  %v1661 = vpop.f32.mrf.mxu0
  %v1662 = vadd.f32 %v70, %v1661
  %v1663 = vpop.f32.mrf.mxu0
  %1664 = vmatprep.mubr.f32.mxu0 0.0
  %1665 = vmatmul.mubr.f32.gmra.mxu0 %v1368
  %v1666 = vpop.f32.mrf.mxu0
  %v1667 = vadd.f32 %v70, %v1666
  %v1668 = vpop.f32.mrf.mxu0
  %1669 = vmatprep.mubr.f32.mxu0 0.0
  %1670 = vmatmul.mubr.f32.gmra.mxu0 %v1371
  %v1671 = vpop.f32.mrf.mxu0
  %v1672 = vadd.f32 %v70, %v1671
  %v1673 = vpop.f32.mrf.mxu0
  %1674 = vmatprep.mubr.f32.mxu0 0.0
  %1675 = vmatmul.mubr.f32.gmra.mxu0 %v1374
  %v1676 = vpop.f32.mrf.mxu0
  %v1677 = vadd.f32 %v70, %v1676
  %v1678 = vpop.f32.mrf.mxu0
  %1679 = vmatprep.mubr.f32.mxu0 0.0
  %1680 = vmatmul.mubr.f32.gmra.mxu0 %v1377
  %v1681 = vpop.f32.mrf.mxu0
  %v1682 = vadd.f32 %v70, %v1681
  %v1683 = vpop.f32.mrf.mxu0
  %1684 = vmatprep.mubr.f32.mxu0 0.0
  %1685 = vmatmul.mubr.f32.gmra.mxu0 %v1380
  %v1686 = vpop.f32.mrf.mxu0
  %v1687 = vadd.f32 %v70, %v1686
  %v1688 = vpop.f32.mrf.mxu0
  %1689 = vmatprep.mubr.f32.mxu0 0.0
  %1690 = vmatmul.mubr.f32.gmra.mxu0 %v1383
  %v1691 = vpop.f32.mrf.mxu0
  %v1692 = vadd.f32 %v70, %v1691
  %v1693 = vpop.f32.mrf.mxu0
  %1694 = vdwg.mxu0
  %v1695 = vmax.f32 %v1452, 0.0
  %v1696 = vmax.f32 %v1457, 0.0
  %v1697 = vmax.f32 %v1462, 0.0
  %v1698 = vmax.f32 %v1467, 0.0
  %v1699 = vmax.f32 %v1472, 0.0
  %v1700 = vmax.f32 %v1477, 0.0
  %v1701 = vmax.f32 %v1482, 0.0
  %v1702 = vmax.f32 %v1487, 0.0
  %v1703 = vmax.f32 %v1492, 0.0
  %v1704 = vmax.f32 %v1497, 0.0
  %v1705 = vmax.f32 %v1502, 0.0
  %v1706 = vmax.f32 %v1507, 0.0
  %v1707 = vmax.f32 %v1512, 0.0
  %v1708 = vmax.f32 %v1517, 0.0
  %v1709 = vmax.f32 %v1522, 0.0
  %v1710 = vmax.f32 %v1527, 0.0
  %v1711 = vmax.f32 %v1532, 0.0
  %v1712 = vmax.f32 %v1537, 0.0
  %v1713 = vmax.f32 %v1542, 0.0
  %v1714 = vmax.f32 %v1547, 0.0
  %v1715 = vmax.f32 %v1552, 0.0
  %v1716 = vmax.f32 %v1557, 0.0
  %v1717 = vmax.f32 %v1562, 0.0
  %v1718 = vmax.f32 %v1567, 0.0
  %v1719 = vmax.f32 %v1572, 0.0
  %v1720 = vmax.f32 %v1577, 0.0
  %v1721 = vmax.f32 %v1582, 0.0
  %v1722 = vmax.f32 %v1587, 0.0
  %v1723 = vmax.f32 %v1592, 0.0
  %v1724 = vmax.f32 %v1597, 0.0
  %v1725 = vmax.f32 %v1602, 0.0
  %v1726 = vmax.f32 %v1607, 0.0
  %v1727 = vmax.f32 %v1612, 0.0
  %v1728 = vmax.f32 %v1617, 0.0
  %v1729 = vmax.f32 %v1622, 0.0
  %v1730 = vmax.f32 %v1627, 0.0
  %v1731 = vmax.f32 %v1632, 0.0
  %v1732 = vmax.f32 %v1637, 0.0
  %v1733 = vmax.f32 %v1642, 0.0
  %v1734 = vmax.f32 %v1647, 0.0
  %v1735 = vmax.f32 %v1652, 0.0
  %v1736 = vmax.f32 %v1657, 0.0
  %v1737 = vmax.f32 %v1662, 0.0
  %v1738 = vmax.f32 %v1667, 0.0
  %v1739 = vmax.f32 %v1672, 0.0
  %v1740 = vmax.f32 %v1677, 0.0
  %v1741 = vmax.f32 %v1682, 0.0
  %v1742 = vmax.f32 %v1687, 0.0
  %v1743 = vmax.f32 %v1692, 0.0
  %v1744 = vmax.f32 %v1139, %v1695
  %v1745 = vmax.f32 %v1140, %v1696
  %v1746 = vmax.f32 %v1141, %v1697
  %v1747 = vmax.f32 %v1142, %v1698
  %v1748 = vmax.f32 %v1143, %v1699
  %v1749 = vmax.f32 %v1144, %v1700
  %v1750 = vmax.f32 %v1145, %v1701
  %v1751 = vmax.f32 %v1146, %v1702
  %v1752 = vmax.f32 %v1147, %v1703
  %v1753 = vmax.f32 %v1148, %v1704
  %v1754 = vmax.f32 %v1149, %v1705
  %v1755 = vmax.f32 %v1150, %v1706
  %v1756 = vmax.f32 %v1151, %v1707
  %v1757 = vmax.f32 %v1152, %v1708
  %v1758 = vmax.f32 %v1153, %v1709
  %v1759 = vmax.f32 %v1154, %v1710
  %v1760 = vmax.f32 %v1155, %v1711
  %v1761 = vmax.f32 %v1156, %v1712
  %v1762 = vmax.f32 %v1157, %v1713
  %v1763 = vmax.f32 %v1158, %v1714
  %v1764 = vmax.f32 %v1159, %v1715
  %v1765 = vmax.f32 %v1160, %v1716
  %v1766 = vmax.f32 %v1161, %v1717
  %v1767 = vmax.f32 %v1162, %v1718
  %v1768 = vmax.f32 %v1163, %v1719
  %v1769 = vmax.f32 %v1164, %v1720
  %v1770 = vmax.f32 %v1165, %v1721
  %v1771 = vmax.f32 %v1166, %v1722
  %v1772 = vmax.f32 %v1167, %v1723
  %v1773 = vmax.f32 %v1168, %v1724
  %v1774 = vmax.f32 %v1169, %v1725
  %v1775 = vmax.f32 %v1170, %v1726
  %v1776 = vmax.f32 %v1171, %v1727
  %v1777 = vmax.f32 %v1172, %v1728
  %v1778 = vmax.f32 %v1173, %v1729
  %v1779 = vmax.f32 %v1174, %v1730
  %v1780 = vmax.f32 %v1175, %v1731
  %v1781 = vmax.f32 %v1176, %v1732
  %v1782 = vmax.f32 %v1177, %v1733
  %v1783 = vmax.f32 %v1178, %v1734
  %v1784 = vmax.f32 %v1179, %v1735
  %v1785 = vmax.f32 %v1180, %v1736
  %v1786 = vmax.f32 %v1181, %v1737
  %v1787 = vmax.f32 %v1182, %v1738
  %v1788 = vmax.f32 %v1183, %v1739
  %v1789 = vmax.f32 %v1184, %v1740
  %v1790 = vmax.f32 %v1185, %v1741
  %v1791 = vmax.f32 %v1186, %v1742
  %v1792 = vmax.f32 %v1187, %v1743
  %s1793 = scalar_lea.vmem %s0, 1176
  %v1794 = vld [vmem:[%s1793] sm:$0xff]
  %v1795 = vld [vmem:[%s1793 + $0x8] sm:$0xff]
  %v1796 = vld [vmem:[%s1793 + $0x10] sm:$0xff]
  %v1797 = vld [vmem:[%s1793 + $0x18] sm:$0xff]
  %v1798 = vld [vmem:[%s1793 + $0x20] sm:$0xff]
  %v1799 = vld [vmem:[%s1793 + $0x28] sm:$0xff]
  %v1800 = vld [vmem:[%s1793 + $0x30] sm:$0xff]
  %v1801 = vld [vmem:[%s1793 + $0x38] sm:$0xff]
  %v1802 = vld [vmem:[%s1793 + $0x40] sm:$0xff]
  %v1803 = vld [vmem:[%s1793 + $0x48] sm:$0xff]
  %v1804 = vld [vmem:[%s1793 + $0x50] sm:$0xff]
  %v1805 = vld [vmem:[%s1793 + $0x58] sm:$0xff]
  %v1806 = vld [vmem:[%s1793 + $0x60] sm:$0xff]
  %v1807 = vld [vmem:[%s1793 + $0x68] sm:$0xff]
  %v1808 = vld [vmem:[%s1793 + $0x70] sm:$0xff]
  %v1809 = vld [vmem:[%s1793 + $0x78] sm:$0xff]
  %v1810 = vld [vmem:[%s1793 + $0x80] sm:$0xff]
  %v1811 = vld [vmem:[%s1793 + $0x88] sm:$0xff]
  %v1812 = vld [vmem:[%s1793 + $0x90] sm:$0xff]
  %v1813 = vld [vmem:[%s1793 + $0x98] sm:$0xff]
  %v1814 = vld [vmem:[%s1793 + $0xa0] sm:$0xff]
  %v1815 = vld [vmem:[%s1793 + $0xa8] sm:$0xff]
  %v1816 = vld [vmem:[%s1793 + $0xb0] sm:$0xff]
  %v1817 = vld [vmem:[%s1793 + $0xb8] sm:$0xff]
  %v1818 = vld [vmem:[%s1793 + $0xc0] sm:$0xff]
  %v1819 = vld [vmem:[%s1793 + $0xc8] sm:$0xff]
  %v1820 = vld [vmem:[%s1793 + $0xd0] sm:$0xff]
  %v1821 = vld [vmem:[%s1793 + $0xd8] sm:$0xff]
  %v1822 = vld [vmem:[%s1793 + $0xe0] sm:$0xff]
  %v1823 = vld [vmem:[%s1793 + $0xe8] sm:$0xff]
  %v1824 = vld [vmem:[%s1793 + $0xf0] sm:$0xff]
  %v1825 = vld [vmem:[%s1793 + $0xf8] sm:$0xff]
  %v1826 = vld [vmem:[%s1793 + $0x100] sm:$0xff]
  %v1827 = vld [vmem:[%s1793 + $0x108] sm:$0xff]
  %v1828 = vld [vmem:[%s1793 + $0x110] sm:$0xff]
  %v1829 = vld [vmem:[%s1793 + $0x118] sm:$0xff]
  %v1830 = vld [vmem:[%s1793 + $0x120] sm:$0xff]
  %v1831 = vld [vmem:[%s1793 + $0x128] sm:$0xff]
  %v1832 = vld [vmem:[%s1793 + $0x130] sm:$0xff]
  %v1833 = vld [vmem:[%s1793 + $0x138] sm:$0xff]
  %v1834 = vld [vmem:[%s1793 + $0x140] sm:$0xff]
  %v1835 = vld [vmem:[%s1793 + $0x148] sm:$0xff]
  %v1836 = vld [vmem:[%s1793 + $0x150] sm:$0xff]
  %v1837 = vld [vmem:[%s1793 + $0x158] sm:$0xff]
  %v1838 = vld [vmem:[%s1793 + $0x160] sm:$0xff]
  %v1839 = vld [vmem:[%s1793 + $0x168] sm:$0xff]
  %v1840 = vld [vmem:[%s1793 + $0x170] sm:$0xff]
  %v1841 = vld [vmem:[%s1793 + $0x178] sm:$0xff]
  %v1842 = vld [vmem:[%s1793 + $0x180] sm:$0xff]
  %v1844 = vsel %vm72, %v1794, 0
  %v1847 = vsel %vm72, %v1795, 0
  %v1850 = vsel %vm72, %v1796, 0
  %v1853 = vsel %vm72, %v1797, 0
  %v1856 = vsel %vm72, %v1798, 0
  %v1859 = vsel %vm72, %v1799, 0
  %v1862 = vsel %vm72, %v1800, 0
  %v1865 = vsel %vm72, %v1801, 0
  %v1868 = vsel %vm72, %v1802, 0
  %v1871 = vsel %vm72, %v1803, 0
  %v1874 = vsel %vm72, %v1804, 0
  %v1877 = vsel %vm72, %v1805, 0
  %v1880 = vsel %vm72, %v1806, 0
  %v1883 = vsel %vm72, %v1807, 0
  %v1886 = vsel %vm72, %v1808, 0
  %v1889 = vsel %vm72, %v1809, 0
  %v1892 = vsel %vm72, %v1810, 0
  %v1895 = vsel %vm72, %v1811, 0
  %v1898 = vsel %vm72, %v1812, 0
  %v1901 = vsel %vm72, %v1813, 0
  %v1904 = vsel %vm72, %v1814, 0
  %v1907 = vsel %vm72, %v1815, 0
  %v1910 = vsel %vm72, %v1816, 0
  %v1913 = vsel %vm72, %v1817, 0
  %v1916 = vsel %vm72, %v1818, 0
  %v1919 = vsel %vm72, %v1819, 0
  %v1922 = vsel %vm72, %v1820, 0
  %v1925 = vsel %vm72, %v1821, 0
  %v1928 = vsel %vm72, %v1822, 0
  %v1931 = vsel %vm72, %v1823, 0
  %v1934 = vsel %vm72, %v1824, 0
  %v1937 = vsel %vm72, %v1825, 0
  %v1940 = vsel %vm72, %v1826, 0
  %v1943 = vsel %vm72, %v1827, 0
  %v1946 = vsel %vm72, %v1828, 0
  %v1949 = vsel %vm72, %v1829, 0
  %v1952 = vsel %vm72, %v1830, 0
  %v1955 = vsel %vm72, %v1831, 0
  %v1958 = vsel %vm72, %v1832, 0
  %v1961 = vsel %vm72, %v1833, 0
  %v1964 = vsel %vm72, %v1834, 0
  %v1967 = vsel %vm72, %v1835, 0
  %v1970 = vsel %vm72, %v1836, 0
  %v1973 = vsel %vm72, %v1837, 0
  %v1976 = vsel %vm72, %v1838, 0
  %v1979 = vsel %vm72, %v1839, 0
  %v1982 = vsel %vm72, %v1840, 0
  %v1985 = vsel %vm72, %v1841, 0
  %v1988 = vsel %vm72, %v1842, 0
  %1990 = vmatprep.subr.mxu0 0.0
  %1991 = vmatpush1.msra.mxu0 0.0
  %1992 = vmatprep.subr.mxu0 0.0
  %1993 = vmatpush1.msra.mxu0 0.0
  %1994 = vmatprep.subr.mxu0 0.0
  %1995 = vmatpush1.msra.mxu0 0.0
  %1996 = vmatprep.subr.mxu0 0.0
  %1997 = vmatpush1.msra.mxu0 0.0
  %1998 = vmatprep.subr.mxu0 0.0
  %1999 = vmatpush1.msra.mxu0 0.0
  %2000 = vmatprep.subr.mxu0 0.0
  %2001 = vmatpush1.msra.mxu0 0.0
  %2002 = vmatprep.subr.mxu0 0.0
  %2003 = vmatpush1.msra.mxu0 0.0
  %2004 = vmatprep.subr.mxu0 0.0
  %2005 = vmatpush1.msra.mxu0 0.0
  %2006 = vmatprep.subr.mxu0 0.0
  %2007 = vmatpush1.msra.mxu0 0.0
  %2008 = vmatprep.subr.mxu0 0.0
  %2009 = vmatpush1.msra.mxu0 0.0
  %2010 = vmatprep.subr.mxu0 0.0
  %2011 = vmatpush1.msra.mxu0 0.0
  %2012 = vmatprep.subr.mxu0 0.0
  %2013 = vmatpush1.msra.mxu0 0.0
  %2014 = vmatprep.subr.mxu0 0.0
  %2015 = vmatpush1.msra.mxu0 0.0
  %2016 = vmatprep.subr.mxu0 0.0
  %2017 = vmatpush1.msra.mxu0 0.0
  %2018 = vmatprep.subr.mxu0 0.0
  %2019 = vmatpush1.msra.mxu0 %v222
  %2020 = vmatprep.subr.mxu0 0.0
  %2021 = vmatpush1.msra.mxu0 %v14
  %2022 = vmatprep.subr.mxu0 0.0
  %2023 = vmatpush2.msra.mxu0 0.0
  %2024 = vmatprep.subr.mxu0 0.0
  %2025 = vmatpush2.msra.mxu0 0.0
  %2026 = vmatprep.subr.mxu0 0.0
  %2027 = vmatpush2.msra.mxu0 0.0
  %2028 = vmatprep.subr.mxu0 0.0
  %2029 = vmatpush2.msra.mxu0 0.0
  %2030 = vmatprep.subr.mxu0 0.0
  %2031 = vmatpush2.msra.mxu0 0.0
  %2032 = vmatprep.subr.mxu0 0.0
  %2033 = vmatpush2.msra.mxu0 0.0
  %2034 = vmatprep.subr.mxu0 0.0
  %2035 = vmatpush2.msra.mxu0 0.0
  %2036 = vmatprep.subr.mxu0 0.0
  %2037 = vmatpush2.msra.mxu0 0.0
  %2038 = vmatprep.subr.mxu0 0.0
  %2039 = vmatpush2.msra.mxu0 0.0
  %2040 = vmatprep.subr.mxu0 0.0
  %2041 = vmatpush2.msra.mxu0 0.0
  %2042 = vmatprep.subr.mxu0 0.0
  %2043 = vmatpush2.msra.mxu0 0.0
  %2044 = vmatprep.subr.mxu0 0.0
  %2045 = vmatpush2.msra.mxu0 0.0
  %2046 = vmatprep.subr.mxu0 0.0
  %2047 = vmatpush2.msra.mxu0 0.0
  %2048 = vmatprep.subr.mxu0 0.0
  %2049 = vmatpush2.msra.mxu0 0.0
  %2050 = vmatprep.subr.mxu0 0.0
  %2051 = vmatpush2.msra.mxu0 0.0
  %2052 = vmatprep.subr.mxu0 0.0
  %2053 = vmatpush2.msra.mxu0 0.0
  %2054 = vmatprep.mubr.f32.mxu0 0.0
  %2055 = vmatmul.mubr.f32.gmra.mxu0 %v1844
  %v2056 = vpop.f32.mrf.mxu0
  %v2057 = vadd.f32 %v70, %v2056
  %v2058 = vpop.f32.mrf.mxu0
  %2059 = vmatprep.mubr.f32.mxu0 0.0
  %2060 = vmatmul.mubr.f32.gmra.mxu0 %v1847
  %v2061 = vpop.f32.mrf.mxu0
  %v2062 = vadd.f32 %v70, %v2061
  %v2063 = vpop.f32.mrf.mxu0
  %2064 = vmatprep.mubr.f32.mxu0 0.0
  %2065 = vmatmul.mubr.f32.gmra.mxu0 %v1850
  %v2066 = vpop.f32.mrf.mxu0
  %v2067 = vadd.f32 %v70, %v2066
  %v2068 = vpop.f32.mrf.mxu0
  %2069 = vmatprep.mubr.f32.mxu0 0.0
  %2070 = vmatmul.mubr.f32.gmra.mxu0 %v1853
  %v2071 = vpop.f32.mrf.mxu0
  %v2072 = vadd.f32 %v70, %v2071
  %v2073 = vpop.f32.mrf.mxu0
  %2074 = vmatprep.mubr.f32.mxu0 0.0
  %2075 = vmatmul.mubr.f32.gmra.mxu0 %v1856
  %v2076 = vpop.f32.mrf.mxu0
  %v2077 = vadd.f32 %v70, %v2076
  %v2078 = vpop.f32.mrf.mxu0
  %2079 = vmatprep.mubr.f32.mxu0 0.0
  %2080 = vmatmul.mubr.f32.gmra.mxu0 %v1859
  %v2081 = vpop.f32.mrf.mxu0
  %v2082 = vadd.f32 %v70, %v2081
  %v2083 = vpop.f32.mrf.mxu0
  %2084 = vmatprep.mubr.f32.mxu0 0.0
  %2085 = vmatmul.mubr.f32.gmra.mxu0 %v1862
  %v2086 = vpop.f32.mrf.mxu0
  %v2087 = vadd.f32 %v70, %v2086
  %v2088 = vpop.f32.mrf.mxu0
  %2089 = vmatprep.mubr.f32.mxu0 0.0
  %2090 = vmatmul.mubr.f32.gmra.mxu0 %v1865
  %v2091 = vpop.f32.mrf.mxu0
  %v2092 = vadd.f32 %v70, %v2091
  %v2093 = vpop.f32.mrf.mxu0
  %2094 = vmatprep.mubr.f32.mxu0 0.0
  %2095 = vmatmul.mubr.f32.gmra.mxu0 %v1868
  %v2096 = vpop.f32.mrf.mxu0
  %v2097 = vadd.f32 %v70, %v2096
  %v2098 = vpop.f32.mrf.mxu0
  %2099 = vmatprep.mubr.f32.mxu0 0.0
  %2100 = vmatmul.mubr.f32.gmra.mxu0 %v1871
  %v2101 = vpop.f32.mrf.mxu0
  %v2102 = vadd.f32 %v70, %v2101
  %v2103 = vpop.f32.mrf.mxu0
  %2104 = vmatprep.mubr.f32.mxu0 0.0
  %2105 = vmatmul.mubr.f32.gmra.mxu0 %v1874
  %v2106 = vpop.f32.mrf.mxu0
  %v2107 = vadd.f32 %v70, %v2106
  %v2108 = vpop.f32.mrf.mxu0
  %2109 = vmatprep.mubr.f32.mxu0 0.0
  %2110 = vmatmul.mubr.f32.gmra.mxu0 %v1877
  %v2111 = vpop.f32.mrf.mxu0
  %v2112 = vadd.f32 %v70, %v2111
  %v2113 = vpop.f32.mrf.mxu0
  %2114 = vmatprep.mubr.f32.mxu0 0.0
  %2115 = vmatmul.mubr.f32.gmra.mxu0 %v1880
  %v2116 = vpop.f32.mrf.mxu0
  %v2117 = vadd.f32 %v70, %v2116
  %v2118 = vpop.f32.mrf.mxu0
  %2119 = vmatprep.mubr.f32.mxu0 0.0
  %2120 = vmatmul.mubr.f32.gmra.mxu0 %v1883
  %v2121 = vpop.f32.mrf.mxu0
  %v2122 = vadd.f32 %v70, %v2121
  %v2123 = vpop.f32.mrf.mxu0
  %2124 = vmatprep.mubr.f32.mxu0 0.0
  %2125 = vmatmul.mubr.f32.gmra.mxu0 %v1886
  %v2126 = vpop.f32.mrf.mxu0
  %v2127 = vadd.f32 %v70, %v2126
  %v2128 = vpop.f32.mrf.mxu0
  %2129 = vmatprep.mubr.f32.mxu0 0.0
  %2130 = vmatmul.mubr.f32.gmra.mxu0 %v1889
  %v2131 = vpop.f32.mrf.mxu0
  %v2132 = vadd.f32 %v70, %v2131
  %v2133 = vpop.f32.mrf.mxu0
  %2134 = vmatprep.mubr.f32.mxu0 0.0
  %2135 = vmatmul.mubr.f32.gmra.mxu0 %v1892
  %v2136 = vpop.f32.mrf.mxu0
  %v2137 = vadd.f32 %v70, %v2136
  %v2138 = vpop.f32.mrf.mxu0
  %2139 = vmatprep.mubr.f32.mxu0 0.0
  %2140 = vmatmul.mubr.f32.gmra.mxu0 %v1895
  %v2141 = vpop.f32.mrf.mxu0
  %v2142 = vadd.f32 %v70, %v2141
  %v2143 = vpop.f32.mrf.mxu0
  %2144 = vmatprep.mubr.f32.mxu0 0.0
  %2145 = vmatmul.mubr.f32.gmra.mxu0 %v1898
  %v2146 = vpop.f32.mrf.mxu0
  %v2147 = vadd.f32 %v70, %v2146
  %v2148 = vpop.f32.mrf.mxu0
  %2149 = vmatprep.mubr.f32.mxu0 0.0
  %2150 = vmatmul.mubr.f32.gmra.mxu0 %v1901
  %v2151 = vpop.f32.mrf.mxu0
  %v2152 = vadd.f32 %v70, %v2151
  %v2153 = vpop.f32.mrf.mxu0
  %2154 = vmatprep.mubr.f32.mxu0 0.0
  %2155 = vmatmul.mubr.f32.gmra.mxu0 %v1904
  %v2156 = vpop.f32.mrf.mxu0
  %v2157 = vadd.f32 %v70, %v2156
  %v2158 = vpop.f32.mrf.mxu0
  %2159 = vmatprep.mubr.f32.mxu0 0.0
  %2160 = vmatmul.mubr.f32.gmra.mxu0 %v1907
  %v2161 = vpop.f32.mrf.mxu0
  %v2162 = vadd.f32 %v70, %v2161
  %v2163 = vpop.f32.mrf.mxu0
  %2164 = vmatprep.mubr.f32.mxu0 0.0
  %2165 = vmatmul.mubr.f32.gmra.mxu0 %v1910
  %v2166 = vpop.f32.mrf.mxu0
  %v2167 = vadd.f32 %v70, %v2166
  %v2168 = vpop.f32.mrf.mxu0
  %2169 = vmatprep.mubr.f32.mxu0 0.0
  %2170 = vmatmul.mubr.f32.gmra.mxu0 %v1913
  %v2171 = vpop.f32.mrf.mxu0
  %v2172 = vadd.f32 %v70, %v2171
  %v2173 = vpop.f32.mrf.mxu0
  %2174 = vmatprep.mubr.f32.mxu0 0.0
  %2175 = vmatmul.mubr.f32.gmra.mxu0 %v1916
  %v2176 = vpop.f32.mrf.mxu0
  %v2177 = vadd.f32 %v70, %v2176
  %v2178 = vpop.f32.mrf.mxu0
  %2179 = vmatprep.mubr.f32.mxu0 0.0
  %2180 = vmatmul.mubr.f32.gmra.mxu0 %v1919
  %v2181 = vpop.f32.mrf.mxu0
  %v2182 = vadd.f32 %v70, %v2181
  %v2183 = vpop.f32.mrf.mxu0
  %2184 = vmatprep.mubr.f32.mxu0 0.0
  %2185 = vmatmul.mubr.f32.gmra.mxu0 %v1922
  %v2186 = vpop.f32.mrf.mxu0
  %v2187 = vadd.f32 %v70, %v2186
  %v2188 = vpop.f32.mrf.mxu0
  %2189 = vmatprep.mubr.f32.mxu0 0.0
  %2190 = vmatmul.mubr.f32.gmra.mxu0 %v1925
  %v2191 = vpop.f32.mrf.mxu0
  %v2192 = vadd.f32 %v70, %v2191
  %v2193 = vpop.f32.mrf.mxu0
  %2194 = vmatprep.mubr.f32.mxu0 0.0
  %2195 = vmatmul.mubr.f32.gmra.mxu0 %v1928
  %v2196 = vpop.f32.mrf.mxu0
  %v2197 = vadd.f32 %v70, %v2196
  %v2198 = vpop.f32.mrf.mxu0
  %2199 = vmatprep.mubr.f32.mxu0 0.0
  %2200 = vmatmul.mubr.f32.gmra.mxu0 %v1931
  %v2201 = vpop.f32.mrf.mxu0
  %v2202 = vadd.f32 %v70, %v2201
  %v2203 = vpop.f32.mrf.mxu0
  %2204 = vmatprep.mubr.f32.mxu0 0.0
  %2205 = vmatmul.mubr.f32.gmra.mxu0 %v1934
  %v2206 = vpop.f32.mrf.mxu0
  %v2207 = vadd.f32 %v70, %v2206
  %v2208 = vpop.f32.mrf.mxu0
  %2209 = vmatprep.mubr.f32.mxu0 0.0
  %2210 = vmatmul.mubr.f32.gmra.mxu0 %v1937
  %v2211 = vpop.f32.mrf.mxu0
  %v2212 = vadd.f32 %v70, %v2211
  %v2213 = vpop.f32.mrf.mxu0
  %2214 = vmatprep.mubr.f32.mxu0 0.0
  %2215 = vmatmul.mubr.f32.gmra.mxu0 %v1940
  %v2216 = vpop.f32.mrf.mxu0
  %v2217 = vadd.f32 %v70, %v2216
  %v2218 = vpop.f32.mrf.mxu0
  %2219 = vmatprep.mubr.f32.mxu0 0.0
  %2220 = vmatmul.mubr.f32.gmra.mxu0 %v1943
  %v2221 = vpop.f32.mrf.mxu0
  %v2222 = vadd.f32 %v70, %v2221
  %v2223 = vpop.f32.mrf.mxu0
  %2224 = vmatprep.mubr.f32.mxu0 0.0
  %2225 = vmatmul.mubr.f32.gmra.mxu0 %v1946
  %v2226 = vpop.f32.mrf.mxu0
  %v2227 = vadd.f32 %v70, %v2226
  %v2228 = vpop.f32.mrf.mxu0
  %2229 = vmatprep.mubr.f32.mxu0 0.0
  %2230 = vmatmul.mubr.f32.gmra.mxu0 %v1949
  %v2231 = vpop.f32.mrf.mxu0
  %v2232 = vadd.f32 %v70, %v2231
  %v2233 = vpop.f32.mrf.mxu0
  %2234 = vmatprep.mubr.f32.mxu0 0.0
  %2235 = vmatmul.mubr.f32.gmra.mxu0 %v1952
  %v2236 = vpop.f32.mrf.mxu0
  %v2237 = vadd.f32 %v70, %v2236
  %v2238 = vpop.f32.mrf.mxu0
  %2239 = vmatprep.mubr.f32.mxu0 0.0
  %2240 = vmatmul.mubr.f32.gmra.mxu0 %v1955
  %v2241 = vpop.f32.mrf.mxu0
  %v2242 = vadd.f32 %v70, %v2241
  %v2243 = vpop.f32.mrf.mxu0
  %2244 = vmatprep.mubr.f32.mxu0 0.0
  %2245 = vmatmul.mubr.f32.gmra.mxu0 %v1958
  %v2246 = vpop.f32.mrf.mxu0
  %v2247 = vadd.f32 %v70, %v2246
  %v2248 = vpop.f32.mrf.mxu0
  %2249 = vmatprep.mubr.f32.mxu0 0.0
  %2250 = vmatmul.mubr.f32.gmra.mxu0 %v1961
  %v2251 = vpop.f32.mrf.mxu0
  %v2252 = vadd.f32 %v70, %v2251
  %v2253 = vpop.f32.mrf.mxu0
  %2254 = vmatprep.mubr.f32.mxu0 0.0
  %2255 = vmatmul.mubr.f32.gmra.mxu0 %v1964
  %v2256 = vpop.f32.mrf.mxu0
  %v2257 = vadd.f32 %v70, %v2256
  %v2258 = vpop.f32.mrf.mxu0
  %2259 = vmatprep.mubr.f32.mxu0 0.0
  %2260 = vmatmul.mubr.f32.gmra.mxu0 %v1967
  %v2261 = vpop.f32.mrf.mxu0
  %v2262 = vadd.f32 %v70, %v2261
  %v2263 = vpop.f32.mrf.mxu0
  %2264 = vmatprep.mubr.f32.mxu0 0.0
  %2265 = vmatmul.mubr.f32.gmra.mxu0 %v1970
  %v2266 = vpop.f32.mrf.mxu0
  %v2267 = vadd.f32 %v70, %v2266
  %v2268 = vpop.f32.mrf.mxu0
  %2269 = vmatprep.mubr.f32.mxu0 0.0
  %2270 = vmatmul.mubr.f32.gmra.mxu0 %v1973
  %v2271 = vpop.f32.mrf.mxu0
  %v2272 = vadd.f32 %v70, %v2271
  %v2273 = vpop.f32.mrf.mxu0
  %2274 = vmatprep.mubr.f32.mxu0 0.0
  %2275 = vmatmul.mubr.f32.gmra.mxu0 %v1976
  %v2276 = vpop.f32.mrf.mxu0
  %v2277 = vadd.f32 %v70, %v2276
  %v2278 = vpop.f32.mrf.mxu0
  %2279 = vmatprep.mubr.f32.mxu0 0.0
  %2280 = vmatmul.mubr.f32.gmra.mxu0 %v1979
  %v2281 = vpop.f32.mrf.mxu0
  %v2282 = vadd.f32 %v70, %v2281
  %v2283 = vpop.f32.mrf.mxu0
  %2284 = vmatprep.mubr.f32.mxu0 0.0
  %2285 = vmatmul.mubr.f32.gmra.mxu0 %v1982
  %v2286 = vpop.f32.mrf.mxu0
  %v2287 = vadd.f32 %v70, %v2286
  %v2288 = vpop.f32.mrf.mxu0
  %2289 = vmatprep.mubr.f32.mxu0 0.0
  %2290 = vmatmul.mubr.f32.gmra.mxu0 %v1985
  %v2291 = vpop.f32.mrf.mxu0
  %v2292 = vadd.f32 %v70, %v2291
  %v2293 = vpop.f32.mrf.mxu0
  %2294 = vmatprep.mubr.f32.mxu0 0.0
  %2295 = vmatmul.mubr.f32.gmra.mxu0 %v1988
  %v2296 = vpop.f32.mrf.mxu0
  %v2297 = vadd.f32 %v70, %v2296
  %v2298 = vpop.f32.mrf.mxu0
  %2299 = vdwg.mxu0
  %v2300 = vmax.f32 %v2057, 0.0
  %v2301 = vmax.f32 %v2062, 0.0
  %v2302 = vmax.f32 %v2067, 0.0
  %v2303 = vmax.f32 %v2072, 0.0
  %v2304 = vmax.f32 %v2077, 0.0
  %v2305 = vmax.f32 %v2082, 0.0
  %v2306 = vmax.f32 %v2087, 0.0
  %v2307 = vmax.f32 %v2092, 0.0
  %v2308 = vmax.f32 %v2097, 0.0
  %v2309 = vmax.f32 %v2102, 0.0
  %v2310 = vmax.f32 %v2107, 0.0
  %v2311 = vmax.f32 %v2112, 0.0
  %v2312 = vmax.f32 %v2117, 0.0
  %v2313 = vmax.f32 %v2122, 0.0
  %v2314 = vmax.f32 %v2127, 0.0
  %v2315 = vmax.f32 %v2132, 0.0
  %v2316 = vmax.f32 %v2137, 0.0
  %v2317 = vmax.f32 %v2142, 0.0
  %v2318 = vmax.f32 %v2147, 0.0
  %v2319 = vmax.f32 %v2152, 0.0
  %v2320 = vmax.f32 %v2157, 0.0
  %v2321 = vmax.f32 %v2162, 0.0
  %v2322 = vmax.f32 %v2167, 0.0
  %v2323 = vmax.f32 %v2172, 0.0
  %v2324 = vmax.f32 %v2177, 0.0
  %v2325 = vmax.f32 %v2182, 0.0
  %v2326 = vmax.f32 %v2187, 0.0
  %v2327 = vmax.f32 %v2192, 0.0
  %v2328 = vmax.f32 %v2197, 0.0
  %v2329 = vmax.f32 %v2202, 0.0
  %v2330 = vmax.f32 %v2207, 0.0
  %v2331 = vmax.f32 %v2212, 0.0
  %v2332 = vmax.f32 %v2217, 0.0
  %v2333 = vmax.f32 %v2222, 0.0
  %v2334 = vmax.f32 %v2227, 0.0
  %v2335 = vmax.f32 %v2232, 0.0
  %v2336 = vmax.f32 %v2237, 0.0
  %v2337 = vmax.f32 %v2242, 0.0
  %v2338 = vmax.f32 %v2247, 0.0
  %v2339 = vmax.f32 %v2252, 0.0
  %v2340 = vmax.f32 %v2257, 0.0
  %v2341 = vmax.f32 %v2262, 0.0
  %v2342 = vmax.f32 %v2267, 0.0
  %v2343 = vmax.f32 %v2272, 0.0
  %v2344 = vmax.f32 %v2277, 0.0
  %v2345 = vmax.f32 %v2282, 0.0
  %v2346 = vmax.f32 %v2287, 0.0
  %v2347 = vmax.f32 %v2292, 0.0
  %v2348 = vmax.f32 %v2297, 0.0
  %v2349 = vmax.f32 %v1744, %v2300
  %v2350 = vmax.f32 %v1745, %v2301
  %v2351 = vmax.f32 %v1746, %v2302
  %v2352 = vmax.f32 %v1747, %v2303
  %v2353 = vmax.f32 %v1748, %v2304
  %v2354 = vmax.f32 %v1749, %v2305
  %v2355 = vmax.f32 %v1750, %v2306
  %v2356 = vmax.f32 %v1751, %v2307
  %v2357 = vmax.f32 %v1752, %v2308
  %v2358 = vmax.f32 %v1753, %v2309
  %v2359 = vmax.f32 %v1754, %v2310
  %v2360 = vmax.f32 %v1755, %v2311
  %v2361 = vmax.f32 %v1756, %v2312
  %v2362 = vmax.f32 %v1757, %v2313
  %v2363 = vmax.f32 %v1758, %v2314
  %v2364 = vmax.f32 %v1759, %v2315
  %v2365 = vmax.f32 %v1760, %v2316
  %v2366 = vmax.f32 %v1761, %v2317
  %v2367 = vmax.f32 %v1762, %v2318
  %v2368 = vmax.f32 %v1763, %v2319
  %v2369 = vmax.f32 %v1764, %v2320
  %v2370 = vmax.f32 %v1765, %v2321
  %v2371 = vmax.f32 %v1766, %v2322
  %v2372 = vmax.f32 %v1767, %v2323
  %v2373 = vmax.f32 %v1768, %v2324
  %v2374 = vmax.f32 %v1769, %v2325
  %v2375 = vmax.f32 %v1770, %v2326
  %v2376 = vmax.f32 %v1771, %v2327
  %v2377 = vmax.f32 %v1772, %v2328
  %v2378 = vmax.f32 %v1773, %v2329
  %v2379 = vmax.f32 %v1774, %v2330
  %v2380 = vmax.f32 %v1775, %v2331
  %v2381 = vmax.f32 %v1776, %v2332
  %v2382 = vmax.f32 %v1777, %v2333
  %v2383 = vmax.f32 %v1778, %v2334
  %v2384 = vmax.f32 %v1779, %v2335
  %v2385 = vmax.f32 %v1780, %v2336
  %v2386 = vmax.f32 %v1781, %v2337
  %v2387 = vmax.f32 %v1782, %v2338
  %v2388 = vmax.f32 %v1783, %v2339
  %v2389 = vmax.f32 %v1784, %v2340
  %v2390 = vmax.f32 %v1785, %v2341
  %v2391 = vmax.f32 %v1786, %v2342
  %v2392 = vmax.f32 %v1787, %v2343
  %v2393 = vmax.f32 %v1788, %v2344
  %v2394 = vmax.f32 %v1789, %v2345
  %v2395 = vmax.f32 %v1790, %v2346
  %v2396 = vmax.f32 %v1791, %v2347
  %v2397 = vmax.f32 %v1792, %v2348
  %vm2398 = vcmask 261120
  %2399 = vst.msk [vmem:[%s3] sm:$0xff] %vm2398, %v2349
  %2400 = vst.msk [vmem:[%s3 + $0x8] sm:$0xff] %vm2398, %v2350
  %2401 = vst.msk [vmem:[%s3 + $0x10] sm:$0xff] %vm2398, %v2351
  %2402 = vst.msk [vmem:[%s3 + $0x18] sm:$0xff] %vm2398, %v2352
  %2403 = vst.msk [vmem:[%s3 + $0x20] sm:$0xff] %vm2398, %v2353
  %2404 = vst.msk [vmem:[%s3 + $0x28] sm:$0xff] %vm2398, %v2354
  %2405 = vst.msk [vmem:[%s3 + $0x30] sm:$0xff] %vm2398, %v2355
  %2406 = vst.msk [vmem:[%s3 + $0x38] sm:$0xff] %vm2398, %v2356
  %2407 = vst.msk [vmem:[%s3 + $0x40] sm:$0xff] %vm2398, %v2357
  %2408 = vst.msk [vmem:[%s3 + $0x48] sm:$0xff] %vm2398, %v2358
  %2409 = vst.msk [vmem:[%s3 + $0x50] sm:$0xff] %vm2398, %v2359
  %2410 = vst.msk [vmem:[%s3 + $0x58] sm:$0xff] %vm2398, %v2360
  %2411 = vst.msk [vmem:[%s3 + $0x60] sm:$0xff] %vm2398, %v2361
  %2412 = vst.msk [vmem:[%s3 + $0x68] sm:$0xff] %vm2398, %v2362
  %2413 = vst.msk [vmem:[%s3 + $0x70] sm:$0xff] %vm2398, %v2363
  %2414 = vst.msk [vmem:[%s3 + $0x78] sm:$0xff] %vm2398, %v2364
  %2415 = vst.msk [vmem:[%s3 + $0x80] sm:$0xff] %vm2398, %v2365
  %2416 = vst.msk [vmem:[%s3 + $0x88] sm:$0xff] %vm2398, %v2366
  %2417 = vst.msk [vmem:[%s3 + $0x90] sm:$0xff] %vm2398, %v2367
  %2418 = vst.msk [vmem:[%s3 + $0x98] sm:$0xff] %vm2398, %v2368
  %2419 = vst.msk [vmem:[%s3 + $0xa0] sm:$0xff] %vm2398, %v2369
  %2420 = vst.msk [vmem:[%s3 + $0xa8] sm:$0xff] %vm2398, %v2370
  %2421 = vst.msk [vmem:[%s3 + $0xb0] sm:$0xff] %vm2398, %v2371
  %2422 = vst.msk [vmem:[%s3 + $0xb8] sm:$0xff] %vm2398, %v2372
  %2423 = vst.msk [vmem:[%s3 + $0xc0] sm:$0xff] %vm2398, %v2373
  %2424 = vst.msk [vmem:[%s3 + $0xc8] sm:$0xff] %vm2398, %v2374
  %2425 = vst.msk [vmem:[%s3 + $0xd0] sm:$0xff] %vm2398, %v2375
  %2426 = vst.msk [vmem:[%s3 + $0xd8] sm:$0xff] %vm2398, %v2376
  %2427 = vst.msk [vmem:[%s3 + $0xe0] sm:$0xff] %vm2398, %v2377
  %2428 = vst.msk [vmem:[%s3 + $0xe8] sm:$0xff] %vm2398, %v2378
  %2429 = vst.msk [vmem:[%s3 + $0xf0] sm:$0xff] %vm2398, %v2379
  %2430 = vst.msk [vmem:[%s3 + $0xf8] sm:$0xff] %vm2398, %v2380
  %2431 = vst.msk [vmem:[%s3 + $0x100] sm:$0xff] %vm2398, %v2381
  %2432 = vst.msk [vmem:[%s3 + $0x108] sm:$0xff] %vm2398, %v2382
  %2433 = vst.msk [vmem:[%s3 + $0x110] sm:$0xff] %vm2398, %v2383
  %2434 = vst.msk [vmem:[%s3 + $0x118] sm:$0xff] %vm2398, %v2384
  %2435 = vst.msk [vmem:[%s3 + $0x120] sm:$0xff] %vm2398, %v2385
  %2436 = vst.msk [vmem:[%s3 + $0x128] sm:$0xff] %vm2398, %v2386
  %2437 = vst.msk [vmem:[%s3 + $0x130] sm:$0xff] %vm2398, %v2387
  %2438 = vst.msk [vmem:[%s3 + $0x138] sm:$0xff] %vm2398, %v2388
  %2439 = vst.msk [vmem:[%s3 + $0x140] sm:$0xff] %vm2398, %v2389
  %2440 = vst.msk [vmem:[%s3 + $0x148] sm:$0xff] %vm2398, %v2390
  %2441 = vst.msk [vmem:[%s3 + $0x150] sm:$0xff] %vm2398, %v2391
  %2442 = vst.msk [vmem:[%s3 + $0x158] sm:$0xff] %vm2398, %v2392
  %2443 = vst.msk [vmem:[%s3 + $0x160] sm:$0xff] %vm2398, %v2393
  %2444 = vst.msk [vmem:[%s3 + $0x168] sm:$0xff] %vm2398, %v2394
  %2445 = vst.msk [vmem:[%s3 + $0x170] sm:$0xff] %vm2398, %v2395
  %2446 = vst.msk [vmem:[%s3 + $0x178] sm:$0xff] %vm2398, %v2396
  %2447 = vst.msk [vmem:[%s3 + $0x180] sm:$0xff] %vm2398, %v2397
  // Predicated region
  $region14: #{cnn_fmnist_forward.3} parent=0 // pred_check
    _
  $region15: #{cnn_fmnist_forward.3} parent=0 // pred_check_branch
    %2449 = sbr.rel (0) target = $region17
  $region16: #{cnn_fmnist_forward.3} parent=0 // pred_region
    _
  $region17: #{cnn_fmnist_forward.3} parent=0 // pred_fallthru
    _
  // Predicated region
  $region18: #{cnn_fmnist_forward.3} parent=0 // pred_check
    _
  $region19: #{cnn_fmnist_forward.3} parent=0 // pred_check_branch
    %2451 = sbr.rel (0) target = $region21
  $region20: #{cnn_fmnist_forward.3} parent=0 // pred_region
    _
  $region21: #{cnn_fmnist_forward.3} parent=0 // pred_fallthru
    _

// kernel: cnn_fmnist_forward.4
$region0: #{cnn_fmnist_forward.4}
  #allocation0 [shape = 'u32[]', space=smem, size = 0x4, offset = 0x4, fixed_abs, tag = 'smem constant byte address 0x4 - core index']
  #allocation1 [shape = 'u32[144,128]{1,0:T(1,128)}', space=vmem, size = 0x12000, scoped, tag = 'internal scratch']
  %s0 = inlined_call_operand.vmem [shape: f32[4,98,288], index: 0, kind: input, shape index: {}]
  %s1 = inlined_call_operand.vmem [shape: f32[288,64], index: 1, kind: input, shape index: {}]
  %s2 = inlined_call_operand.vmem [shape: f32[1,64], index: 2, kind: input, shape index: {}]
  %s3 = inlined_call_operand.vmem [shape: f32[98,64], index: 3, kind: output, shape index: {}]
  %s4 = sld [smem:[#allocation0]]
  $region22: #{cnn_fmnist_forward.4} parent=0
    _
  %s6 = ssub.s32 1, %s4
  %s7 = scalar_select 0, %s6, %s4
  // Predicated region
  $region2: #{cnn_fmnist_forward.4} parent=0 // pred_check
    _
  $region3: #{cnn_fmnist_forward.4} parent=0 // pred_check_branch
    %9 = sbr.rel (0) target = $region5
  $region4: #{cnn_fmnist_forward.4} parent=0 // pred_region
    _
  $region5: #{cnn_fmnist_forward.4} parent=0 // pred_fallthru
    _
  // Predicated region
  $region6: #{cnn_fmnist_forward.4} parent=0 // pred_check
    _
  $region7: #{cnn_fmnist_forward.4} parent=0 // pred_check_branch
    %11 = sbr.rel (0) target = $region9
  $region8: #{cnn_fmnist_forward.4} parent=0 // pred_region
    _
  $region9: #{cnn_fmnist_forward.4} parent=0 // pred_fallthru
    _
  // Predicated region
  $region10: #{cnn_fmnist_forward.4} parent=0 // pred_check
    _
  $region11: #{cnn_fmnist_forward.4} parent=0 // pred_check_branch
    %13 = sbr.rel (0) target = $region13
  $region12: #{cnn_fmnist_forward.4} parent=0 // pred_region
    _
  $region13: #{cnn_fmnist_forward.4} parent=0 // pred_fallthru
    _
  %v14 = vld [vmem:[%s1] sm:$0xff]
  %v15 = vld [vmem:[%s1 + $0x8] sm:$0xff]
  %v16 = vld [vmem:[%s1 + $0x10] sm:$0xff]
  %v17 = vld [vmem:[%s1 + $0x18] sm:$0xff]
  %v18 = vld [vmem:[%s1 + $0x20] sm:$0xff]
  %v19 = vld [vmem:[%s1 + $0x28] sm:$0xff]
  %v20 = vld [vmem:[%s1 + $0x30] sm:$0xff]
  %v21 = vld [vmem:[%s1 + $0x38] sm:$0xff]
  %v22 = vld [vmem:[%s1 + $0x40] sm:$0xff]
  %v23 = vld [vmem:[%s1 + $0x48] sm:$0xff]
  %v24 = vld [vmem:[%s1 + $0x50] sm:$0xff]
  %v25 = vld [vmem:[%s1 + $0x58] sm:$0xff]
  %v26 = vld [vmem:[%s1 + $0x60] sm:$0xff]
  %v27 = vld [vmem:[%s1 + $0x68] sm:$0xff]
  %v28 = vld [vmem:[%s1 + $0x70] sm:$0xff]
  %v29 = vld [vmem:[%s1 + $0x78] sm:$0xff]
  %v30 = vld [vmem:[%s1 + $0x80] sm:$0xff]
  %v31 = vld [vmem:[%s1 + $0x88] sm:$0xff]
  %v32 = vld [vmem:[%s1 + $0x90] sm:$0xff]
  %v33 = vld [vmem:[%s1 + $0x98] sm:$0xff]
  %v34 = vld [vmem:[%s1 + $0xa0] sm:$0xff]
  %v35 = vld [vmem:[%s1 + $0xa8] sm:$0xff]
  %v36 = vld [vmem:[%s1 + $0xb0] sm:$0xff]
  %v37 = vld [vmem:[%s1 + $0xb8] sm:$0xff]
  %v38 = vld [vmem:[%s1 + $0xc0] sm:$0xff]
  %v39 = vld [vmem:[%s1 + $0xc8] sm:$0xff]
  %v40 = vld [vmem:[%s1 + $0xd0] sm:$0xff]
  %v41 = vld [vmem:[%s1 + $0xd8] sm:$0xff]
  %v42 = vld [vmem:[%s1 + $0xe0] sm:$0xff]
  %v43 = vld [vmem:[%s1 + $0xe8] sm:$0xff]
  %v44 = vld [vmem:[%s1 + $0xf0] sm:$0xff]
  %v45 = vld [vmem:[%s1 + $0xf8] sm:$0xff]
  %v46 = vld [vmem:[%s1 + $0x100] sm:$0xff]
  %v47 = vld [vmem:[%s1 + $0x108] sm:$0xff]
  %v48 = vld [vmem:[%s1 + $0x110] sm:$0xff]
  %v49 = vld [vmem:[%s1 + $0x118] sm:$0xff]
  %v50 = vld [vmem:[%s2] sm:$0x1]
  %v51 = vld [vmem:[%s0] sm:$0xff]
  %v52 = vld [vmem:[%s0 + $0x8] sm:$0xff]
  %v53 = vld [vmem:[%s0 + $0x10] sm:$0xff]
  %v54 = vld [vmem:[%s0 + $0x18] sm:$0xff]
  %v55 = vld [vmem:[%s0 + $0x20] sm:$0xff]
  %v56 = vld [vmem:[%s0 + $0x28] sm:$0xff]
  %v57 = vld [vmem:[%s0 + $0x30] sm:$0xff]
  %v58 = vld [vmem:[%s0 + $0x38] sm:$0xff]
  %v59 = vld [vmem:[%s0 + $0x40] sm:$0xff]
  %v60 = vld [vmem:[%s0 + $0x48] sm:$0xff]
  %v61 = vld [vmem:[%s0 + $0x50] sm:$0xff]
  %v62 = vld [vmem:[%s0 + $0x58] sm:$0xff]
  %v63 = vld [vmem:[%s0 + $0x60] sm:$0xff]
  %v64 = vld [vmem:[%s0 + $0x68] sm:$0xff]
  %v65 = vld [vmem:[%s0 + $0x70] sm:$0xff]
  %v66 = vld [vmem:[%s0 + $0x78] sm:$0xff]
  %v67 = vld [vmem:[%s0 + $0x80] sm:$0xff]
  %v68 = vld [vmem:[%s0 + $0x88] sm:$0xff]
  %v69 = vld [vmem:[%s0 + $0x90] sm:$0xff]
  %v70 = vld [vmem:[%s0 + $0x98] sm:$0xff]
  %v71 = vld [vmem:[%s0 + $0xa0] sm:$0xff]
  %v72 = vld [vmem:[%s0 + $0xa8] sm:$0xff]
  %v73 = vld [vmem:[%s0 + $0xb0] sm:$0xff]
  %v74 = vld [vmem:[%s0 + $0xb8] sm:$0xff]
  %v75 = vld [vmem:[%s0 + $0xc0] sm:$0xff]
  %v76 = vld [vmem:[%s0 + $0xc8] sm:$0xff]
  %v77 = vld [vmem:[%s0 + $0xd0] sm:$0xff]
  %v78 = vld [vmem:[%s0 + $0xd8] sm:$0xff]
  %v79 = vld [vmem:[%s0 + $0xe0] sm:$0xff]
  %v80 = vld [vmem:[%s0 + $0xe8] sm:$0xff]
  %v81 = vld [vmem:[%s0 + $0xf0] sm:$0xff]
  %v82 = vld [vmem:[%s0 + $0xf8] sm:$0xff]
  %v83 = vld [vmem:[%s0 + $0x100] sm:$0xff]
  %v84 = vld [vmem:[%s0 + $0x108] sm:$0xff]
  %v85 = vld [vmem:[%s0 + $0x110] sm:$0xff]
  %v86 = vld [vmem:[%s0 + $0x118] sm:$0xff]
  %v87 = vld [vmem:[%s0 + $0x120] sm:$0x3]
  %v88 = vld [vmem:[%s0 + $0x128] sm:$0x3]
  %v89 = vld [vmem:[%s0 + $0x130] sm:$0x3]
  %v91 = vlaneseq
  %v92 = vshrl.u32 %v91, 7
  %v93 = vsub.s32 0, %v92
  %v94 = vrot.slane %v50, %v93
  %vm96 = vcmask 261120
  %v98 = vsel %vm96, %v53, 0
  %v101 = vsel %vm96, %v56, 0
  %v104 = vsel %vm96, %v59, 0
  %v107 = vsel %vm96, %v62, 0
  %v110 = vsel %vm96, %v65, 0
  %v113 = vsel %vm96, %v68, 0
  %v116 = vsel %vm96, %v71, 0
  %v119 = vsel %vm96, %v74, 0
  %v122 = vsel %vm96, %v77, 0
  %v125 = vsel %vm96, %v80, 0
  %v128 = vsel %vm96, %v83, 0
  %v131 = vsel %vm96, %v86, 0
  %v134 = vsel %vm96, %v89, 0
  %136 = vmatprep.subr.mxu0 0.0
  %137 = vmatpush1.msra.mxu0 %v29
  %138 = vmatprep.subr.mxu0 0.0
  %139 = vmatpush1.msra.mxu0 %v28
  %140 = vmatprep.subr.mxu0 0.0
  %141 = vmatpush1.msra.mxu0 %v27
  %142 = vmatprep.subr.mxu0 0.0
  %143 = vmatpush1.msra.mxu0 %v26
  %144 = vmatprep.subr.mxu0 0.0
  %145 = vmatpush1.msra.mxu0 %v25
  %146 = vmatprep.subr.mxu0 0.0
  %147 = vmatpush1.msra.mxu0 %v24
  %148 = vmatprep.subr.mxu0 0.0
  %149 = vmatpush1.msra.mxu0 %v23
  %150 = vmatprep.subr.mxu0 0.0
  %151 = vmatpush1.msra.mxu0 %v22
  %152 = vmatprep.subr.mxu0 0.0
  %153 = vmatpush1.msra.mxu0 %v21
  %154 = vmatprep.subr.mxu0 0.0
  %155 = vmatpush1.msra.mxu0 %v20
  %156 = vmatprep.subr.mxu0 0.0
  %157 = vmatpush1.msra.mxu0 %v19
  %158 = vmatprep.subr.mxu0 0.0
  %159 = vmatpush1.msra.mxu0 %v18
  %160 = vmatprep.subr.mxu0 0.0
  %161 = vmatpush1.msra.mxu0 %v17
  %162 = vmatprep.subr.mxu0 0.0
  %163 = vmatpush1.msra.mxu0 %v16
  %164 = vmatprep.subr.mxu0 0.0
  %165 = vmatpush1.msra.mxu0 %v15
  %166 = vmatprep.subr.mxu0 0.0
  %167 = vmatpush1.msra.mxu0 %v14
  %168 = vmatprep.subr.mxu0 0.0
  %169 = vmatpush2.msra.mxu0 %v45
  %170 = vmatprep.subr.mxu0 0.0
  %171 = vmatpush2.msra.mxu0 %v44
  %172 = vmatprep.subr.mxu0 0.0
  %173 = vmatpush2.msra.mxu0 %v43
  %174 = vmatprep.subr.mxu0 0.0
  %175 = vmatpush2.msra.mxu0 %v42
  %176 = vmatprep.subr.mxu0 0.0
  %177 = vmatpush2.msra.mxu0 %v41
  %178 = vmatprep.subr.mxu0 0.0
  %179 = vmatpush2.msra.mxu0 %v40
  %180 = vmatprep.subr.mxu0 0.0
  %181 = vmatpush2.msra.mxu0 %v39
  %182 = vmatprep.subr.mxu0 0.0
  %183 = vmatpush2.msra.mxu0 %v38
  %184 = vmatprep.subr.mxu0 0.0
  %185 = vmatpush2.msra.mxu0 %v37
  %186 = vmatprep.subr.mxu0 0.0
  %187 = vmatpush2.msra.mxu0 %v36
  %188 = vmatprep.subr.mxu0 0.0
  %189 = vmatpush2.msra.mxu0 %v35
  %190 = vmatprep.subr.mxu0 0.0
  %191 = vmatpush2.msra.mxu0 %v34
  %192 = vmatprep.subr.mxu0 0.0
  %193 = vmatpush2.msra.mxu0 %v33
  %194 = vmatprep.subr.mxu0 0.0
  %195 = vmatpush2.msra.mxu0 %v32
  %196 = vmatprep.subr.mxu0 0.0
  %197 = vmatpush2.msra.mxu0 %v31
  %198 = vmatprep.subr.mxu0 0.0
  %199 = vmatpush2.msra.mxu0 %v30
  %200 = vmatprep.mubr.f32.mxu0 %v52
  %201 = vmatmul.mubr.f32.gmra.mxu0 %v51
  %v202 = vpop.f32.mrf.mxu0
  %v203 = vadd.f32 %v94, %v202
  %v204 = vpop.f32.mrf.mxu0
  %205 = vmatprep.mubr.f32.mxu0 %v55
  %206 = vmatmul.mubr.f32.gmra.mxu0 %v54
  %v207 = vpop.f32.mrf.mxu0
  %v208 = vadd.f32 %v94, %v207
  %v209 = vpop.f32.mrf.mxu0
  %210 = vmatprep.mubr.f32.mxu0 %v58
  %211 = vmatmul.mubr.f32.gmra.mxu0 %v57
  %v212 = vpop.f32.mrf.mxu0
  %v213 = vadd.f32 %v94, %v212
  %v214 = vpop.f32.mrf.mxu0
  %215 = vmatprep.mubr.f32.mxu0 %v61
  %216 = vmatmul.mubr.f32.gmra.mxu0 %v60
  %v217 = vpop.f32.mrf.mxu0
  %v218 = vadd.f32 %v94, %v217
  %v219 = vpop.f32.mrf.mxu0
  %220 = vmatprep.mubr.f32.mxu0 %v64
  %221 = vmatmul.mubr.f32.gmra.mxu0 %v63
  %v222 = vpop.f32.mrf.mxu0
  %v223 = vadd.f32 %v94, %v222
  %v224 = vpop.f32.mrf.mxu0
  %225 = vmatprep.mubr.f32.mxu0 %v67
  %226 = vmatmul.mubr.f32.gmra.mxu0 %v66
  %v227 = vpop.f32.mrf.mxu0
  %v228 = vadd.f32 %v94, %v227
  %v229 = vpop.f32.mrf.mxu0
  %230 = vmatprep.mubr.f32.mxu0 %v70
  %231 = vmatmul.mubr.f32.gmra.mxu0 %v69
  %v232 = vpop.f32.mrf.mxu0
  %v233 = vadd.f32 %v94, %v232
  %v234 = vpop.f32.mrf.mxu0
  %235 = vmatprep.mubr.f32.mxu0 %v73
  %236 = vmatmul.mubr.f32.gmra.mxu0 %v72
  %v237 = vpop.f32.mrf.mxu0
  %v238 = vadd.f32 %v94, %v237
  %v239 = vpop.f32.mrf.mxu0
  %240 = vmatprep.mubr.f32.mxu0 %v76
  %241 = vmatmul.mubr.f32.gmra.mxu0 %v75
  %v242 = vpop.f32.mrf.mxu0
  %v243 = vadd.f32 %v94, %v242
  %v244 = vpop.f32.mrf.mxu0
  %245 = vmatprep.mubr.f32.mxu0 %v79
  %246 = vmatmul.mubr.f32.gmra.mxu0 %v78
  %v247 = vpop.f32.mrf.mxu0
  %v248 = vadd.f32 %v94, %v247
  %v249 = vpop.f32.mrf.mxu0
  %250 = vmatprep.mubr.f32.mxu0 %v82
  %251 = vmatmul.mubr.f32.gmra.mxu0 %v81
  %v252 = vpop.f32.mrf.mxu0
  %v253 = vadd.f32 %v94, %v252
  %v254 = vpop.f32.mrf.mxu0
  %255 = vmatprep.mubr.f32.mxu0 %v85
  %256 = vmatmul.mubr.f32.gmra.mxu0 %v84
  %v257 = vpop.f32.mrf.mxu0
  %v258 = vadd.f32 %v94, %v257
  %v259 = vpop.f32.mrf.mxu0
  %260 = vmatprep.mubr.f32.mxu0 %v88
  %261 = vmatmul.mubr.f32.gmra.mxu0 %v87
  %v262 = vpop.f32.mrf.mxu0
  %v263 = vadd.f32 %v94, %v262
  %v264 = vpop.f32.mrf.mxu0
  %265 = vdwg.mxu0
  %266 = vmatprep.subr.mxu0 0.0
  %267 = vmatpush1.msra.mxu0 0.0
  %268 = vmatprep.subr.mxu0 0.0
  %269 = vmatpush1.msra.mxu0 0.0
  %270 = vmatprep.subr.mxu0 0.0
  %271 = vmatpush1.msra.mxu0 0.0
  %272 = vmatprep.subr.mxu0 0.0
  %273 = vmatpush1.msra.mxu0 0.0
  %274 = vmatprep.subr.mxu0 0.0
  %275 = vmatpush1.msra.mxu0 0.0
  %276 = vmatprep.subr.mxu0 0.0
  %277 = vmatpush1.msra.mxu0 0.0
  %278 = vmatprep.subr.mxu0 0.0
  %279 = vmatpush1.msra.mxu0 0.0
  %280 = vmatprep.subr.mxu0 0.0
  %281 = vmatpush1.msra.mxu0 0.0
  %282 = vmatprep.subr.mxu0 0.0
  %283 = vmatpush1.msra.mxu0 0.0
  %284 = vmatprep.subr.mxu0 0.0
  %285 = vmatpush1.msra.mxu0 0.0
  %286 = vmatprep.subr.mxu0 0.0
  %287 = vmatpush1.msra.mxu0 0.0
  %288 = vmatprep.subr.mxu0 0.0
  %289 = vmatpush1.msra.mxu0 0.0
  %290 = vmatprep.subr.mxu0 0.0
  %291 = vmatpush1.msra.mxu0 %v49
  %292 = vmatprep.subr.mxu0 0.0
  %293 = vmatpush1.msra.mxu0 %v48
  %294 = vmatprep.subr.mxu0 0.0
  %295 = vmatpush1.msra.mxu0 %v47
  %296 = vmatprep.subr.mxu0 0.0
  %297 = vmatpush1.msra.mxu0 %v46
  %298 = vmatprep.subr.mxu0 0.0
  %299 = vmatpush2.msra.mxu0 0.0
  %300 = vmatprep.subr.mxu0 0.0
  %301 = vmatpush2.msra.mxu0 0.0
  %302 = vmatprep.subr.mxu0 0.0
  %303 = vmatpush2.msra.mxu0 0.0
  %304 = vmatprep.subr.mxu0 0.0
  %305 = vmatpush2.msra.mxu0 0.0
  %306 = vmatprep.subr.mxu0 0.0
  %307 = vmatpush2.msra.mxu0 0.0
  %308 = vmatprep.subr.mxu0 0.0
  %309 = vmatpush2.msra.mxu0 0.0
  %310 = vmatprep.subr.mxu0 0.0
  %311 = vmatpush2.msra.mxu0 0.0
  %312 = vmatprep.subr.mxu0 0.0
  %313 = vmatpush2.msra.mxu0 0.0
  %314 = vmatprep.subr.mxu0 0.0
  %315 = vmatpush2.msra.mxu0 0.0
  %316 = vmatprep.subr.mxu0 0.0
  %317 = vmatpush2.msra.mxu0 0.0
  %318 = vmatprep.subr.mxu0 0.0
  %319 = vmatpush2.msra.mxu0 0.0
  %320 = vmatprep.subr.mxu0 0.0
  %321 = vmatpush2.msra.mxu0 0.0
  %322 = vmatprep.subr.mxu0 0.0
  %323 = vmatpush2.msra.mxu0 0.0
  %324 = vmatprep.subr.mxu0 0.0
  %325 = vmatpush2.msra.mxu0 0.0
  %326 = vmatprep.subr.mxu0 0.0
  %327 = vmatpush2.msra.mxu0 0.0
  %328 = vmatprep.subr.mxu0 0.0
  %329 = vmatpush2.msra.mxu0 0.0
  %330 = vmatprep.mubr.f32.mxu0 0.0
  %331 = vmatmul.mubr.f32.gmra.mxu0 %v98
  %v332 = vpop.f32.mrf.mxu0
  %v333 = vadd.f32 %v203, %v332
  %v334 = vpop.f32.mrf.mxu0
  %335 = vmatprep.mubr.f32.mxu0 0.0
  %336 = vmatmul.mubr.f32.gmra.mxu0 %v101
  %v337 = vpop.f32.mrf.mxu0
  %v338 = vadd.f32 %v208, %v337
  %v339 = vpop.f32.mrf.mxu0
  %340 = vmatprep.mubr.f32.mxu0 0.0
  %341 = vmatmul.mubr.f32.gmra.mxu0 %v104
  %v342 = vpop.f32.mrf.mxu0
  %v343 = vadd.f32 %v213, %v342
  %v344 = vpop.f32.mrf.mxu0
  %345 = vmatprep.mubr.f32.mxu0 0.0
  %346 = vmatmul.mubr.f32.gmra.mxu0 %v107
  %v347 = vpop.f32.mrf.mxu0
  %v348 = vadd.f32 %v218, %v347
  %v349 = vpop.f32.mrf.mxu0
  %350 = vmatprep.mubr.f32.mxu0 0.0
  %351 = vmatmul.mubr.f32.gmra.mxu0 %v110
  %v352 = vpop.f32.mrf.mxu0
  %v353 = vadd.f32 %v223, %v352
  %v354 = vpop.f32.mrf.mxu0
  %355 = vmatprep.mubr.f32.mxu0 0.0
  %356 = vmatmul.mubr.f32.gmra.mxu0 %v113
  %v357 = vpop.f32.mrf.mxu0
  %v358 = vadd.f32 %v228, %v357
  %v359 = vpop.f32.mrf.mxu0
  %360 = vmatprep.mubr.f32.mxu0 0.0
  %361 = vmatmul.mubr.f32.gmra.mxu0 %v116
  %v362 = vpop.f32.mrf.mxu0
  %v363 = vadd.f32 %v233, %v362
  %v364 = vpop.f32.mrf.mxu0
  %365 = vmatprep.mubr.f32.mxu0 0.0
  %366 = vmatmul.mubr.f32.gmra.mxu0 %v119
  %v367 = vpop.f32.mrf.mxu0
  %v368 = vadd.f32 %v238, %v367
  %v369 = vpop.f32.mrf.mxu0
  %370 = vmatprep.mubr.f32.mxu0 0.0
  %371 = vmatmul.mubr.f32.gmra.mxu0 %v122
  %v372 = vpop.f32.mrf.mxu0
  %v373 = vadd.f32 %v243, %v372
  %v374 = vpop.f32.mrf.mxu0
  %375 = vmatprep.mubr.f32.mxu0 0.0
  %376 = vmatmul.mubr.f32.gmra.mxu0 %v125
  %v377 = vpop.f32.mrf.mxu0
  %v378 = vadd.f32 %v248, %v377
  %v379 = vpop.f32.mrf.mxu0
  %380 = vmatprep.mubr.f32.mxu0 0.0
  %381 = vmatmul.mubr.f32.gmra.mxu0 %v128
  %v382 = vpop.f32.mrf.mxu0
  %v383 = vadd.f32 %v253, %v382
  %v384 = vpop.f32.mrf.mxu0
  %385 = vmatprep.mubr.f32.mxu0 0.0
  %386 = vmatmul.mubr.f32.gmra.mxu0 %v131
  %v387 = vpop.f32.mrf.mxu0
  %v388 = vadd.f32 %v258, %v387
  %v389 = vpop.f32.mrf.mxu0
  %390 = vmatprep.mubr.f32.mxu0 0.0
  %391 = vmatmul.mubr.f32.gmra.mxu0 %v134
  %v392 = vpop.f32.mrf.mxu0
  %v393 = vadd.f32 %v263, %v392
  %v394 = vpop.f32.mrf.mxu0
  %395 = vdwg.mxu0
  %v396 = vmax.f32 %v333, 0.0
  %v397 = vmax.f32 %v338, 0.0
  %v398 = vmax.f32 %v343, 0.0
  %v399 = vmax.f32 %v348, 0.0
  %v400 = vmax.f32 %v353, 0.0
  %v401 = vmax.f32 %v358, 0.0
  %v402 = vmax.f32 %v363, 0.0
  %v403 = vmax.f32 %v368, 0.0
  %v404 = vmax.f32 %v373, 0.0
  %v405 = vmax.f32 %v378, 0.0
  %v406 = vmax.f32 %v383, 0.0
  %v407 = vmax.f32 %v388, 0.0
  %v408 = vmax.f32 %v393, 0.0
  %s409 = scalar_lea.vmem %s0, 312
  %v410 = vld [vmem:[%s409] sm:$0xff]
  %v411 = vld [vmem:[%s409 + $0x8] sm:$0xff]
  %v412 = vld [vmem:[%s409 + $0x10] sm:$0xff]
  %v413 = vld [vmem:[%s409 + $0x18] sm:$0xff]
  %v414 = vld [vmem:[%s409 + $0x20] sm:$0xff]
  %v415 = vld [vmem:[%s409 + $0x28] sm:$0xff]
  %v416 = vld [vmem:[%s409 + $0x30] sm:$0xff]
  %v417 = vld [vmem:[%s409 + $0x38] sm:$0xff]
  %v418 = vld [vmem:[%s409 + $0x40] sm:$0xff]
  %v419 = vld [vmem:[%s409 + $0x48] sm:$0xff]
  %v420 = vld [vmem:[%s409 + $0x50] sm:$0xff]
  %v421 = vld [vmem:[%s409 + $0x58] sm:$0xff]
  %v422 = vld [vmem:[%s409 + $0x60] sm:$0xff]
  %v423 = vld [vmem:[%s409 + $0x68] sm:$0xff]
  %v424 = vld [vmem:[%s409 + $0x70] sm:$0xff]
  %v425 = vld [vmem:[%s409 + $0x78] sm:$0xff]
  %v426 = vld [vmem:[%s409 + $0x80] sm:$0xff]
  %v427 = vld [vmem:[%s409 + $0x88] sm:$0xff]
  %v428 = vld [vmem:[%s409 + $0x90] sm:$0xff]
  %v429 = vld [vmem:[%s409 + $0x98] sm:$0xff]
  %v430 = vld [vmem:[%s409 + $0xa0] sm:$0xff]
  %v431 = vld [vmem:[%s409 + $0xa8] sm:$0xff]
  %v432 = vld [vmem:[%s409 + $0xb0] sm:$0xff]
  %v433 = vld [vmem:[%s409 + $0xb8] sm:$0xff]
  %v434 = vld [vmem:[%s409 + $0xc0] sm:$0xff]
  %v435 = vld [vmem:[%s409 + $0xc8] sm:$0xff]
  %v436 = vld [vmem:[%s409 + $0xd0] sm:$0xff]
  %v437 = vld [vmem:[%s409 + $0xd8] sm:$0xff]
  %v438 = vld [vmem:[%s409 + $0xe0] sm:$0xff]
  %v439 = vld [vmem:[%s409 + $0xe8] sm:$0xff]
  %v440 = vld [vmem:[%s409 + $0xf0] sm:$0xff]
  %v441 = vld [vmem:[%s409 + $0xf8] sm:$0xff]
  %v442 = vld [vmem:[%s409 + $0x100] sm:$0xff]
  %v443 = vld [vmem:[%s409 + $0x108] sm:$0xff]
  %v444 = vld [vmem:[%s409 + $0x110] sm:$0xff]
  %v445 = vld [vmem:[%s409 + $0x118] sm:$0xff]
  %v446 = vld [vmem:[%s409 + $0x120] sm:$0x3]
  %v447 = vld [vmem:[%s409 + $0x128] sm:$0x3]
  %v448 = vld [vmem:[%s409 + $0x130] sm:$0x3]
  %v450 = vsel %vm96, %v412, 0
  %v453 = vsel %vm96, %v415, 0
  %v456 = vsel %vm96, %v418, 0
  %v459 = vsel %vm96, %v421, 0
  %v462 = vsel %vm96, %v424, 0
  %v465 = vsel %vm96, %v427, 0
  %v468 = vsel %vm96, %v430, 0
  %v471 = vsel %vm96, %v433, 0
  %v474 = vsel %vm96, %v436, 0
  %v477 = vsel %vm96, %v439, 0
  %v480 = vsel %vm96, %v442, 0
  %v483 = vsel %vm96, %v445, 0
  %v486 = vsel %vm96, %v448, 0
  %488 = vmatprep.subr.mxu0 0.0
  %489 = vmatpush1.msra.mxu0 %v29
  %490 = vmatprep.subr.mxu0 0.0
  %491 = vmatpush1.msra.mxu0 %v28
  %492 = vmatprep.subr.mxu0 0.0
  %493 = vmatpush1.msra.mxu0 %v27
  %494 = vmatprep.subr.mxu0 0.0
  %495 = vmatpush1.msra.mxu0 %v26
  %496 = vmatprep.subr.mxu0 0.0
  %497 = vmatpush1.msra.mxu0 %v25
  %498 = vmatprep.subr.mxu0 0.0
  %499 = vmatpush1.msra.mxu0 %v24
  %500 = vmatprep.subr.mxu0 0.0
  %501 = vmatpush1.msra.mxu0 %v23
  %502 = vmatprep.subr.mxu0 0.0
  %503 = vmatpush1.msra.mxu0 %v22
  %504 = vmatprep.subr.mxu0 0.0
  %505 = vmatpush1.msra.mxu0 %v21
  %506 = vmatprep.subr.mxu0 0.0
  %507 = vmatpush1.msra.mxu0 %v20
  %508 = vmatprep.subr.mxu0 0.0
  %509 = vmatpush1.msra.mxu0 %v19
  %510 = vmatprep.subr.mxu0 0.0
  %511 = vmatpush1.msra.mxu0 %v18
  %512 = vmatprep.subr.mxu0 0.0
  %513 = vmatpush1.msra.mxu0 %v17
  %514 = vmatprep.subr.mxu0 0.0
  %515 = vmatpush1.msra.mxu0 %v16
  %516 = vmatprep.subr.mxu0 0.0
  %517 = vmatpush1.msra.mxu0 %v15
  %518 = vmatprep.subr.mxu0 0.0
  %519 = vmatpush1.msra.mxu0 %v14
  %520 = vmatprep.subr.mxu0 0.0
  %521 = vmatpush2.msra.mxu0 %v45
  %522 = vmatprep.subr.mxu0 0.0
  %523 = vmatpush2.msra.mxu0 %v44
  %524 = vmatprep.subr.mxu0 0.0
  %525 = vmatpush2.msra.mxu0 %v43
  %526 = vmatprep.subr.mxu0 0.0
  %527 = vmatpush2.msra.mxu0 %v42
  %528 = vmatprep.subr.mxu0 0.0
  %529 = vmatpush2.msra.mxu0 %v41
  %530 = vmatprep.subr.mxu0 0.0
  %531 = vmatpush2.msra.mxu0 %v40
  %532 = vmatprep.subr.mxu0 0.0
  %533 = vmatpush2.msra.mxu0 %v39
  %534 = vmatprep.subr.mxu0 0.0
  %535 = vmatpush2.msra.mxu0 %v38
  %536 = vmatprep.subr.mxu0 0.0
  %537 = vmatpush2.msra.mxu0 %v37
  %538 = vmatprep.subr.mxu0 0.0
  %539 = vmatpush2.msra.mxu0 %v36
  %540 = vmatprep.subr.mxu0 0.0
  %541 = vmatpush2.msra.mxu0 %v35
  %542 = vmatprep.subr.mxu0 0.0
  %543 = vmatpush2.msra.mxu0 %v34
  %544 = vmatprep.subr.mxu0 0.0
  %545 = vmatpush2.msra.mxu0 %v33
  %546 = vmatprep.subr.mxu0 0.0
  %547 = vmatpush2.msra.mxu0 %v32
  %548 = vmatprep.subr.mxu0 0.0
  %549 = vmatpush2.msra.mxu0 %v31
  %550 = vmatprep.subr.mxu0 0.0
  %551 = vmatpush2.msra.mxu0 %v30
  %552 = vmatprep.mubr.f32.mxu0 %v411
  %553 = vmatmul.mubr.f32.gmra.mxu0 %v410
  %v554 = vpop.f32.mrf.mxu0
  %v555 = vadd.f32 %v94, %v554
  %v556 = vpop.f32.mrf.mxu0
  %557 = vmatprep.mubr.f32.mxu0 %v414
  %558 = vmatmul.mubr.f32.gmra.mxu0 %v413
  %v559 = vpop.f32.mrf.mxu0
  %v560 = vadd.f32 %v94, %v559
  %v561 = vpop.f32.mrf.mxu0
  %562 = vmatprep.mubr.f32.mxu0 %v417
  %563 = vmatmul.mubr.f32.gmra.mxu0 %v416
  %v564 = vpop.f32.mrf.mxu0
  %v565 = vadd.f32 %v94, %v564
  %v566 = vpop.f32.mrf.mxu0
  %567 = vmatprep.mubr.f32.mxu0 %v420
  %568 = vmatmul.mubr.f32.gmra.mxu0 %v419
  %v569 = vpop.f32.mrf.mxu0
  %v570 = vadd.f32 %v94, %v569
  %v571 = vpop.f32.mrf.mxu0
  %572 = vmatprep.mubr.f32.mxu0 %v423
  %573 = vmatmul.mubr.f32.gmra.mxu0 %v422
  %v574 = vpop.f32.mrf.mxu0
  %v575 = vadd.f32 %v94, %v574
  %v576 = vpop.f32.mrf.mxu0
  %577 = vmatprep.mubr.f32.mxu0 %v426
  %578 = vmatmul.mubr.f32.gmra.mxu0 %v425
  %v579 = vpop.f32.mrf.mxu0
  %v580 = vadd.f32 %v94, %v579
  %v581 = vpop.f32.mrf.mxu0
  %582 = vmatprep.mubr.f32.mxu0 %v429
  %583 = vmatmul.mubr.f32.gmra.mxu0 %v428
  %v584 = vpop.f32.mrf.mxu0
  %v585 = vadd.f32 %v94, %v584
  %v586 = vpop.f32.mrf.mxu0
  %587 = vmatprep.mubr.f32.mxu0 %v432
  %588 = vmatmul.mubr.f32.gmra.mxu0 %v431
  %v589 = vpop.f32.mrf.mxu0
  %v590 = vadd.f32 %v94, %v589
  %v591 = vpop.f32.mrf.mxu0
  %592 = vmatprep.mubr.f32.mxu0 %v435
  %593 = vmatmul.mubr.f32.gmra.mxu0 %v434
  %v594 = vpop.f32.mrf.mxu0
  %v595 = vadd.f32 %v94, %v594
  %v596 = vpop.f32.mrf.mxu0
  %597 = vmatprep.mubr.f32.mxu0 %v438
  %598 = vmatmul.mubr.f32.gmra.mxu0 %v437
  %v599 = vpop.f32.mrf.mxu0
  %v600 = vadd.f32 %v94, %v599
  %v601 = vpop.f32.mrf.mxu0
  %602 = vmatprep.mubr.f32.mxu0 %v441
  %603 = vmatmul.mubr.f32.gmra.mxu0 %v440
  %v604 = vpop.f32.mrf.mxu0
  %v605 = vadd.f32 %v94, %v604
  %v606 = vpop.f32.mrf.mxu0
  %607 = vmatprep.mubr.f32.mxu0 %v444
  %608 = vmatmul.mubr.f32.gmra.mxu0 %v443
  %v609 = vpop.f32.mrf.mxu0
  %v610 = vadd.f32 %v94, %v609
  %v611 = vpop.f32.mrf.mxu0
  %612 = vmatprep.mubr.f32.mxu0 %v447
  %613 = vmatmul.mubr.f32.gmra.mxu0 %v446
  %v614 = vpop.f32.mrf.mxu0
  %v615 = vadd.f32 %v94, %v614
  %v616 = vpop.f32.mrf.mxu0
  %617 = vdwg.mxu0
  %618 = vmatprep.subr.mxu0 0.0
  %619 = vmatpush1.msra.mxu0 0.0
  %620 = vmatprep.subr.mxu0 0.0
  %621 = vmatpush1.msra.mxu0 0.0
  %622 = vmatprep.subr.mxu0 0.0
  %623 = vmatpush1.msra.mxu0 0.0
  %624 = vmatprep.subr.mxu0 0.0
  %625 = vmatpush1.msra.mxu0 0.0
  %626 = vmatprep.subr.mxu0 0.0
  %627 = vmatpush1.msra.mxu0 0.0
  %628 = vmatprep.subr.mxu0 0.0
  %629 = vmatpush1.msra.mxu0 0.0
  %630 = vmatprep.subr.mxu0 0.0
  %631 = vmatpush1.msra.mxu0 0.0
  %632 = vmatprep.subr.mxu0 0.0
  %633 = vmatpush1.msra.mxu0 0.0
  %634 = vmatprep.subr.mxu0 0.0
  %635 = vmatpush1.msra.mxu0 0.0
  %636 = vmatprep.subr.mxu0 0.0
  %637 = vmatpush1.msra.mxu0 0.0
  %638 = vmatprep.subr.mxu0 0.0
  %639 = vmatpush1.msra.mxu0 0.0
  %640 = vmatprep.subr.mxu0 0.0
  %641 = vmatpush1.msra.mxu0 0.0
  %642 = vmatprep.subr.mxu0 0.0
  %643 = vmatpush1.msra.mxu0 %v49
  %644 = vmatprep.subr.mxu0 0.0
  %645 = vmatpush1.msra.mxu0 %v48
  %646 = vmatprep.subr.mxu0 0.0
  %647 = vmatpush1.msra.mxu0 %v47
  %648 = vmatprep.subr.mxu0 0.0
  %649 = vmatpush1.msra.mxu0 %v46
  %650 = vmatprep.subr.mxu0 0.0
  %651 = vmatpush2.msra.mxu0 0.0
  %652 = vmatprep.subr.mxu0 0.0
  %653 = vmatpush2.msra.mxu0 0.0
  %654 = vmatprep.subr.mxu0 0.0
  %655 = vmatpush2.msra.mxu0 0.0
  %656 = vmatprep.subr.mxu0 0.0
  %657 = vmatpush2.msra.mxu0 0.0
  %658 = vmatprep.subr.mxu0 0.0
  %659 = vmatpush2.msra.mxu0 0.0
  %660 = vmatprep.subr.mxu0 0.0
  %661 = vmatpush2.msra.mxu0 0.0
  %662 = vmatprep.subr.mxu0 0.0
  %663 = vmatpush2.msra.mxu0 0.0
  %664 = vmatprep.subr.mxu0 0.0
  %665 = vmatpush2.msra.mxu0 0.0
  %666 = vmatprep.subr.mxu0 0.0
  %667 = vmatpush2.msra.mxu0 0.0
  %668 = vmatprep.subr.mxu0 0.0
  %669 = vmatpush2.msra.mxu0 0.0
  %670 = vmatprep.subr.mxu0 0.0
  %671 = vmatpush2.msra.mxu0 0.0
  %672 = vmatprep.subr.mxu0 0.0
  %673 = vmatpush2.msra.mxu0 0.0
  %674 = vmatprep.subr.mxu0 0.0
  %675 = vmatpush2.msra.mxu0 0.0
  %676 = vmatprep.subr.mxu0 0.0
  %677 = vmatpush2.msra.mxu0 0.0
  %678 = vmatprep.subr.mxu0 0.0
  %679 = vmatpush2.msra.mxu0 0.0
  %680 = vmatprep.subr.mxu0 0.0
  %681 = vmatpush2.msra.mxu0 0.0
  %682 = vmatprep.mubr.f32.mxu0 0.0
  %683 = vmatmul.mubr.f32.gmra.mxu0 %v450
  %v684 = vpop.f32.mrf.mxu0
  %v685 = vadd.f32 %v555, %v684
  %v686 = vpop.f32.mrf.mxu0
  %687 = vmatprep.mubr.f32.mxu0 0.0
  %688 = vmatmul.mubr.f32.gmra.mxu0 %v453
  %v689 = vpop.f32.mrf.mxu0
  %v690 = vadd.f32 %v560, %v689
  %v691 = vpop.f32.mrf.mxu0
  %692 = vmatprep.mubr.f32.mxu0 0.0
  %693 = vmatmul.mubr.f32.gmra.mxu0 %v456
  %v694 = vpop.f32.mrf.mxu0
  %v695 = vadd.f32 %v565, %v694
  %v696 = vpop.f32.mrf.mxu0
  %697 = vmatprep.mubr.f32.mxu0 0.0
  %698 = vmatmul.mubr.f32.gmra.mxu0 %v459
  %v699 = vpop.f32.mrf.mxu0
  %v700 = vadd.f32 %v570, %v699
  %v701 = vpop.f32.mrf.mxu0
  %702 = vmatprep.mubr.f32.mxu0 0.0
  %703 = vmatmul.mubr.f32.gmra.mxu0 %v462
  %v704 = vpop.f32.mrf.mxu0
  %v705 = vadd.f32 %v575, %v704
  %v706 = vpop.f32.mrf.mxu0
  %707 = vmatprep.mubr.f32.mxu0 0.0
  %708 = vmatmul.mubr.f32.gmra.mxu0 %v465
  %v709 = vpop.f32.mrf.mxu0
  %v710 = vadd.f32 %v580, %v709
  %v711 = vpop.f32.mrf.mxu0
  %712 = vmatprep.mubr.f32.mxu0 0.0
  %713 = vmatmul.mubr.f32.gmra.mxu0 %v468
  %v714 = vpop.f32.mrf.mxu0
  %v715 = vadd.f32 %v585, %v714
  %v716 = vpop.f32.mrf.mxu0
  %717 = vmatprep.mubr.f32.mxu0 0.0
  %718 = vmatmul.mubr.f32.gmra.mxu0 %v471
  %v719 = vpop.f32.mrf.mxu0
  %v720 = vadd.f32 %v590, %v719
  %v721 = vpop.f32.mrf.mxu0
  %722 = vmatprep.mubr.f32.mxu0 0.0
  %723 = vmatmul.mubr.f32.gmra.mxu0 %v474
  %v724 = vpop.f32.mrf.mxu0
  %v725 = vadd.f32 %v595, %v724
  %v726 = vpop.f32.mrf.mxu0
  %727 = vmatprep.mubr.f32.mxu0 0.0
  %728 = vmatmul.mubr.f32.gmra.mxu0 %v477
  %v729 = vpop.f32.mrf.mxu0
  %v730 = vadd.f32 %v600, %v729
  %v731 = vpop.f32.mrf.mxu0
  %732 = vmatprep.mubr.f32.mxu0 0.0
  %733 = vmatmul.mubr.f32.gmra.mxu0 %v480
  %v734 = vpop.f32.mrf.mxu0
  %v735 = vadd.f32 %v605, %v734
  %v736 = vpop.f32.mrf.mxu0
  %737 = vmatprep.mubr.f32.mxu0 0.0
  %738 = vmatmul.mubr.f32.gmra.mxu0 %v483
  %v739 = vpop.f32.mrf.mxu0
  %v740 = vadd.f32 %v610, %v739
  %v741 = vpop.f32.mrf.mxu0
  %742 = vmatprep.mubr.f32.mxu0 0.0
  %743 = vmatmul.mubr.f32.gmra.mxu0 %v486
  %v744 = vpop.f32.mrf.mxu0
  %v745 = vadd.f32 %v615, %v744
  %v746 = vpop.f32.mrf.mxu0
  %747 = vdwg.mxu0
  %v748 = vmax.f32 %v685, 0.0
  %v749 = vmax.f32 %v690, 0.0
  %v750 = vmax.f32 %v695, 0.0
  %v751 = vmax.f32 %v700, 0.0
  %v752 = vmax.f32 %v705, 0.0
  %v753 = vmax.f32 %v710, 0.0
  %v754 = vmax.f32 %v715, 0.0
  %v755 = vmax.f32 %v720, 0.0
  %v756 = vmax.f32 %v725, 0.0
  %v757 = vmax.f32 %v730, 0.0
  %v758 = vmax.f32 %v735, 0.0
  %v759 = vmax.f32 %v740, 0.0
  %v760 = vmax.f32 %v745, 0.0
  %v761 = vmax.f32 %v396, %v748
  %v762 = vmax.f32 %v397, %v749
  %v763 = vmax.f32 %v398, %v750
  %v764 = vmax.f32 %v399, %v751
  %v765 = vmax.f32 %v400, %v752
  %v766 = vmax.f32 %v401, %v753
  %v767 = vmax.f32 %v402, %v754
  %v768 = vmax.f32 %v403, %v755
  %v769 = vmax.f32 %v404, %v756
  %v770 = vmax.f32 %v405, %v757
  %v771 = vmax.f32 %v406, %v758
  %v772 = vmax.f32 %v407, %v759
  %v773 = vmax.f32 %v408, %v760
  %s774 = scalar_lea.vmem %s0, 624
  %v775 = vld [vmem:[%s774] sm:$0xff]
  %v776 = vld [vmem:[%s774 + $0x8] sm:$0xff]
  %v777 = vld [vmem:[%s774 + $0x10] sm:$0xff]
  %v778 = vld [vmem:[%s774 + $0x18] sm:$0xff]
  %v779 = vld [vmem:[%s774 + $0x20] sm:$0xff]
  %v780 = vld [vmem:[%s774 + $0x28] sm:$0xff]
  %v781 = vld [vmem:[%s774 + $0x30] sm:$0xff]
  %v782 = vld [vmem:[%s774 + $0x38] sm:$0xff]
  %v783 = vld [vmem:[%s774 + $0x40] sm:$0xff]
  %v784 = vld [vmem:[%s774 + $0x48] sm:$0xff]
  %v785 = vld [vmem:[%s774 + $0x50] sm:$0xff]
  %v786 = vld [vmem:[%s774 + $0x58] sm:$0xff]
  %v787 = vld [vmem:[%s774 + $0x60] sm:$0xff]
  %v788 = vld [vmem:[%s774 + $0x68] sm:$0xff]
  %v789 = vld [vmem:[%s774 + $0x70] sm:$0xff]
  %v790 = vld [vmem:[%s774 + $0x78] sm:$0xff]
  %v791 = vld [vmem:[%s774 + $0x80] sm:$0xff]
  %v792 = vld [vmem:[%s774 + $0x88] sm:$0xff]
  %v793 = vld [vmem:[%s774 + $0x90] sm:$0xff]
  %v794 = vld [vmem:[%s774 + $0x98] sm:$0xff]
  %v795 = vld [vmem:[%s774 + $0xa0] sm:$0xff]
  %v796 = vld [vmem:[%s774 + $0xa8] sm:$0xff]
  %v797 = vld [vmem:[%s774 + $0xb0] sm:$0xff]
  %v798 = vld [vmem:[%s774 + $0xb8] sm:$0xff]
  %v799 = vld [vmem:[%s774 + $0xc0] sm:$0xff]
  %v800 = vld [vmem:[%s774 + $0xc8] sm:$0xff]
  %v801 = vld [vmem:[%s774 + $0xd0] sm:$0xff]
  %v802 = vld [vmem:[%s774 + $0xd8] sm:$0xff]
  %v803 = vld [vmem:[%s774 + $0xe0] sm:$0xff]
  %v804 = vld [vmem:[%s774 + $0xe8] sm:$0xff]
  %v805 = vld [vmem:[%s774 + $0xf0] sm:$0xff]
  %v806 = vld [vmem:[%s774 + $0xf8] sm:$0xff]
  %v807 = vld [vmem:[%s774 + $0x100] sm:$0xff]
  %v808 = vld [vmem:[%s774 + $0x108] sm:$0xff]
  %v809 = vld [vmem:[%s774 + $0x110] sm:$0xff]
  %v810 = vld [vmem:[%s774 + $0x118] sm:$0xff]
  %v811 = vld [vmem:[%s774 + $0x120] sm:$0x3]
  %v812 = vld [vmem:[%s774 + $0x128] sm:$0x3]
  %v813 = vld [vmem:[%s774 + $0x130] sm:$0x3]
  %v815 = vsel %vm96, %v777, 0
  %v818 = vsel %vm96, %v780, 0
  %v821 = vsel %vm96, %v783, 0
  %v824 = vsel %vm96, %v786, 0
  %v827 = vsel %vm96, %v789, 0
  %v830 = vsel %vm96, %v792, 0
  %v833 = vsel %vm96, %v795, 0
  %v836 = vsel %vm96, %v798, 0
  %v839 = vsel %vm96, %v801, 0
  %v842 = vsel %vm96, %v804, 0
  %v845 = vsel %vm96, %v807, 0
  %v848 = vsel %vm96, %v810, 0
  %v851 = vsel %vm96, %v813, 0
  %853 = vmatprep.subr.mxu0 0.0
  %854 = vmatpush1.msra.mxu0 %v29
  %855 = vmatprep.subr.mxu0 0.0
  %856 = vmatpush1.msra.mxu0 %v28
  %857 = vmatprep.subr.mxu0 0.0
  %858 = vmatpush1.msra.mxu0 %v27
  %859 = vmatprep.subr.mxu0 0.0
  %860 = vmatpush1.msra.mxu0 %v26
  %861 = vmatprep.subr.mxu0 0.0
  %862 = vmatpush1.msra.mxu0 %v25
  %863 = vmatprep.subr.mxu0 0.0
  %864 = vmatpush1.msra.mxu0 %v24
  %865 = vmatprep.subr.mxu0 0.0
  %866 = vmatpush1.msra.mxu0 %v23
  %867 = vmatprep.subr.mxu0 0.0
  %868 = vmatpush1.msra.mxu0 %v22
  %869 = vmatprep.subr.mxu0 0.0
  %870 = vmatpush1.msra.mxu0 %v21
  %871 = vmatprep.subr.mxu0 0.0
  %872 = vmatpush1.msra.mxu0 %v20
  %873 = vmatprep.subr.mxu0 0.0
  %874 = vmatpush1.msra.mxu0 %v19
  %875 = vmatprep.subr.mxu0 0.0
  %876 = vmatpush1.msra.mxu0 %v18
  %877 = vmatprep.subr.mxu0 0.0
  %878 = vmatpush1.msra.mxu0 %v17
  %879 = vmatprep.subr.mxu0 0.0
  %880 = vmatpush1.msra.mxu0 %v16
  %881 = vmatprep.subr.mxu0 0.0
  %882 = vmatpush1.msra.mxu0 %v15
  %883 = vmatprep.subr.mxu0 0.0
  %884 = vmatpush1.msra.mxu0 %v14
  %885 = vmatprep.subr.mxu0 0.0
  %886 = vmatpush2.msra.mxu0 %v45
  %887 = vmatprep.subr.mxu0 0.0
  %888 = vmatpush2.msra.mxu0 %v44
  %889 = vmatprep.subr.mxu0 0.0
  %890 = vmatpush2.msra.mxu0 %v43
  %891 = vmatprep.subr.mxu0 0.0
  %892 = vmatpush2.msra.mxu0 %v42
  %893 = vmatprep.subr.mxu0 0.0
  %894 = vmatpush2.msra.mxu0 %v41
  %895 = vmatprep.subr.mxu0 0.0
  %896 = vmatpush2.msra.mxu0 %v40
  %897 = vmatprep.subr.mxu0 0.0
  %898 = vmatpush2.msra.mxu0 %v39
  %899 = vmatprep.subr.mxu0 0.0
  %900 = vmatpush2.msra.mxu0 %v38
  %901 = vmatprep.subr.mxu0 0.0
  %902 = vmatpush2.msra.mxu0 %v37
  %903 = vmatprep.subr.mxu0 0.0
  %904 = vmatpush2.msra.mxu0 %v36
  %905 = vmatprep.subr.mxu0 0.0
  %906 = vmatpush2.msra.mxu0 %v35
  %907 = vmatprep.subr.mxu0 0.0
  %908 = vmatpush2.msra.mxu0 %v34
  %909 = vmatprep.subr.mxu0 0.0
  %910 = vmatpush2.msra.mxu0 %v33
  %911 = vmatprep.subr.mxu0 0.0
  %912 = vmatpush2.msra.mxu0 %v32
  %913 = vmatprep.subr.mxu0 0.0
  %914 = vmatpush2.msra.mxu0 %v31
  %915 = vmatprep.subr.mxu0 0.0
  %916 = vmatpush2.msra.mxu0 %v30
  %917 = vmatprep.mubr.f32.mxu0 %v776
  %918 = vmatmul.mubr.f32.gmra.mxu0 %v775
  %v919 = vpop.f32.mrf.mxu0
  %v920 = vadd.f32 %v94, %v919
  %v921 = vpop.f32.mrf.mxu0
  %922 = vmatprep.mubr.f32.mxu0 %v779
  %923 = vmatmul.mubr.f32.gmra.mxu0 %v778
  %v924 = vpop.f32.mrf.mxu0
  %v925 = vadd.f32 %v94, %v924
  %v926 = vpop.f32.mrf.mxu0
  %927 = vmatprep.mubr.f32.mxu0 %v782
  %928 = vmatmul.mubr.f32.gmra.mxu0 %v781
  %v929 = vpop.f32.mrf.mxu0
  %v930 = vadd.f32 %v94, %v929
  %v931 = vpop.f32.mrf.mxu0
  %932 = vmatprep.mubr.f32.mxu0 %v785
  %933 = vmatmul.mubr.f32.gmra.mxu0 %v784
  %v934 = vpop.f32.mrf.mxu0
  %v935 = vadd.f32 %v94, %v934
  %v936 = vpop.f32.mrf.mxu0
  %937 = vmatprep.mubr.f32.mxu0 %v788
  %938 = vmatmul.mubr.f32.gmra.mxu0 %v787
  %v939 = vpop.f32.mrf.mxu0
  %v940 = vadd.f32 %v94, %v939
  %v941 = vpop.f32.mrf.mxu0
  %942 = vmatprep.mubr.f32.mxu0 %v791
  %943 = vmatmul.mubr.f32.gmra.mxu0 %v790
  %v944 = vpop.f32.mrf.mxu0
  %v945 = vadd.f32 %v94, %v944
  %v946 = vpop.f32.mrf.mxu0
  %947 = vmatprep.mubr.f32.mxu0 %v794
  %948 = vmatmul.mubr.f32.gmra.mxu0 %v793
  %v949 = vpop.f32.mrf.mxu0
  %v950 = vadd.f32 %v94, %v949
  %v951 = vpop.f32.mrf.mxu0
  %952 = vmatprep.mubr.f32.mxu0 %v797
  %953 = vmatmul.mubr.f32.gmra.mxu0 %v796
  %v954 = vpop.f32.mrf.mxu0
  %v955 = vadd.f32 %v94, %v954
  %v956 = vpop.f32.mrf.mxu0
  %957 = vmatprep.mubr.f32.mxu0 %v800
  %958 = vmatmul.mubr.f32.gmra.mxu0 %v799
  %v959 = vpop.f32.mrf.mxu0
  %v960 = vadd.f32 %v94, %v959
  %v961 = vpop.f32.mrf.mxu0
  %962 = vmatprep.mubr.f32.mxu0 %v803
  %963 = vmatmul.mubr.f32.gmra.mxu0 %v802
  %v964 = vpop.f32.mrf.mxu0
  %v965 = vadd.f32 %v94, %v964
  %v966 = vpop.f32.mrf.mxu0
  %967 = vmatprep.mubr.f32.mxu0 %v806
  %968 = vmatmul.mubr.f32.gmra.mxu0 %v805
  %v969 = vpop.f32.mrf.mxu0
  %v970 = vadd.f32 %v94, %v969
  %v971 = vpop.f32.mrf.mxu0
  %972 = vmatprep.mubr.f32.mxu0 %v809
  %973 = vmatmul.mubr.f32.gmra.mxu0 %v808
  %v974 = vpop.f32.mrf.mxu0
  %v975 = vadd.f32 %v94, %v974
  %v976 = vpop.f32.mrf.mxu0
  %977 = vmatprep.mubr.f32.mxu0 %v812
  %978 = vmatmul.mubr.f32.gmra.mxu0 %v811
  %v979 = vpop.f32.mrf.mxu0
  %v980 = vadd.f32 %v94, %v979
  %v981 = vpop.f32.mrf.mxu0
  %982 = vdwg.mxu0
  %983 = vmatprep.subr.mxu0 0.0
  %984 = vmatpush1.msra.mxu0 0.0
  %985 = vmatprep.subr.mxu0 0.0
  %986 = vmatpush1.msra.mxu0 0.0
  %987 = vmatprep.subr.mxu0 0.0
  %988 = vmatpush1.msra.mxu0 0.0
  %989 = vmatprep.subr.mxu0 0.0
  %990 = vmatpush1.msra.mxu0 0.0
  %991 = vmatprep.subr.mxu0 0.0
  %992 = vmatpush1.msra.mxu0 0.0
  %993 = vmatprep.subr.mxu0 0.0
  %994 = vmatpush1.msra.mxu0 0.0
  %995 = vmatprep.subr.mxu0 0.0
  %996 = vmatpush1.msra.mxu0 0.0
  %997 = vmatprep.subr.mxu0 0.0
  %998 = vmatpush1.msra.mxu0 0.0
  %999 = vmatprep.subr.mxu0 0.0
  %1000 = vmatpush1.msra.mxu0 0.0
  %1001 = vmatprep.subr.mxu0 0.0
  %1002 = vmatpush1.msra.mxu0 0.0
  %1003 = vmatprep.subr.mxu0 0.0
  %1004 = vmatpush1.msra.mxu0 0.0
  %1005 = vmatprep.subr.mxu0 0.0
  %1006 = vmatpush1.msra.mxu0 0.0
  %1007 = vmatprep.subr.mxu0 0.0
  %1008 = vmatpush1.msra.mxu0 %v49
  %1009 = vmatprep.subr.mxu0 0.0
  %1010 = vmatpush1.msra.mxu0 %v48
  %1011 = vmatprep.subr.mxu0 0.0
  %1012 = vmatpush1.msra.mxu0 %v47
  %1013 = vmatprep.subr.mxu0 0.0
  %1014 = vmatpush1.msra.mxu0 %v46
  %1015 = vmatprep.subr.mxu0 0.0
  %1016 = vmatpush2.msra.mxu0 0.0
  %1017 = vmatprep.subr.mxu0 0.0
  %1018 = vmatpush2.msra.mxu0 0.0
  %1019 = vmatprep.subr.mxu0 0.0
  %1020 = vmatpush2.msra.mxu0 0.0
  %1021 = vmatprep.subr.mxu0 0.0
  %1022 = vmatpush2.msra.mxu0 0.0
  %1023 = vmatprep.subr.mxu0 0.0
  %1024 = vmatpush2.msra.mxu0 0.0
  %1025 = vmatprep.subr.mxu0 0.0
  %1026 = vmatpush2.msra.mxu0 0.0
  %1027 = vmatprep.subr.mxu0 0.0
  %1028 = vmatpush2.msra.mxu0 0.0
  %1029 = vmatprep.subr.mxu0 0.0
  %1030 = vmatpush2.msra.mxu0 0.0
  %1031 = vmatprep.subr.mxu0 0.0
  %1032 = vmatpush2.msra.mxu0 0.0
  %1033 = vmatprep.subr.mxu0 0.0
  %1034 = vmatpush2.msra.mxu0 0.0
  %1035 = vmatprep.subr.mxu0 0.0
  %1036 = vmatpush2.msra.mxu0 0.0
  %1037 = vmatprep.subr.mxu0 0.0
  %1038 = vmatpush2.msra.mxu0 0.0
  %1039 = vmatprep.subr.mxu0 0.0
  %1040 = vmatpush2.msra.mxu0 0.0
  %1041 = vmatprep.subr.mxu0 0.0
  %1042 = vmatpush2.msra.mxu0 0.0
  %1043 = vmatprep.subr.mxu0 0.0
  %1044 = vmatpush2.msra.mxu0 0.0
  %1045 = vmatprep.subr.mxu0 0.0
  %1046 = vmatpush2.msra.mxu0 0.0
  %1047 = vmatprep.mubr.f32.mxu0 0.0
  %1048 = vmatmul.mubr.f32.gmra.mxu0 %v815
  %v1049 = vpop.f32.mrf.mxu0
  %v1050 = vadd.f32 %v920, %v1049
  %v1051 = vpop.f32.mrf.mxu0
  %1052 = vmatprep.mubr.f32.mxu0 0.0
  %1053 = vmatmul.mubr.f32.gmra.mxu0 %v818
  %v1054 = vpop.f32.mrf.mxu0
  %v1055 = vadd.f32 %v925, %v1054
  %v1056 = vpop.f32.mrf.mxu0
  %1057 = vmatprep.mubr.f32.mxu0 0.0
  %1058 = vmatmul.mubr.f32.gmra.mxu0 %v821
  %v1059 = vpop.f32.mrf.mxu0
  %v1060 = vadd.f32 %v930, %v1059
  %v1061 = vpop.f32.mrf.mxu0
  %1062 = vmatprep.mubr.f32.mxu0 0.0
  %1063 = vmatmul.mubr.f32.gmra.mxu0 %v824
  %v1064 = vpop.f32.mrf.mxu0
  %v1065 = vadd.f32 %v935, %v1064
  %v1066 = vpop.f32.mrf.mxu0
  %1067 = vmatprep.mubr.f32.mxu0 0.0
  %1068 = vmatmul.mubr.f32.gmra.mxu0 %v827
  %v1069 = vpop.f32.mrf.mxu0
  %v1070 = vadd.f32 %v940, %v1069
  %v1071 = vpop.f32.mrf.mxu0
  %1072 = vmatprep.mubr.f32.mxu0 0.0
  %1073 = vmatmul.mubr.f32.gmra.mxu0 %v830
  %v1074 = vpop.f32.mrf.mxu0
  %v1075 = vadd.f32 %v945, %v1074
  %v1076 = vpop.f32.mrf.mxu0
  %1077 = vmatprep.mubr.f32.mxu0 0.0
  %1078 = vmatmul.mubr.f32.gmra.mxu0 %v833
  %v1079 = vpop.f32.mrf.mxu0
  %v1080 = vadd.f32 %v950, %v1079
  %v1081 = vpop.f32.mrf.mxu0
  %1082 = vmatprep.mubr.f32.mxu0 0.0
  %1083 = vmatmul.mubr.f32.gmra.mxu0 %v836
  %v1084 = vpop.f32.mrf.mxu0
  %v1085 = vadd.f32 %v955, %v1084
  %v1086 = vpop.f32.mrf.mxu0
  %1087 = vmatprep.mubr.f32.mxu0 0.0
  %1088 = vmatmul.mubr.f32.gmra.mxu0 %v839
  %v1089 = vpop.f32.mrf.mxu0
  %v1090 = vadd.f32 %v960, %v1089
  %v1091 = vpop.f32.mrf.mxu0
  %1092 = vmatprep.mubr.f32.mxu0 0.0
  %1093 = vmatmul.mubr.f32.gmra.mxu0 %v842
  %v1094 = vpop.f32.mrf.mxu0
  %v1095 = vadd.f32 %v965, %v1094
  %v1096 = vpop.f32.mrf.mxu0
  %1097 = vmatprep.mubr.f32.mxu0 0.0
  %1098 = vmatmul.mubr.f32.gmra.mxu0 %v845
  %v1099 = vpop.f32.mrf.mxu0
  %v1100 = vadd.f32 %v970, %v1099
  %v1101 = vpop.f32.mrf.mxu0
  %1102 = vmatprep.mubr.f32.mxu0 0.0
  %1103 = vmatmul.mubr.f32.gmra.mxu0 %v848
  %v1104 = vpop.f32.mrf.mxu0
  %v1105 = vadd.f32 %v975, %v1104
  %v1106 = vpop.f32.mrf.mxu0
  %1107 = vmatprep.mubr.f32.mxu0 0.0
  %1108 = vmatmul.mubr.f32.gmra.mxu0 %v851
  %v1109 = vpop.f32.mrf.mxu0
  %v1110 = vadd.f32 %v980, %v1109
  %v1111 = vpop.f32.mrf.mxu0
  %1112 = vdwg.mxu0
  %v1113 = vmax.f32 %v1050, 0.0
  %v1114 = vmax.f32 %v1055, 0.0
  %v1115 = vmax.f32 %v1060, 0.0
  %v1116 = vmax.f32 %v1065, 0.0
  %v1117 = vmax.f32 %v1070, 0.0
  %v1118 = vmax.f32 %v1075, 0.0
  %v1119 = vmax.f32 %v1080, 0.0
  %v1120 = vmax.f32 %v1085, 0.0
  %v1121 = vmax.f32 %v1090, 0.0
  %v1122 = vmax.f32 %v1095, 0.0
  %v1123 = vmax.f32 %v1100, 0.0
  %v1124 = vmax.f32 %v1105, 0.0
  %v1125 = vmax.f32 %v1110, 0.0
  %v1126 = vmax.f32 %v761, %v1113
  %v1127 = vmax.f32 %v762, %v1114
  %v1128 = vmax.f32 %v763, %v1115
  %v1129 = vmax.f32 %v764, %v1116
  %v1130 = vmax.f32 %v765, %v1117
  %v1131 = vmax.f32 %v766, %v1118
  %v1132 = vmax.f32 %v767, %v1119
  %v1133 = vmax.f32 %v768, %v1120
  %v1134 = vmax.f32 %v769, %v1121
  %v1135 = vmax.f32 %v770, %v1122
  %v1136 = vmax.f32 %v771, %v1123
  %v1137 = vmax.f32 %v772, %v1124
  %v1138 = vmax.f32 %v773, %v1125
  %s1139 = scalar_lea.vmem %s0, 936
  %v1140 = vld [vmem:[%s1139] sm:$0xff]
  %v1141 = vld [vmem:[%s1139 + $0x8] sm:$0xff]
  %v1142 = vld [vmem:[%s1139 + $0x10] sm:$0xff]
  %v1143 = vld [vmem:[%s1139 + $0x18] sm:$0xff]
  %v1144 = vld [vmem:[%s1139 + $0x20] sm:$0xff]
  %v1145 = vld [vmem:[%s1139 + $0x28] sm:$0xff]
  %v1146 = vld [vmem:[%s1139 + $0x30] sm:$0xff]
  %v1147 = vld [vmem:[%s1139 + $0x38] sm:$0xff]
  %v1148 = vld [vmem:[%s1139 + $0x40] sm:$0xff]
  %v1149 = vld [vmem:[%s1139 + $0x48] sm:$0xff]
  %v1150 = vld [vmem:[%s1139 + $0x50] sm:$0xff]
  %v1151 = vld [vmem:[%s1139 + $0x58] sm:$0xff]
  %v1152 = vld [vmem:[%s1139 + $0x60] sm:$0xff]
  %v1153 = vld [vmem:[%s1139 + $0x68] sm:$0xff]
  %v1154 = vld [vmem:[%s1139 + $0x70] sm:$0xff]
  %v1155 = vld [vmem:[%s1139 + $0x78] sm:$0xff]
  %v1156 = vld [vmem:[%s1139 + $0x80] sm:$0xff]
  %v1157 = vld [vmem:[%s1139 + $0x88] sm:$0xff]
  %v1158 = vld [vmem:[%s1139 + $0x90] sm:$0xff]
  %v1159 = vld [vmem:[%s1139 + $0x98] sm:$0xff]
  %v1160 = vld [vmem:[%s1139 + $0xa0] sm:$0xff]
  %v1161 = vld [vmem:[%s1139 + $0xa8] sm:$0xff]
  %v1162 = vld [vmem:[%s1139 + $0xb0] sm:$0xff]
  %v1163 = vld [vmem:[%s1139 + $0xb8] sm:$0xff]
  %v1164 = vld [vmem:[%s1139 + $0xc0] sm:$0xff]
  %v1165 = vld [vmem:[%s1139 + $0xc8] sm:$0xff]
  %v1166 = vld [vmem:[%s1139 + $0xd0] sm:$0xff]
  %v1167 = vld [vmem:[%s1139 + $0xd8] sm:$0xff]
  %v1168 = vld [vmem:[%s1139 + $0xe0] sm:$0xff]
  %v1169 = vld [vmem:[%s1139 + $0xe8] sm:$0xff]
  %v1170 = vld [vmem:[%s1139 + $0xf0] sm:$0xff]
  %v1171 = vld [vmem:[%s1139 + $0xf8] sm:$0xff]
  %v1172 = vld [vmem:[%s1139 + $0x100] sm:$0xff]
  %v1173 = vld [vmem:[%s1139 + $0x108] sm:$0xff]
  %v1174 = vld [vmem:[%s1139 + $0x110] sm:$0xff]
  %v1175 = vld [vmem:[%s1139 + $0x118] sm:$0xff]
  %v1176 = vld [vmem:[%s1139 + $0x120] sm:$0x3]
  %v1177 = vld [vmem:[%s1139 + $0x128] sm:$0x3]
  %v1178 = vld [vmem:[%s1139 + $0x130] sm:$0x3]
  %v1180 = vsel %vm96, %v1142, 0
  %v1183 = vsel %vm96, %v1145, 0
  %v1186 = vsel %vm96, %v1148, 0
  %v1189 = vsel %vm96, %v1151, 0
  %v1192 = vsel %vm96, %v1154, 0
  %v1195 = vsel %vm96, %v1157, 0
  %v1198 = vsel %vm96, %v1160, 0
  %v1201 = vsel %vm96, %v1163, 0
  %v1204 = vsel %vm96, %v1166, 0
  %v1207 = vsel %vm96, %v1169, 0
  %v1210 = vsel %vm96, %v1172, 0
  %v1213 = vsel %vm96, %v1175, 0
  %v1216 = vsel %vm96, %v1178, 0
  %1218 = vmatprep.subr.mxu0 0.0
  %1219 = vmatpush1.msra.mxu0 %v29
  %1220 = vmatprep.subr.mxu0 0.0
  %1221 = vmatpush1.msra.mxu0 %v28
  %1222 = vmatprep.subr.mxu0 0.0
  %1223 = vmatpush1.msra.mxu0 %v27
  %1224 = vmatprep.subr.mxu0 0.0
  %1225 = vmatpush1.msra.mxu0 %v26
  %1226 = vmatprep.subr.mxu0 0.0
  %1227 = vmatpush1.msra.mxu0 %v25
  %1228 = vmatprep.subr.mxu0 0.0
  %1229 = vmatpush1.msra.mxu0 %v24
  %1230 = vmatprep.subr.mxu0 0.0
  %1231 = vmatpush1.msra.mxu0 %v23
  %1232 = vmatprep.subr.mxu0 0.0
  %1233 = vmatpush1.msra.mxu0 %v22
  %1234 = vmatprep.subr.mxu0 0.0
  %1235 = vmatpush1.msra.mxu0 %v21
  %1236 = vmatprep.subr.mxu0 0.0
  %1237 = vmatpush1.msra.mxu0 %v20
  %1238 = vmatprep.subr.mxu0 0.0
  %1239 = vmatpush1.msra.mxu0 %v19
  %1240 = vmatprep.subr.mxu0 0.0
  %1241 = vmatpush1.msra.mxu0 %v18
  %1242 = vmatprep.subr.mxu0 0.0
  %1243 = vmatpush1.msra.mxu0 %v17
  %1244 = vmatprep.subr.mxu0 0.0
  %1245 = vmatpush1.msra.mxu0 %v16
  %1246 = vmatprep.subr.mxu0 0.0
  %1247 = vmatpush1.msra.mxu0 %v15
  %1248 = vmatprep.subr.mxu0 0.0
  %1249 = vmatpush1.msra.mxu0 %v14
  %1250 = vmatprep.subr.mxu0 0.0
  %1251 = vmatpush2.msra.mxu0 %v45
  %1252 = vmatprep.subr.mxu0 0.0
  %1253 = vmatpush2.msra.mxu0 %v44
  %1254 = vmatprep.subr.mxu0 0.0
  %1255 = vmatpush2.msra.mxu0 %v43
  %1256 = vmatprep.subr.mxu0 0.0
  %1257 = vmatpush2.msra.mxu0 %v42
  %1258 = vmatprep.subr.mxu0 0.0
  %1259 = vmatpush2.msra.mxu0 %v41
  %1260 = vmatprep.subr.mxu0 0.0
  %1261 = vmatpush2.msra.mxu0 %v40
  %1262 = vmatprep.subr.mxu0 0.0
  %1263 = vmatpush2.msra.mxu0 %v39
  %1264 = vmatprep.subr.mxu0 0.0
  %1265 = vmatpush2.msra.mxu0 %v38
  %1266 = vmatprep.subr.mxu0 0.0
  %1267 = vmatpush2.msra.mxu0 %v37
  %1268 = vmatprep.subr.mxu0 0.0
  %1269 = vmatpush2.msra.mxu0 %v36
  %1270 = vmatprep.subr.mxu0 0.0
  %1271 = vmatpush2.msra.mxu0 %v35
  %1272 = vmatprep.subr.mxu0 0.0
  %1273 = vmatpush2.msra.mxu0 %v34
  %1274 = vmatprep.subr.mxu0 0.0
  %1275 = vmatpush2.msra.mxu0 %v33
  %1276 = vmatprep.subr.mxu0 0.0
  %1277 = vmatpush2.msra.mxu0 %v32
  %1278 = vmatprep.subr.mxu0 0.0
  %1279 = vmatpush2.msra.mxu0 %v31
  %1280 = vmatprep.subr.mxu0 0.0
  %1281 = vmatpush2.msra.mxu0 %v30
  %1282 = vmatprep.mubr.f32.mxu0 %v1141
  %1283 = vmatmul.mubr.f32.gmra.mxu0 %v1140
  %v1284 = vpop.f32.mrf.mxu0
  %v1285 = vadd.f32 %v94, %v1284
  %v1286 = vpop.f32.mrf.mxu0
  %1287 = vmatprep.mubr.f32.mxu0 %v1144
  %1288 = vmatmul.mubr.f32.gmra.mxu0 %v1143
  %v1289 = vpop.f32.mrf.mxu0
  %v1290 = vadd.f32 %v94, %v1289
  %v1291 = vpop.f32.mrf.mxu0
  %1292 = vmatprep.mubr.f32.mxu0 %v1147
  %1293 = vmatmul.mubr.f32.gmra.mxu0 %v1146
  %v1294 = vpop.f32.mrf.mxu0
  %v1295 = vadd.f32 %v94, %v1294
  %v1296 = vpop.f32.mrf.mxu0
  %1297 = vmatprep.mubr.f32.mxu0 %v1150
  %1298 = vmatmul.mubr.f32.gmra.mxu0 %v1149
  %v1299 = vpop.f32.mrf.mxu0
  %v1300 = vadd.f32 %v94, %v1299
  %v1301 = vpop.f32.mrf.mxu0
  %1302 = vmatprep.mubr.f32.mxu0 %v1153
  %1303 = vmatmul.mubr.f32.gmra.mxu0 %v1152
  %v1304 = vpop.f32.mrf.mxu0
  %v1305 = vadd.f32 %v94, %v1304
  %v1306 = vpop.f32.mrf.mxu0
  %1307 = vmatprep.mubr.f32.mxu0 %v1156
  %1308 = vmatmul.mubr.f32.gmra.mxu0 %v1155
  %v1309 = vpop.f32.mrf.mxu0
  %v1310 = vadd.f32 %v94, %v1309
  %v1311 = vpop.f32.mrf.mxu0
  %1312 = vmatprep.mubr.f32.mxu0 %v1159
  %1313 = vmatmul.mubr.f32.gmra.mxu0 %v1158
  %v1314 = vpop.f32.mrf.mxu0
  %v1315 = vadd.f32 %v94, %v1314
  %v1316 = vpop.f32.mrf.mxu0
  %1317 = vmatprep.mubr.f32.mxu0 %v1162
  %1318 = vmatmul.mubr.f32.gmra.mxu0 %v1161
  %v1319 = vpop.f32.mrf.mxu0
  %v1320 = vadd.f32 %v94, %v1319
  %v1321 = vpop.f32.mrf.mxu0
  %1322 = vmatprep.mubr.f32.mxu0 %v1165
  %1323 = vmatmul.mubr.f32.gmra.mxu0 %v1164
  %v1324 = vpop.f32.mrf.mxu0
  %v1325 = vadd.f32 %v94, %v1324
  %v1326 = vpop.f32.mrf.mxu0
  %1327 = vmatprep.mubr.f32.mxu0 %v1168
  %1328 = vmatmul.mubr.f32.gmra.mxu0 %v1167
  %v1329 = vpop.f32.mrf.mxu0
  %v1330 = vadd.f32 %v94, %v1329
  %v1331 = vpop.f32.mrf.mxu0
  %1332 = vmatprep.mubr.f32.mxu0 %v1171
  %1333 = vmatmul.mubr.f32.gmra.mxu0 %v1170
  %v1334 = vpop.f32.mrf.mxu0
  %v1335 = vadd.f32 %v94, %v1334
  %v1336 = vpop.f32.mrf.mxu0
  %1337 = vmatprep.mubr.f32.mxu0 %v1174
  %1338 = vmatmul.mubr.f32.gmra.mxu0 %v1173
  %v1339 = vpop.f32.mrf.mxu0
  %v1340 = vadd.f32 %v94, %v1339
  %v1341 = vpop.f32.mrf.mxu0
  %1342 = vmatprep.mubr.f32.mxu0 %v1177
  %1343 = vmatmul.mubr.f32.gmra.mxu0 %v1176
  %v1344 = vpop.f32.mrf.mxu0
  %v1345 = vadd.f32 %v94, %v1344
  %v1346 = vpop.f32.mrf.mxu0
  %1347 = vdwg.mxu0
  %1348 = vmatprep.subr.mxu0 0.0
  %1349 = vmatpush1.msra.mxu0 0.0
  %1350 = vmatprep.subr.mxu0 0.0
  %1351 = vmatpush1.msra.mxu0 0.0
  %1352 = vmatprep.subr.mxu0 0.0
  %1353 = vmatpush1.msra.mxu0 0.0
  %1354 = vmatprep.subr.mxu0 0.0
  %1355 = vmatpush1.msra.mxu0 0.0
  %1356 = vmatprep.subr.mxu0 0.0
  %1357 = vmatpush1.msra.mxu0 0.0
  %1358 = vmatprep.subr.mxu0 0.0
  %1359 = vmatpush1.msra.mxu0 0.0
  %1360 = vmatprep.subr.mxu0 0.0
  %1361 = vmatpush1.msra.mxu0 0.0
  %1362 = vmatprep.subr.mxu0 0.0
  %1363 = vmatpush1.msra.mxu0 0.0
  %1364 = vmatprep.subr.mxu0 0.0
  %1365 = vmatpush1.msra.mxu0 0.0
  %1366 = vmatprep.subr.mxu0 0.0
  %1367 = vmatpush1.msra.mxu0 0.0
  %1368 = vmatprep.subr.mxu0 0.0
  %1369 = vmatpush1.msra.mxu0 0.0
  %1370 = vmatprep.subr.mxu0 0.0
  %1371 = vmatpush1.msra.mxu0 0.0
  %1372 = vmatprep.subr.mxu0 0.0
  %1373 = vmatpush1.msra.mxu0 %v49
  %1374 = vmatprep.subr.mxu0 0.0
  %1375 = vmatpush1.msra.mxu0 %v48
  %1376 = vmatprep.subr.mxu0 0.0
  %1377 = vmatpush1.msra.mxu0 %v47
  %1378 = vmatprep.subr.mxu0 0.0
  %1379 = vmatpush1.msra.mxu0 %v46
  %1380 = vmatprep.subr.mxu0 0.0
  %1381 = vmatpush2.msra.mxu0 0.0
  %1382 = vmatprep.subr.mxu0 0.0
  %1383 = vmatpush2.msra.mxu0 0.0
  %1384 = vmatprep.subr.mxu0 0.0
  %1385 = vmatpush2.msra.mxu0 0.0
  %1386 = vmatprep.subr.mxu0 0.0
  %1387 = vmatpush2.msra.mxu0 0.0
  %1388 = vmatprep.subr.mxu0 0.0
  %1389 = vmatpush2.msra.mxu0 0.0
  %1390 = vmatprep.subr.mxu0 0.0
  %1391 = vmatpush2.msra.mxu0 0.0
  %1392 = vmatprep.subr.mxu0 0.0
  %1393 = vmatpush2.msra.mxu0 0.0
  %1394 = vmatprep.subr.mxu0 0.0
  %1395 = vmatpush2.msra.mxu0 0.0
  %1396 = vmatprep.subr.mxu0 0.0
  %1397 = vmatpush2.msra.mxu0 0.0
  %1398 = vmatprep.subr.mxu0 0.0
  %1399 = vmatpush2.msra.mxu0 0.0
  %1400 = vmatprep.subr.mxu0 0.0
  %1401 = vmatpush2.msra.mxu0 0.0
  %1402 = vmatprep.subr.mxu0 0.0
  %1403 = vmatpush2.msra.mxu0 0.0
  %1404 = vmatprep.subr.mxu0 0.0
  %1405 = vmatpush2.msra.mxu0 0.0
  %1406 = vmatprep.subr.mxu0 0.0
  %1407 = vmatpush2.msra.mxu0 0.0
  %1408 = vmatprep.subr.mxu0 0.0
  %1409 = vmatpush2.msra.mxu0 0.0
  %1410 = vmatprep.subr.mxu0 0.0
  %1411 = vmatpush2.msra.mxu0 0.0
  %1412 = vmatprep.mubr.f32.mxu0 0.0
  %1413 = vmatmul.mubr.f32.gmra.mxu0 %v1180
  %v1414 = vpop.f32.mrf.mxu0
  %v1415 = vadd.f32 %v1285, %v1414
  %v1416 = vpop.f32.mrf.mxu0
  %1417 = vmatprep.mubr.f32.mxu0 0.0
  %1418 = vmatmul.mubr.f32.gmra.mxu0 %v1183
  %v1419 = vpop.f32.mrf.mxu0
  %v1420 = vadd.f32 %v1290, %v1419
  %v1421 = vpop.f32.mrf.mxu0
  %1422 = vmatprep.mubr.f32.mxu0 0.0
  %1423 = vmatmul.mubr.f32.gmra.mxu0 %v1186
  %v1424 = vpop.f32.mrf.mxu0
  %v1425 = vadd.f32 %v1295, %v1424
  %v1426 = vpop.f32.mrf.mxu0
  %1427 = vmatprep.mubr.f32.mxu0 0.0
  %1428 = vmatmul.mubr.f32.gmra.mxu0 %v1189
  %v1429 = vpop.f32.mrf.mxu0
  %v1430 = vadd.f32 %v1300, %v1429
  %v1431 = vpop.f32.mrf.mxu0
  %1432 = vmatprep.mubr.f32.mxu0 0.0
  %1433 = vmatmul.mubr.f32.gmra.mxu0 %v1192
  %v1434 = vpop.f32.mrf.mxu0
  %v1435 = vadd.f32 %v1305, %v1434
  %v1436 = vpop.f32.mrf.mxu0
  %1437 = vmatprep.mubr.f32.mxu0 0.0
  %1438 = vmatmul.mubr.f32.gmra.mxu0 %v1195
  %v1439 = vpop.f32.mrf.mxu0
  %v1440 = vadd.f32 %v1310, %v1439
  %v1441 = vpop.f32.mrf.mxu0
  %1442 = vmatprep.mubr.f32.mxu0 0.0
  %1443 = vmatmul.mubr.f32.gmra.mxu0 %v1198
  %v1444 = vpop.f32.mrf.mxu0
  %v1445 = vadd.f32 %v1315, %v1444
  %v1446 = vpop.f32.mrf.mxu0
  %1447 = vmatprep.mubr.f32.mxu0 0.0
  %1448 = vmatmul.mubr.f32.gmra.mxu0 %v1201
  %v1449 = vpop.f32.mrf.mxu0
  %v1450 = vadd.f32 %v1320, %v1449
  %v1451 = vpop.f32.mrf.mxu0
  %1452 = vmatprep.mubr.f32.mxu0 0.0
  %1453 = vmatmul.mubr.f32.gmra.mxu0 %v1204
  %v1454 = vpop.f32.mrf.mxu0
  %v1455 = vadd.f32 %v1325, %v1454
  %v1456 = vpop.f32.mrf.mxu0
  %1457 = vmatprep.mubr.f32.mxu0 0.0
  %1458 = vmatmul.mubr.f32.gmra.mxu0 %v1207
  %v1459 = vpop.f32.mrf.mxu0
  %v1460 = vadd.f32 %v1330, %v1459
  %v1461 = vpop.f32.mrf.mxu0
  %1462 = vmatprep.mubr.f32.mxu0 0.0
  %1463 = vmatmul.mubr.f32.gmra.mxu0 %v1210
  %v1464 = vpop.f32.mrf.mxu0
  %v1465 = vadd.f32 %v1335, %v1464
  %v1466 = vpop.f32.mrf.mxu0
  %1467 = vmatprep.mubr.f32.mxu0 0.0
  %1468 = vmatmul.mubr.f32.gmra.mxu0 %v1213
  %v1469 = vpop.f32.mrf.mxu0
  %v1470 = vadd.f32 %v1340, %v1469
  %v1471 = vpop.f32.mrf.mxu0
  %1472 = vmatprep.mubr.f32.mxu0 0.0
  %1473 = vmatmul.mubr.f32.gmra.mxu0 %v1216
  %v1474 = vpop.f32.mrf.mxu0
  %v1475 = vadd.f32 %v1345, %v1474
  %v1476 = vpop.f32.mrf.mxu0
  %1477 = vdwg.mxu0
  %v1478 = vmax.f32 %v1415, 0.0
  %v1479 = vmax.f32 %v1420, 0.0
  %v1480 = vmax.f32 %v1425, 0.0
  %v1481 = vmax.f32 %v1430, 0.0
  %v1482 = vmax.f32 %v1435, 0.0
  %v1483 = vmax.f32 %v1440, 0.0
  %v1484 = vmax.f32 %v1445, 0.0
  %v1485 = vmax.f32 %v1450, 0.0
  %v1486 = vmax.f32 %v1455, 0.0
  %v1487 = vmax.f32 %v1460, 0.0
  %v1488 = vmax.f32 %v1465, 0.0
  %v1489 = vmax.f32 %v1470, 0.0
  %v1490 = vmax.f32 %v1475, 0.0
  %v1491 = vmax.f32 %v1126, %v1478
  %v1492 = vmax.f32 %v1127, %v1479
  %v1493 = vmax.f32 %v1128, %v1480
  %v1494 = vmax.f32 %v1129, %v1481
  %v1495 = vmax.f32 %v1130, %v1482
  %v1496 = vmax.f32 %v1131, %v1483
  %v1497 = vmax.f32 %v1132, %v1484
  %v1498 = vmax.f32 %v1133, %v1485
  %v1499 = vmax.f32 %v1134, %v1486
  %v1500 = vmax.f32 %v1135, %v1487
  %v1501 = vmax.f32 %v1136, %v1488
  %v1502 = vmax.f32 %v1137, %v1489
  %v1503 = vmax.f32 %v1138, %v1490
  %vm1504 = vcmask 523264
  %1505 = vst.msk [vmem:[%s3] sm:$0xff] %vm1504, %v1491
  %1506 = vst.msk [vmem:[%s3 + $0x8] sm:$0xff] %vm1504, %v1492
  %1507 = vst.msk [vmem:[%s3 + $0x10] sm:$0xff] %vm1504, %v1493
  %1508 = vst.msk [vmem:[%s3 + $0x18] sm:$0xff] %vm1504, %v1494
  %1509 = vst.msk [vmem:[%s3 + $0x20] sm:$0xff] %vm1504, %v1495
  %1510 = vst.msk [vmem:[%s3 + $0x28] sm:$0xff] %vm1504, %v1496
  %1511 = vst.msk [vmem:[%s3 + $0x30] sm:$0xff] %vm1504, %v1497
  %1512 = vst.msk [vmem:[%s3 + $0x38] sm:$0xff] %vm1504, %v1498
  %1513 = vst.msk [vmem:[%s3 + $0x40] sm:$0xff] %vm1504, %v1499
  %1514 = vst.msk [vmem:[%s3 + $0x48] sm:$0xff] %vm1504, %v1500
  %1515 = vst.msk [vmem:[%s3 + $0x50] sm:$0xff] %vm1504, %v1501
  %1516 = vst.msk [vmem:[%s3 + $0x58] sm:$0xff] %vm1504, %v1502
  %vm1517 = vcmask 517120
  %1518 = vst.msk [vmem:[%s3 + $0x60] sm:$0x3] %vm1517, %v1503
  // Predicated region
  $region14: #{cnn_fmnist_forward.4} parent=0 // pred_check
    _
  $region15: #{cnn_fmnist_forward.4} parent=0 // pred_check_branch
    %1520 = sbr.rel (0) target = $region17
  $region16: #{cnn_fmnist_forward.4} parent=0 // pred_region
    _
  $region17: #{cnn_fmnist_forward.4} parent=0 // pred_fallthru
    _
  // Predicated region
  $region18: #{cnn_fmnist_forward.4} parent=0 // pred_check
    _
  $region19: #{cnn_fmnist_forward.4} parent=0 // pred_check_branch
    %1522 = sbr.rel (0) target = $region21
  $region20: #{cnn_fmnist_forward.4} parent=0 // pred_region
    _
  $region21: #{cnn_fmnist_forward.4} parent=0 // pred_fallthru
    _

// kernel: cnn_fmnist_forward.5
$region0: #{cnn_fmnist_forward.5}
  #allocation0 [shape = 'u32[]', space=smem, size = 0x4, offset = 0x4, fixed_abs, tag = 'smem constant byte address 0x4 - core index']
  #allocation1 [shape = 'u32[144,128]{1,0:T(1,128)}', space=vmem, size = 0x12000, scoped, tag = 'internal scratch']
  %s0 = inlined_call_operand.vmem [shape: bf16[2,3136], index: 0, kind: input, shape index: {}]
  %s1 = inlined_call_operand.vmem [shape: bf16[3136,128], index: 1, kind: input, shape index: {}]
  %s2 = inlined_call_operand.vmem [shape: f32[1,128], index: 2, kind: input, shape index: {}]
  %s3 = inlined_call_operand.vmem [shape: f32[128,10], index: 3, kind: input, shape index: {}]
  %s4 = inlined_call_operand.vmem [shape: f32[1,10], index: 4, kind: input, shape index: {}]
  %s5 = inlined_call_operand.hbm [shape: f32[2,10], index: 5, kind: output, shape index: {}]
  %s6 = sld [smem:[#allocation0]]
  $region30: #{cnn_fmnist_forward.5} parent=0
    _
  %s8 = ssub.s32 1, %s6
  %s9 = scalar_select 0, %s8, %s6
  $region1: #{cnn_fmnist_forward.5} parent=0
    #allocation2 [shape = 'u8[1024]{0}', space=vmem, size = 0x400, scoped, tag = 'output window, operand 0, single buffered']
    #allocation3 [shape = 's32[1]{0}', space=sflag, size = 0x4, scoped, tag = 'scoped memory for cnn_fmnist_forward.5']
    %10 = vsyncpa [#allocation3], 0
    // Predicated region
    $region2: #{cnn_fmnist_forward.5} parent=1 // pred_check
      _
    $region3: #{cnn_fmnist_forward.5} parent=1 // pred_check_branch
      %12 = sbr.rel (0) target = $region5
    $region4: #{cnn_fmnist_forward.5} parent=1 // pred_region
      _
    $region5: #{cnn_fmnist_forward.5} parent=1 // pred_fallthru
      _
    // Predicated region
    $region6: #{cnn_fmnist_forward.5} parent=1 // pred_check
      _
    $region7: #{cnn_fmnist_forward.5} parent=1 // pred_check_branch
      %14 = sbr.rel (0) target = $region9
    $region8: #{cnn_fmnist_forward.5} parent=1 // pred_region
      _
    $region9: #{cnn_fmnist_forward.5} parent=1 // pred_fallthru
      _
    // Predicated region
    $region10: #{cnn_fmnist_forward.5} parent=1 // pred_check
      _
    $region11: #{cnn_fmnist_forward.5} parent=1 // pred_check_branch
      %16 = sbr.rel (0) target = $region13
    $region12: #{cnn_fmnist_forward.5} parent=1 // pred_region
      _
    $region13: #{cnn_fmnist_forward.5} parent=1 // pred_fallthru
      _
    // Predicated region
    $region14: #{cnn_fmnist_forward.5} parent=1 // pred_check
      _
    $region15: #{cnn_fmnist_forward.5} parent=1 // pred_check_branch
      %18 = sbr.rel (0) target = $region17
    $region16: #{cnn_fmnist_forward.5} parent=1 // pred_region
      _
    $region17: #{cnn_fmnist_forward.5} parent=1 // pred_fallthru
      _
    // Predicated region
    $region18: #{cnn_fmnist_forward.5} parent=1 // pred_check
      _
    $region19: #{cnn_fmnist_forward.5} parent=1 // pred_check_branch
      %20 = sbr.rel (0) target = $region21
    $region20: #{cnn_fmnist_forward.5} parent=1 // pred_region
      _
    $region21: #{cnn_fmnist_forward.5} parent=1 // pred_fallthru
      _
    %v22 = vld [vmem:[%s0] sm:$0xff]
    %v23 = vld [vmem:[%s0 + $0x8] sm:$0xff]
    %v24 = vld [vmem:[%s0 + $0x10] sm:$0xff]
    %v25 = vld [vmem:[%s0 + $0x18] sm:$0x1]
    %v26 = vld [vmem:[%s1] sm:$0xf]
    %v27 = vld [vmem:[%s1 + $0x4] sm:$0xf]
    %v28 = vld [vmem:[%s1 + $0x8] sm:$0xf]
    %v29 = vld [vmem:[%s1 + $0xc] sm:$0xf]
    %v30 = vld [vmem:[%s1 + $0x10] sm:$0xf]
    %v31 = vld [vmem:[%s1 + $0x14] sm:$0xf]
    %v32 = vld [vmem:[%s1 + $0x18] sm:$0xf]
    %v33 = vld [vmem:[%s1 + $0x1c] sm:$0xf]
    %v34 = vld [vmem:[%s1 + $0x20] sm:$0xf]
    %v35 = vld [vmem:[%s1 + $0x24] sm:$0xf]
    %v36 = vld [vmem:[%s1 + $0x28] sm:$0xf]
    %v37 = vld [vmem:[%s1 + $0x2c] sm:$0xf]
    %v38 = vld [vmem:[%s1 + $0x30] sm:$0xf]
    %v39 = vld [vmem:[%s1 + $0x34] sm:$0xf]
    %v40 = vld [vmem:[%s1 + $0x38] sm:$0xf]
    %v41 = vld [vmem:[%s1 + $0x3c] sm:$0xf]
    %v42 = vld [vmem:[%s1 + $0x40] sm:$0xf]
    %v43 = vld [vmem:[%s1 + $0x44] sm:$0xf]
    %v44 = vld [vmem:[%s1 + $0x48] sm:$0xf]
    %v45 = vld [vmem:[%s1 + $0x4c] sm:$0xf]
    %v46 = vld [vmem:[%s1 + $0x50] sm:$0xf]
    %v47 = vld [vmem:[%s1 + $0x54] sm:$0xf]
    %v48 = vld [vmem:[%s1 + $0x58] sm:$0xf]
    %v49 = vld [vmem:[%s1 + $0x5c] sm:$0xf]
    %v50 = vld [vmem:[%s1 + $0x60] sm:$0xf]
    %v51 = vld [vmem:[%s1 + $0x64] sm:$0xf]
    %v52 = vld [vmem:[%s1 + $0x68] sm:$0xf]
    %v53 = vld [vmem:[%s1 + $0x6c] sm:$0xf]
    %v54 = vld [vmem:[%s1 + $0x70] sm:$0xf]
    %v55 = vld [vmem:[%s1 + $0x74] sm:$0xf]
    %v56 = vld [vmem:[%s1 + $0x78] sm:$0xf]
    %v57 = vld [vmem:[%s1 + $0x7c] sm:$0xf]
    %v58 = vld [vmem:[%s1 + $0x80] sm:$0xf]
    %v59 = vld [vmem:[%s1 + $0x84] sm:$0xf]
    %v60 = vld [vmem:[%s1 + $0x88] sm:$0xf]
    %v61 = vld [vmem:[%s1 + $0x8c] sm:$0xf]
    %v62 = vld [vmem:[%s1 + $0x90] sm:$0xf]
    %v63 = vld [vmem:[%s1 + $0x94] sm:$0xf]
    %v64 = vld [vmem:[%s1 + $0x98] sm:$0xf]
    %v65 = vld [vmem:[%s1 + $0x9c] sm:$0xf]
    %v66 = vld [vmem:[%s1 + $0xa0] sm:$0xf]
    %v67 = vld [vmem:[%s1 + $0xa4] sm:$0xf]
    %v68 = vld [vmem:[%s1 + $0xa8] sm:$0xf]
    %v69 = vld [vmem:[%s1 + $0xac] sm:$0xf]
    %v70 = vld [vmem:[%s1 + $0xb0] sm:$0xf]
    %v71 = vld [vmem:[%s1 + $0xb4] sm:$0xf]
    %v72 = vld [vmem:[%s1 + $0xb8] sm:$0xf]
    %v73 = vld [vmem:[%s1 + $0xbc] sm:$0xf]
    %v74 = vld [vmem:[%s1 + $0xc0] sm:$0xf]
    %v75 = vld [vmem:[%s1 + $0xc4] sm:$0xf]
    %v76 = vld [vmem:[%s1 + $0xc8] sm:$0xf]
    %v77 = vld [vmem:[%s1 + $0xcc] sm:$0xf]
    %v78 = vld [vmem:[%s1 + $0xd0] sm:$0xf]
    %v79 = vld [vmem:[%s1 + $0xd4] sm:$0xf]
    %v80 = vld [vmem:[%s1 + $0xd8] sm:$0xf]
    %v81 = vld [vmem:[%s1 + $0xdc] sm:$0xf]
    %v82 = vld [vmem:[%s1 + $0xe0] sm:$0xf]
    %v83 = vld [vmem:[%s1 + $0xe4] sm:$0xf]
    %v84 = vld [vmem:[%s1 + $0xe8] sm:$0xf]
    %v85 = vld [vmem:[%s1 + $0xec] sm:$0xf]
    %v86 = vld [vmem:[%s1 + $0xf0] sm:$0xf]
    %v87 = vld [vmem:[%s1 + $0xf4] sm:$0xf]
    %v88 = vld [vmem:[%s1 + $0xf8] sm:$0xf]
    %v89 = vld [vmem:[%s1 + $0xfc] sm:$0xf]
    %v90 = vld [vmem:[%s1 + $0x100] sm:$0xf]
    %v91 = vld [vmem:[%s1 + $0x104] sm:$0xf]
    %v92 = vld [vmem:[%s1 + $0x108] sm:$0xf]
    %v93 = vld [vmem:[%s1 + $0x10c] sm:$0xf]
    %v94 = vld [vmem:[%s1 + $0x110] sm:$0xf]
    %v95 = vld [vmem:[%s1 + $0x114] sm:$0xf]
    %v96 = vld [vmem:[%s1 + $0x118] sm:$0xf]
    %v97 = vld [vmem:[%s1 + $0x11c] sm:$0xf]
    %v98 = vld [vmem:[%s1 + $0x120] sm:$0xf]
    %v99 = vld [vmem:[%s1 + $0x124] sm:$0xf]
    %v100 = vld [vmem:[%s1 + $0x128] sm:$0xf]
    %v101 = vld [vmem:[%s1 + $0x12c] sm:$0xf]
    %v102 = vld [vmem:[%s1 + $0x130] sm:$0xf]
    %v103 = vld [vmem:[%s1 + $0x134] sm:$0xf]
    %v104 = vld [vmem:[%s1 + $0x138] sm:$0xf]
    %v105 = vld [vmem:[%s1 + $0x13c] sm:$0xf]
    %v106 = vld [vmem:[%s1 + $0x140] sm:$0xf]
    %v107 = vld [vmem:[%s1 + $0x144] sm:$0xf]
    %v108 = vld [vmem:[%s1 + $0x148] sm:$0xf]
    %v109 = vld [vmem:[%s1 + $0x14c] sm:$0xf]
    %v110 = vld [vmem:[%s1 + $0x150] sm:$0xf]
    %v111 = vld [vmem:[%s1 + $0x154] sm:$0xf]
    %v112 = vld [vmem:[%s1 + $0x158] sm:$0xf]
    %v113 = vld [vmem:[%s1 + $0x15c] sm:$0xf]
    %v114 = vld [vmem:[%s1 + $0x160] sm:$0xf]
    %v115 = vld [vmem:[%s1 + $0x164] sm:$0xf]
    %v116 = vld [vmem:[%s1 + $0x168] sm:$0xf]
    %v117 = vld [vmem:[%s1 + $0x16c] sm:$0xf]
    %v118 = vld [vmem:[%s1 + $0x170] sm:$0xf]
    %v119 = vld [vmem:[%s1 + $0x174] sm:$0xf]
    %v120 = vld [vmem:[%s1 + $0x178] sm:$0xf]
    %v121 = vld [vmem:[%s1 + $0x17c] sm:$0xf]
    %v122 = vld [vmem:[%s1 + $0x180] sm:$0xf]
    %v123 = vld [vmem:[%s1 + $0x184] sm:$0xf]
    %v124 = vld [vmem:[%s1 + $0x188] sm:$0xf]
    %v125 = vld [vmem:[%s1 + $0x18c] sm:$0xf]
    %v126 = vld [vmem:[%s1 + $0x190] sm:$0xf]
    %v127 = vld [vmem:[%s1 + $0x194] sm:$0xf]
    %v128 = vld [vmem:[%s1 + $0x198] sm:$0xf]
    %v129 = vld [vmem:[%s1 + $0x19c] sm:$0xf]
    %v130 = vld [vmem:[%s1 + $0x1a0] sm:$0xf]
    %v131 = vld [vmem:[%s1 + $0x1a4] sm:$0xf]
    %v132 = vld [vmem:[%s1 + $0x1a8] sm:$0xf]
    %v133 = vld [vmem:[%s1 + $0x1ac] sm:$0xf]
    %v134 = vld [vmem:[%s1 + $0x1b0] sm:$0xf]
    %v135 = vld [vmem:[%s1 + $0x1b4] sm:$0xf]
    %v136 = vld [vmem:[%s1 + $0x1b8] sm:$0xf]
    %v137 = vld [vmem:[%s1 + $0x1bc] sm:$0xf]
    %v138 = vld [vmem:[%s1 + $0x1c0] sm:$0xf]
    %v139 = vld [vmem:[%s1 + $0x1c4] sm:$0xf]
    %v140 = vld [vmem:[%s1 + $0x1c8] sm:$0xf]
    %v141 = vld [vmem:[%s1 + $0x1cc] sm:$0xf]
    %v142 = vld [vmem:[%s1 + $0x1d0] sm:$0xf]
    %v143 = vld [vmem:[%s1 + $0x1d4] sm:$0xf]
    %v144 = vld [vmem:[%s1 + $0x1d8] sm:$0xf]
    %v145 = vld [vmem:[%s1 + $0x1dc] sm:$0xf]
    %v146 = vld [vmem:[%s1 + $0x1e0] sm:$0xf]
    %v147 = vld [vmem:[%s1 + $0x1e4] sm:$0xf]
    %v148 = vld [vmem:[%s1 + $0x1e8] sm:$0xf]
    %v149 = vld [vmem:[%s1 + $0x1ec] sm:$0xf]
    %v150 = vld [vmem:[%s1 + $0x1f0] sm:$0xf]
    %v151 = vld [vmem:[%s1 + $0x1f4] sm:$0xf]
    %v152 = vld [vmem:[%s1 + $0x1f8] sm:$0xf]
    %v153 = vld [vmem:[%s1 + $0x1fc] sm:$0xf]
    %v154 = vld [vmem:[%s1 + $0x200] sm:$0xf]
    %v155 = vld [vmem:[%s1 + $0x204] sm:$0xf]
    %v156 = vld [vmem:[%s1 + $0x208] sm:$0xf]
    %v157 = vld [vmem:[%s1 + $0x20c] sm:$0xf]
    %v158 = vld [vmem:[%s1 + $0x210] sm:$0xf]
    %v159 = vld [vmem:[%s1 + $0x214] sm:$0xf]
    %v160 = vld [vmem:[%s1 + $0x218] sm:$0xf]
    %v161 = vld [vmem:[%s1 + $0x21c] sm:$0xf]
    %v162 = vld [vmem:[%s1 + $0x220] sm:$0xf]
    %v163 = vld [vmem:[%s1 + $0x224] sm:$0xf]
    %v164 = vld [vmem:[%s1 + $0x228] sm:$0xf]
    %v165 = vld [vmem:[%s1 + $0x22c] sm:$0xf]
    %v166 = vld [vmem:[%s1 + $0x230] sm:$0xf]
    %v167 = vld [vmem:[%s1 + $0x234] sm:$0xf]
    %v168 = vld [vmem:[%s1 + $0x238] sm:$0xf]
    %v169 = vld [vmem:[%s1 + $0x23c] sm:$0xf]
    %v170 = vld [vmem:[%s1 + $0x240] sm:$0xf]
    %v171 = vld [vmem:[%s1 + $0x244] sm:$0xf]
    %v172 = vld [vmem:[%s1 + $0x248] sm:$0xf]
    %v173 = vld [vmem:[%s1 + $0x24c] sm:$0xf]
    %v174 = vld [vmem:[%s1 + $0x250] sm:$0xf]
    %v175 = vld [vmem:[%s1 + $0x254] sm:$0xf]
    %v176 = vld [vmem:[%s1 + $0x258] sm:$0xf]
    %v177 = vld [vmem:[%s1 + $0x25c] sm:$0xf]
    %v178 = vld [vmem:[%s1 + $0x260] sm:$0xf]
    %v179 = vld [vmem:[%s1 + $0x264] sm:$0xf]
    %v180 = vld [vmem:[%s1 + $0x268] sm:$0xf]
    %v181 = vld [vmem:[%s1 + $0x26c] sm:$0xf]
    %v182 = vld [vmem:[%s1 + $0x270] sm:$0xf]
    %v183 = vld [vmem:[%s1 + $0x274] sm:$0xf]
    %v184 = vld [vmem:[%s1 + $0x278] sm:$0xf]
    %v185 = vld [vmem:[%s1 + $0x27c] sm:$0xf]
    %v186 = vld [vmem:[%s1 + $0x280] sm:$0xf]
    %v187 = vld [vmem:[%s1 + $0x284] sm:$0xf]
    %v188 = vld [vmem:[%s1 + $0x288] sm:$0xf]
    %v189 = vld [vmem:[%s1 + $0x28c] sm:$0xf]
    %v190 = vld [vmem:[%s1 + $0x290] sm:$0xf]
    %v191 = vld [vmem:[%s1 + $0x294] sm:$0xf]
    %v192 = vld [vmem:[%s1 + $0x298] sm:$0xf]
    %v193 = vld [vmem:[%s1 + $0x29c] sm:$0xf]
    %v194 = vld [vmem:[%s1 + $0x2a0] sm:$0xf]
    %v195 = vld [vmem:[%s1 + $0x2a4] sm:$0xf]
    %v196 = vld [vmem:[%s1 + $0x2a8] sm:$0xf]
    %v197 = vld [vmem:[%s1 + $0x2ac] sm:$0xf]
    %v198 = vld [vmem:[%s1 + $0x2b0] sm:$0xf]
    %v199 = vld [vmem:[%s1 + $0x2b4] sm:$0xf]
    %v200 = vld [vmem:[%s1 + $0x2b8] sm:$0xf]
    %v201 = vld [vmem:[%s1 + $0x2bc] sm:$0xf]
    %v202 = vld [vmem:[%s1 + $0x2c0] sm:$0xf]
    %v203 = vld [vmem:[%s1 + $0x2c4] sm:$0xf]
    %v204 = vld [vmem:[%s1 + $0x2c8] sm:$0xf]
    %v205 = vld [vmem:[%s1 + $0x2cc] sm:$0xf]
    %v206 = vld [vmem:[%s1 + $0x2d0] sm:$0xf]
    %v207 = vld [vmem:[%s1 + $0x2d4] sm:$0xf]
    %v208 = vld [vmem:[%s1 + $0x2d8] sm:$0xf]
    %v209 = vld [vmem:[%s1 + $0x2dc] sm:$0xf]
    %v210 = vld [vmem:[%s1 + $0x2e0] sm:$0xf]
    %v211 = vld [vmem:[%s1 + $0x2e4] sm:$0xf]
    %v212 = vld [vmem:[%s1 + $0x2e8] sm:$0xf]
    %v213 = vld [vmem:[%s1 + $0x2ec] sm:$0xf]
    %v214 = vld [vmem:[%s1 + $0x2f0] sm:$0xf]
    %v215 = vld [vmem:[%s1 + $0x2f4] sm:$0xf]
    %v216 = vld [vmem:[%s1 + $0x2f8] sm:$0xf]
    %v217 = vld [vmem:[%s1 + $0x2fc] sm:$0xf]
    %v218 = vld [vmem:[%s1 + $0x300] sm:$0xf]
    %v219 = vld [vmem:[%s1 + $0x304] sm:$0xf]
    %v220 = vld [vmem:[%s1 + $0x308] sm:$0xf]
    %v221 = vld [vmem:[%s1 + $0x30c] sm:$0xf]
    %v222 = vld [vmem:[%s1 + $0x310] sm:$0xf]
    %v223 = vld [vmem:[%s1 + $0x314] sm:$0xf]
    %v224 = vld [vmem:[%s1 + $0x318] sm:$0xf]
    %v225 = vld [vmem:[%s1 + $0x31c] sm:$0xf]
    %v226 = vld [vmem:[%s1 + $0x320] sm:$0xf]
    %v227 = vld [vmem:[%s1 + $0x324] sm:$0xf]
    %v228 = vld [vmem:[%s1 + $0x328] sm:$0xf]
    %v229 = vld [vmem:[%s1 + $0x32c] sm:$0xf]
    %v230 = vld [vmem:[%s1 + $0x330] sm:$0xf]
    %v231 = vld [vmem:[%s1 + $0x334] sm:$0xf]
    %v232 = vld [vmem:[%s1 + $0x338] sm:$0xf]
    %v233 = vld [vmem:[%s1 + $0x33c] sm:$0xf]
    %v234 = vld [vmem:[%s1 + $0x340] sm:$0xf]
    %v235 = vld [vmem:[%s1 + $0x344] sm:$0xf]
    %v236 = vld [vmem:[%s1 + $0x348] sm:$0xf]
    %v237 = vld [vmem:[%s1 + $0x34c] sm:$0xf]
    %v238 = vld [vmem:[%s1 + $0x350] sm:$0xf]
    %v239 = vld [vmem:[%s1 + $0x354] sm:$0xf]
    %v240 = vld [vmem:[%s1 + $0x358] sm:$0xf]
    %v241 = vld [vmem:[%s1 + $0x35c] sm:$0xf]
    %v242 = vld [vmem:[%s1 + $0x360] sm:$0xf]
    %v243 = vld [vmem:[%s1 + $0x364] sm:$0xf]
    %v244 = vld [vmem:[%s1 + $0x368] sm:$0xf]
    %v245 = vld [vmem:[%s1 + $0x36c] sm:$0xf]
    %v246 = vld [vmem:[%s1 + $0x370] sm:$0xf]
    %v247 = vld [vmem:[%s1 + $0x374] sm:$0xf]
    %v248 = vld [vmem:[%s1 + $0x378] sm:$0xf]
    %v249 = vld [vmem:[%s1 + $0x37c] sm:$0xf]
    %v250 = vld [vmem:[%s1 + $0x380] sm:$0xf]
    %v251 = vld [vmem:[%s1 + $0x384] sm:$0xf]
    %v252 = vld [vmem:[%s1 + $0x388] sm:$0xf]
    %v253 = vld [vmem:[%s1 + $0x38c] sm:$0xf]
    %v254 = vld [vmem:[%s1 + $0x390] sm:$0xf]
    %v255 = vld [vmem:[%s1 + $0x394] sm:$0xf]
    %v256 = vld [vmem:[%s1 + $0x398] sm:$0xf]
    %v257 = vld [vmem:[%s1 + $0x39c] sm:$0xf]
    %v258 = vld [vmem:[%s1 + $0x3a0] sm:$0xf]
    %v259 = vld [vmem:[%s1 + $0x3a4] sm:$0xf]
    %v260 = vld [vmem:[%s1 + $0x3a8] sm:$0xf]
    %v261 = vld [vmem:[%s1 + $0x3ac] sm:$0xf]
    %v262 = vld [vmem:[%s1 + $0x3b0] sm:$0xf]
    %v263 = vld [vmem:[%s1 + $0x3b4] sm:$0xf]
    %v264 = vld [vmem:[%s1 + $0x3b8] sm:$0xf]
    %v265 = vld [vmem:[%s1 + $0x3bc] sm:$0xf]
    %v266 = vld [vmem:[%s1 + $0x3c0] sm:$0xf]
    %v267 = vld [vmem:[%s1 + $0x3c4] sm:$0xf]
    %v268 = vld [vmem:[%s1 + $0x3c8] sm:$0xf]
    %v269 = vld [vmem:[%s1 + $0x3cc] sm:$0xf]
    %v270 = vld [vmem:[%s1 + $0x3d0] sm:$0xf]
    %v271 = vld [vmem:[%s1 + $0x3d4] sm:$0xf]
    %v272 = vld [vmem:[%s1 + $0x3d8] sm:$0xf]
    %v273 = vld [vmem:[%s1 + $0x3dc] sm:$0xf]
    %v274 = vld [vmem:[%s1 + $0x3e0] sm:$0xf]
    %v275 = vld [vmem:[%s1 + $0x3e4] sm:$0xf]
    %v276 = vld [vmem:[%s1 + $0x3e8] sm:$0xf]
    %v277 = vld [vmem:[%s1 + $0x3ec] sm:$0xf]
    %v278 = vld [vmem:[%s1 + $0x3f0] sm:$0xf]
    %v279 = vld [vmem:[%s1 + $0x3f4] sm:$0xf]
    %v280 = vld [vmem:[%s1 + $0x3f8] sm:$0xf]
    %v281 = vld [vmem:[%s1 + $0x3fc] sm:$0xf]
    %v282 = vld [vmem:[%s1 + $0x400] sm:$0xf]
    %v283 = vld [vmem:[%s1 + $0x404] sm:$0xf]
    %v284 = vld [vmem:[%s1 + $0x408] sm:$0xf]
    %v285 = vld [vmem:[%s1 + $0x40c] sm:$0xf]
    %v286 = vld [vmem:[%s1 + $0x410] sm:$0xf]
    %v287 = vld [vmem:[%s1 + $0x414] sm:$0xf]
    %v288 = vld [vmem:[%s1 + $0x418] sm:$0xf]
    %v289 = vld [vmem:[%s1 + $0x41c] sm:$0xf]
    %v290 = vld [vmem:[%s1 + $0x420] sm:$0xf]
    %v291 = vld [vmem:[%s1 + $0x424] sm:$0xf]
    %v292 = vld [vmem:[%s1 + $0x428] sm:$0xf]
    %v293 = vld [vmem:[%s1 + $0x42c] sm:$0xf]
    %v294 = vld [vmem:[%s1 + $0x430] sm:$0xf]
    %v295 = vld [vmem:[%s1 + $0x434] sm:$0xf]
    %v296 = vld [vmem:[%s1 + $0x438] sm:$0xf]
    %v297 = vld [vmem:[%s1 + $0x43c] sm:$0xf]
    %v298 = vld [vmem:[%s1 + $0x440] sm:$0xf]
    %v299 = vld [vmem:[%s1 + $0x444] sm:$0xf]
    %v300 = vld [vmem:[%s1 + $0x448] sm:$0xf]
    %v301 = vld [vmem:[%s1 + $0x44c] sm:$0xf]
    %v302 = vld [vmem:[%s1 + $0x450] sm:$0xf]
    %v303 = vld [vmem:[%s1 + $0x454] sm:$0xf]
    %v304 = vld [vmem:[%s1 + $0x458] sm:$0xf]
    %v305 = vld [vmem:[%s1 + $0x45c] sm:$0xf]
    %v306 = vld [vmem:[%s1 + $0x460] sm:$0xf]
    %v307 = vld [vmem:[%s1 + $0x464] sm:$0xf]
    %v308 = vld [vmem:[%s1 + $0x468] sm:$0xf]
    %v309 = vld [vmem:[%s1 + $0x46c] sm:$0xf]
    %v310 = vld [vmem:[%s1 + $0x470] sm:$0xf]
    %v311 = vld [vmem:[%s1 + $0x474] sm:$0xf]
    %v312 = vld [vmem:[%s1 + $0x478] sm:$0xf]
    %v313 = vld [vmem:[%s1 + $0x47c] sm:$0xf]
    %v314 = vld [vmem:[%s1 + $0x480] sm:$0xf]
    %v315 = vld [vmem:[%s1 + $0x484] sm:$0xf]
    %v316 = vld [vmem:[%s1 + $0x488] sm:$0xf]
    %v317 = vld [vmem:[%s1 + $0x48c] sm:$0xf]
    %v318 = vld [vmem:[%s1 + $0x490] sm:$0xf]
    %v319 = vld [vmem:[%s1 + $0x494] sm:$0xf]
    %v320 = vld [vmem:[%s1 + $0x498] sm:$0xf]
    %v321 = vld [vmem:[%s1 + $0x49c] sm:$0xf]
    %v322 = vld [vmem:[%s1 + $0x4a0] sm:$0xf]
    %v323 = vld [vmem:[%s1 + $0x4a4] sm:$0xf]
    %v324 = vld [vmem:[%s1 + $0x4a8] sm:$0xf]
    %v325 = vld [vmem:[%s1 + $0x4ac] sm:$0xf]
    %v326 = vld [vmem:[%s1 + $0x4b0] sm:$0xf]
    %v327 = vld [vmem:[%s1 + $0x4b4] sm:$0xf]
    %v328 = vld [vmem:[%s1 + $0x4b8] sm:$0xf]
    %v329 = vld [vmem:[%s1 + $0x4bc] sm:$0xf]
    %v330 = vld [vmem:[%s1 + $0x4c0] sm:$0xf]
    %v331 = vld [vmem:[%s1 + $0x4c4] sm:$0xf]
    %v332 = vld [vmem:[%s1 + $0x4c8] sm:$0xf]
    %v333 = vld [vmem:[%s1 + $0x4cc] sm:$0xf]
    %v334 = vld [vmem:[%s1 + $0x4d0] sm:$0xf]
    %v335 = vld [vmem:[%s1 + $0x4d4] sm:$0xf]
    %v336 = vld [vmem:[%s1 + $0x4d8] sm:$0xf]
    %v337 = vld [vmem:[%s1 + $0x4dc] sm:$0xf]
    %v338 = vld [vmem:[%s1 + $0x4e0] sm:$0xf]
    %v339 = vld [vmem:[%s1 + $0x4e4] sm:$0xf]
    %v340 = vld [vmem:[%s1 + $0x4e8] sm:$0xf]
    %v341 = vld [vmem:[%s1 + $0x4ec] sm:$0xf]
    %v342 = vld [vmem:[%s1 + $0x4f0] sm:$0xf]
    %v343 = vld [vmem:[%s1 + $0x4f4] sm:$0xf]
    %v344 = vld [vmem:[%s1 + $0x4f8] sm:$0xf]
    %v345 = vld [vmem:[%s1 + $0x4fc] sm:$0xf]
    %v346 = vld [vmem:[%s1 + $0x500] sm:$0xf]
    %v347 = vld [vmem:[%s1 + $0x504] sm:$0xf]
    %v348 = vld [vmem:[%s1 + $0x508] sm:$0xf]
    %v349 = vld [vmem:[%s1 + $0x50c] sm:$0xf]
    %v350 = vld [vmem:[%s1 + $0x510] sm:$0xf]
    %v351 = vld [vmem:[%s1 + $0x514] sm:$0xf]
    %v352 = vld [vmem:[%s1 + $0x518] sm:$0xf]
    %v353 = vld [vmem:[%s1 + $0x51c] sm:$0xf]
    %v354 = vld [vmem:[%s1 + $0x520] sm:$0xf]
    %v355 = vld [vmem:[%s1 + $0x524] sm:$0xf]
    %v356 = vld [vmem:[%s1 + $0x528] sm:$0xf]
    %v357 = vld [vmem:[%s1 + $0x52c] sm:$0xf]
    %v358 = vld [vmem:[%s1 + $0x530] sm:$0xf]
    %v359 = vld [vmem:[%s1 + $0x534] sm:$0xf]
    %v360 = vld [vmem:[%s1 + $0x538] sm:$0xf]
    %v361 = vld [vmem:[%s1 + $0x53c] sm:$0xf]
    %v362 = vld [vmem:[%s1 + $0x540] sm:$0xf]
    %v363 = vld [vmem:[%s1 + $0x544] sm:$0xf]
    %v364 = vld [vmem:[%s1 + $0x548] sm:$0xf]
    %v365 = vld [vmem:[%s1 + $0x54c] sm:$0xf]
    %v366 = vld [vmem:[%s1 + $0x550] sm:$0xf]
    %v367 = vld [vmem:[%s1 + $0x554] sm:$0xf]
    %v368 = vld [vmem:[%s1 + $0x558] sm:$0xf]
    %v369 = vld [vmem:[%s1 + $0x55c] sm:$0xf]
    %v370 = vld [vmem:[%s1 + $0x560] sm:$0xf]
    %v371 = vld [vmem:[%s1 + $0x564] sm:$0xf]
    %v372 = vld [vmem:[%s1 + $0x568] sm:$0xf]
    %v373 = vld [vmem:[%s1 + $0x56c] sm:$0xf]
    %v374 = vld [vmem:[%s1 + $0x570] sm:$0xf]
    %v375 = vld [vmem:[%s1 + $0x574] sm:$0xf]
    %v376 = vld [vmem:[%s1 + $0x578] sm:$0xf]
    %v377 = vld [vmem:[%s1 + $0x57c] sm:$0xf]
    %v378 = vld [vmem:[%s1 + $0x580] sm:$0xf]
    %v379 = vld [vmem:[%s1 + $0x584] sm:$0xf]
    %v380 = vld [vmem:[%s1 + $0x588] sm:$0xf]
    %v381 = vld [vmem:[%s1 + $0x58c] sm:$0xf]
    %v382 = vld [vmem:[%s1 + $0x590] sm:$0xf]
    %v383 = vld [vmem:[%s1 + $0x594] sm:$0xf]
    %v384 = vld [vmem:[%s1 + $0x598] sm:$0xf]
    %v385 = vld [vmem:[%s1 + $0x59c] sm:$0xf]
    %v386 = vld [vmem:[%s1 + $0x5a0] sm:$0xf]
    %v387 = vld [vmem:[%s1 + $0x5a4] sm:$0xf]
    %v388 = vld [vmem:[%s1 + $0x5a8] sm:$0xf]
    %v389 = vld [vmem:[%s1 + $0x5ac] sm:$0xf]
    %v390 = vld [vmem:[%s1 + $0x5b0] sm:$0xf]
    %v391 = vld [vmem:[%s1 + $0x5b4] sm:$0xf]
    %v392 = vld [vmem:[%s1 + $0x5b8] sm:$0xf]
    %v393 = vld [vmem:[%s1 + $0x5bc] sm:$0xf]
    %v394 = vld [vmem:[%s1 + $0x5c0] sm:$0xf]
    %v395 = vld [vmem:[%s1 + $0x5c4] sm:$0xf]
    %v396 = vld [vmem:[%s1 + $0x5c8] sm:$0xf]
    %v397 = vld [vmem:[%s1 + $0x5cc] sm:$0xf]
    %v398 = vld [vmem:[%s1 + $0x5d0] sm:$0xf]
    %v399 = vld [vmem:[%s1 + $0x5d4] sm:$0xf]
    %v400 = vld [vmem:[%s1 + $0x5d8] sm:$0xf]
    %v401 = vld [vmem:[%s1 + $0x5dc] sm:$0xf]
    %v402 = vld [vmem:[%s1 + $0x5e0] sm:$0xf]
    %v403 = vld [vmem:[%s1 + $0x5e4] sm:$0xf]
    %v404 = vld [vmem:[%s1 + $0x5e8] sm:$0xf]
    %v405 = vld [vmem:[%s1 + $0x5ec] sm:$0xf]
    %v406 = vld [vmem:[%s1 + $0x5f0] sm:$0xf]
    %v407 = vld [vmem:[%s1 + $0x5f4] sm:$0xf]
    %v408 = vld [vmem:[%s1 + $0x5f8] sm:$0xf]
    %v409 = vld [vmem:[%s1 + $0x5fc] sm:$0xf]
    %v410 = vld [vmem:[%s1 + $0x600] sm:$0xf]
    %v411 = vld [vmem:[%s1 + $0x604] sm:$0xf]
    %v412 = vld [vmem:[%s1 + $0x608] sm:$0xf]
    %v413 = vld [vmem:[%s1 + $0x60c] sm:$0xf]
    %v414 = vld [vmem:[%s1 + $0x610] sm:$0xf]
    %v415 = vld [vmem:[%s1 + $0x614] sm:$0xf]
    %v416 = vld [vmem:[%s1 + $0x618] sm:$0xf]
    %v417 = vld [vmem:[%s1 + $0x61c] sm:$0xf]
    %v418 = vld [vmem:[%s2] sm:$0x1]
    %v420 = vlaneseq
    %v421 = vshrl.u32 %v420, 7
    %v422 = vsub.s32 0, %v421
    %v423 = vrot.slane %v418, %v422
    %v429 = vcombine.high %v22, %v22
    %v431 = vunpack.c.l.s4 1966171168
    %v432 = vunpack.c.0.s8 %v431
    %v433 = vlaneseq
    %v434 = vshrl.u32 %v433, 7
    %v435 = vsub.s32 %v432, %v434
    %v436 = vrot.slane %v22, %v435
    %v438 = vunpack.c.l.s4 1966171168
    %v439 = vunpack.c.0.s8 %v438
    %v440 = vlaneseq
    %v441 = vshrl.u32 %v440, 7
    %v442 = vsub.s32 %v439, %v441
    %v443 = vrot.slane %v429, %v442
    %v444 = vcombine.high %v436, %v436
    %v445 = vcombine.high %v443, %v443
    %v447 = vunpack.c.l.s4 1966171168
    %v448 = vunpack.c.0.s8 %v447
    %v449 = vlaneseq
    %v450 = vshrl.u32 %v449, 7
    %v451 = vsub.s32 %v448, %v450
    %v452 = vrot.slane %v436, %v451
    %v454 = vunpack.c.l.s4 1966171168
    %v455 = vunpack.c.0.s8 %v454
    %v456 = vlaneseq
    %v457 = vshrl.u32 %v456, 7
    %v458 = vsub.s32 %v455, %v457
    %v459 = vrot.slane %v443, %v458
    %v461 = vunpack.c.l.s4 1966171168
    %v462 = vunpack.c.0.s8 %v461
    %v463 = vlaneseq
    %v464 = vshrl.u32 %v463, 7
    %v465 = vsub.s32 %v462, %v464
    %v466 = vrot.slane %v444, %v465
    %v468 = vunpack.c.l.s4 1966171168
    %v469 = vunpack.c.0.s8 %v468
    %v470 = vlaneseq
    %v471 = vshrl.u32 %v470, 7
    %v472 = vsub.s32 %v469, %v471
    %v473 = vrot.slane %v445, %v472
    %v474 = vcombine.high %v452, %v452
    %v475 = vcombine.high %v459, %v459
    %v476 = vcombine.high %v466, %v466
    %v477 = vcombine.high %v473, %v473
    %v478 = vcombine.high %v23, %v23
    %v480 = vunpack.c.l.s4 1966171168
    %v481 = vunpack.c.0.s8 %v480
    %v482 = vlaneseq
    %v483 = vshrl.u32 %v482, 7
    %v484 = vsub.s32 %v481, %v483
    %v485 = vrot.slane %v23, %v484
    %v487 = vunpack.c.l.s4 1966171168
    %v488 = vunpack.c.0.s8 %v487
    %v489 = vlaneseq
    %v490 = vshrl.u32 %v489, 7
    %v491 = vsub.s32 %v488, %v490
    %v492 = vrot.slane %v478, %v491
    %v493 = vcombine.high %v485, %v485
    %v494 = vcombine.high %v492, %v492
    %v496 = vunpack.c.l.s4 1966171168
    %v497 = vunpack.c.0.s8 %v496
    %v498 = vlaneseq
    %v499 = vshrl.u32 %v498, 7
    %v500 = vsub.s32 %v497, %v499
    %v501 = vrot.slane %v485, %v500
    %v503 = vunpack.c.l.s4 1966171168
    %v504 = vunpack.c.0.s8 %v503
    %v505 = vlaneseq
    %v506 = vshrl.u32 %v505, 7
    %v507 = vsub.s32 %v504, %v506
    %v508 = vrot.slane %v492, %v507
    %v510 = vunpack.c.l.s4 1966171168
    %v511 = vunpack.c.0.s8 %v510
    %v512 = vlaneseq
    %v513 = vshrl.u32 %v512, 7
    %v514 = vsub.s32 %v511, %v513
    %v515 = vrot.slane %v493, %v514
    %v517 = vunpack.c.l.s4 1966171168
    %v518 = vunpack.c.0.s8 %v517
    %v519 = vlaneseq
    %v520 = vshrl.u32 %v519, 7
    %v521 = vsub.s32 %v518, %v520
    %v522 = vrot.slane %v494, %v521
    %v523 = vcombine.high %v501, %v501
    %v524 = vcombine.high %v508, %v508
    %v525 = vcombine.high %v515, %v515
    %v526 = vcombine.high %v522, %v522
    %v527 = vcombine.high %v24, %v24
    %v529 = vunpack.c.l.s4 1966171168
    %v530 = vunpack.c.0.s8 %v529
    %v531 = vlaneseq
    %v532 = vshrl.u32 %v531, 7
    %v533 = vsub.s32 %v530, %v532
    %v534 = vrot.slane %v24, %v533
    %v536 = vunpack.c.l.s4 1966171168
    %v537 = vunpack.c.0.s8 %v536
    %v538 = vlaneseq
    %v539 = vshrl.u32 %v538, 7
    %v540 = vsub.s32 %v537, %v539
    %v541 = vrot.slane %v527, %v540
    %v542 = vcombine.high %v534, %v534
    %v543 = vcombine.high %v541, %v541
    %v545 = vunpack.c.l.s4 1966171168
    %v546 = vunpack.c.0.s8 %v545
    %v547 = vlaneseq
    %v548 = vshrl.u32 %v547, 7
    %v549 = vsub.s32 %v546, %v548
    %v550 = vrot.slane %v534, %v549
    %v552 = vunpack.c.l.s4 1966171168
    %v553 = vunpack.c.0.s8 %v552
    %v554 = vlaneseq
    %v555 = vshrl.u32 %v554, 7
    %v556 = vsub.s32 %v553, %v555
    %v557 = vrot.slane %v541, %v556
    %v559 = vunpack.c.l.s4 1966171168
    %v560 = vunpack.c.0.s8 %v559
    %v561 = vlaneseq
    %v562 = vshrl.u32 %v561, 7
    %v563 = vsub.s32 %v560, %v562
    %v564 = vrot.slane %v542, %v563
    %v566 = vunpack.c.l.s4 1966171168
    %v567 = vunpack.c.0.s8 %v566
    %v568 = vlaneseq
    %v569 = vshrl.u32 %v568, 7
    %v570 = vsub.s32 %v567, %v569
    %v571 = vrot.slane %v543, %v570
    %v572 = vcombine.high %v550, %v550
    %v573 = vcombine.high %v557, %v557
    %v574 = vcombine.high %v564, %v564
    %v575 = vcombine.high %v571, %v571
    %v577 = vunpack.c.l.s4 1966171168
    %v578 = vunpack.c.0.s8 %v577
    %v579 = vlaneseq
    %v580 = vshrl.u32 %v579, 7
    %v581 = vsub.s32 %v578, %v580
    %v582 = vrot.slane %v25, %v581
    %v584 = vunpack.c.l.s4 1966171168
    %v585 = vunpack.c.0.s8 %v584
    %v586 = vlaneseq
    %v587 = vshrl.u32 %v586, 7
    %v588 = vsub.s32 %v585, %v587
    %v589 = vrot.slane %v582, %v588
    %v1006 = vunpack.c.l.b16 %v26
    %v1007 = vunpack.c.l.b16 %v27
    %v1008 = vunpack.c.l.b16 %v28
    %v1009 = vunpack.c.l.b16 %v29
    %v1010 = vunpack.c.l.b16 %v30
    %v1011 = vunpack.c.l.b16 %v31
    %v1012 = vunpack.c.l.b16 %v32
    %v1013 = vunpack.c.l.b16 %v33
    %v1014 = vunpack.c.l.b16 %v34
    %v1015 = vunpack.c.l.b16 %v35
    %v1016 = vunpack.c.l.b16 %v36
    %v1017 = vunpack.c.l.b16 %v37
    %v1018 = vunpack.c.l.b16 %v38
    %v1019 = vunpack.c.l.b16 %v39
    %v1020 = vunpack.c.l.b16 %v40
    %v1021 = vunpack.c.l.b16 %v41
    %v1022 = vunpack.c.l.b16 %v42
    %v1023 = vunpack.c.l.b16 %v43
    %v1024 = vunpack.c.l.b16 %v44
    %v1025 = vunpack.c.l.b16 %v45
    %v1026 = vunpack.c.l.b16 %v46
    %v1027 = vunpack.c.l.b16 %v47
    %v1028 = vunpack.c.l.b16 %v48
    %v1029 = vunpack.c.l.b16 %v49
    %v1030 = vunpack.c.l.b16 %v50
    %v1031 = vunpack.c.l.b16 %v51
    %v1032 = vunpack.c.l.b16 %v52
    %v1033 = vunpack.c.l.b16 %v53
    %v1034 = vunpack.c.l.b16 %v54
    %v1035 = vunpack.c.l.b16 %v55
    %v1036 = vunpack.c.l.b16 %v56
    %v1037 = vunpack.c.l.b16 %v57
    %v1038 = vunpack.c.l.b16 %v58
    %v1039 = vunpack.c.l.b16 %v59
    %v1040 = vunpack.c.l.b16 %v60
    %v1041 = vunpack.c.l.b16 %v61
    %v1042 = vunpack.c.l.b16 %v62
    %v1043 = vunpack.c.l.b16 %v63
    %v1044 = vunpack.c.l.b16 %v64
    %v1045 = vunpack.c.l.b16 %v65
    %v1046 = vunpack.c.l.b16 %v66
    %v1047 = vunpack.c.l.b16 %v67
    %v1048 = vunpack.c.l.b16 %v68
    %v1049 = vunpack.c.l.b16 %v69
    %v1050 = vunpack.c.l.b16 %v70
    %v1051 = vunpack.c.l.b16 %v71
    %v1052 = vunpack.c.l.b16 %v72
    %v1053 = vunpack.c.l.b16 %v73
    %v1054 = vunpack.c.l.b16 %v74
    %v1055 = vunpack.c.l.b16 %v75
    %v1056 = vunpack.c.l.b16 %v76
    %v1057 = vunpack.c.l.b16 %v77
    %v1058 = vunpack.c.l.b16 %v78
    %v1059 = vunpack.c.l.b16 %v79
    %v1060 = vunpack.c.l.b16 %v80
    %v1061 = vunpack.c.l.b16 %v81
    %v1062 = vunpack.c.l.b16 %v82
    %v1063 = vunpack.c.l.b16 %v83
    %v1064 = vunpack.c.l.b16 %v84
    %v1065 = vunpack.c.l.b16 %v85
    %v1066 = vunpack.c.l.b16 %v86
    %v1067 = vunpack.c.l.b16 %v87
    %v1068 = vunpack.c.l.b16 %v88
    %v1069 = vunpack.c.l.b16 %v89
    %v1070 = vunpack.c.l.b16 %v90
    %v1071 = vunpack.c.l.b16 %v91
    %v1072 = vunpack.c.l.b16 %v92
    %v1073 = vunpack.c.l.b16 %v93
    %v1074 = vunpack.c.l.b16 %v94
    %v1075 = vunpack.c.l.b16 %v95
    %v1076 = vunpack.c.l.b16 %v96
    %v1077 = vunpack.c.l.b16 %v97
    %v1078 = vunpack.c.l.b16 %v98
    %v1079 = vunpack.c.l.b16 %v99
    %v1080 = vunpack.c.l.b16 %v100
    %v1081 = vunpack.c.l.b16 %v101
    %v1082 = vunpack.c.l.b16 %v102
    %v1083 = vunpack.c.l.b16 %v103
    %v1084 = vunpack.c.l.b16 %v104
    %v1085 = vunpack.c.l.b16 %v105
    %v1086 = vunpack.c.l.b16 %v106
    %v1087 = vunpack.c.l.b16 %v107
    %v1088 = vunpack.c.l.b16 %v108
    %v1089 = vunpack.c.l.b16 %v109
    %v1090 = vunpack.c.l.b16 %v110
    %v1091 = vunpack.c.l.b16 %v111
    %v1092 = vunpack.c.l.b16 %v112
    %v1093 = vunpack.c.l.b16 %v113
    %v1094 = vunpack.c.l.b16 %v114
    %v1095 = vunpack.c.l.b16 %v115
    %v1096 = vunpack.c.l.b16 %v116
    %v1097 = vunpack.c.l.b16 %v117
    %v1098 = vunpack.c.l.b16 %v118
    %v1099 = vunpack.c.l.b16 %v119
    %v1100 = vunpack.c.l.b16 %v120
    %v1101 = vunpack.c.l.b16 %v121
    %v1102 = vunpack.c.l.b16 %v122
    %v1103 = vunpack.c.l.b16 %v123
    %v1104 = vunpack.c.l.b16 %v124
    %v1105 = vunpack.c.l.b16 %v125
    %v1106 = vunpack.c.l.b16 %v126
    %v1107 = vunpack.c.l.b16 %v127
    %v1108 = vunpack.c.l.b16 %v128
    %v1109 = vunpack.c.l.b16 %v129
    %v1110 = vunpack.c.l.b16 %v130
    %v1111 = vunpack.c.l.b16 %v131
    %v1112 = vunpack.c.l.b16 %v132
    %v1113 = vunpack.c.l.b16 %v133
    %v1114 = vunpack.c.l.b16 %v134
    %v1115 = vunpack.c.l.b16 %v135
    %v1116 = vunpack.c.l.b16 %v136
    %v1117 = vunpack.c.l.b16 %v137
    %v1118 = vunpack.c.l.b16 %v138
    %v1119 = vunpack.c.l.b16 %v139
    %v1120 = vunpack.c.l.b16 %v140
    %v1121 = vunpack.c.l.b16 %v141
    %v1122 = vunpack.c.l.b16 %v142
    %v1123 = vunpack.c.l.b16 %v143
    %v1124 = vunpack.c.l.b16 %v144
    %v1125 = vunpack.c.l.b16 %v145
    %v1126 = vunpack.c.l.b16 %v146
    %v1127 = vunpack.c.l.b16 %v147
    %v1128 = vunpack.c.l.b16 %v148
    %v1129 = vunpack.c.l.b16 %v149
    %v1130 = vunpack.c.l.b16 %v150
    %v1131 = vunpack.c.l.b16 %v151
    %v1132 = vunpack.c.l.b16 %v152
    %v1133 = vunpack.c.l.b16 %v153
    %v1134 = vunpack.c.l.b16 %v154
    %v1135 = vunpack.c.l.b16 %v155
    %v1136 = vunpack.c.l.b16 %v156
    %v1137 = vunpack.c.l.b16 %v157
    %v1138 = vunpack.c.l.b16 %v158
    %v1139 = vunpack.c.l.b16 %v159
    %v1140 = vunpack.c.l.b16 %v160
    %v1141 = vunpack.c.l.b16 %v161
    %v1142 = vunpack.c.l.b16 %v162
    %v1143 = vunpack.c.l.b16 %v163
    %v1144 = vunpack.c.l.b16 %v164
    %v1145 = vunpack.c.l.b16 %v165
    %v1146 = vunpack.c.l.b16 %v166
    %v1147 = vunpack.c.l.b16 %v167
    %v1148 = vunpack.c.l.b16 %v168
    %v1149 = vunpack.c.l.b16 %v169
    %v1150 = vunpack.c.l.b16 %v170
    %v1151 = vunpack.c.l.b16 %v171
    %v1152 = vunpack.c.l.b16 %v172
    %v1153 = vunpack.c.l.b16 %v173
    %v1154 = vunpack.c.l.b16 %v174
    %v1155 = vunpack.c.l.b16 %v175
    %v1156 = vunpack.c.l.b16 %v176
    %v1157 = vunpack.c.l.b16 %v177
    %v1158 = vunpack.c.l.b16 %v178
    %v1159 = vunpack.c.l.b16 %v179
    %v1160 = vunpack.c.l.b16 %v180
    %v1161 = vunpack.c.l.b16 %v181
    %v1162 = vunpack.c.l.b16 %v182
    %v1163 = vunpack.c.l.b16 %v183
    %v1164 = vunpack.c.l.b16 %v184
    %v1165 = vunpack.c.l.b16 %v185
    %v1166 = vunpack.c.l.b16 %v186
    %v1167 = vunpack.c.l.b16 %v187
    %v1168 = vunpack.c.l.b16 %v188
    %v1169 = vunpack.c.l.b16 %v189
    %v1170 = vunpack.c.l.b16 %v190
    %v1171 = vunpack.c.l.b16 %v191
    %v1172 = vunpack.c.l.b16 %v192
    %v1173 = vunpack.c.l.b16 %v193
    %v1174 = vunpack.c.l.b16 %v194
    %v1175 = vunpack.c.l.b16 %v195
    %v1176 = vunpack.c.l.b16 %v196
    %v1177 = vunpack.c.l.b16 %v197
    %v1178 = vunpack.c.l.b16 %v198
    %v1179 = vunpack.c.l.b16 %v199
    %v1180 = vunpack.c.l.b16 %v200
    %v1181 = vunpack.c.l.b16 %v201
    %v1182 = vunpack.c.l.b16 %v202
    %v1183 = vunpack.c.l.b16 %v203
    %v1184 = vunpack.c.l.b16 %v204
    %v1185 = vunpack.c.l.b16 %v205
    %v1186 = vunpack.c.l.b16 %v206
    %v1187 = vunpack.c.l.b16 %v207
    %v1188 = vunpack.c.l.b16 %v208
    %v1189 = vunpack.c.l.b16 %v209
    %v1190 = vunpack.c.l.b16 %v210
    %v1191 = vunpack.c.l.b16 %v211
    %v1192 = vunpack.c.l.b16 %v212
    %v1193 = vunpack.c.l.b16 %v213
    %v1194 = vunpack.c.l.b16 %v214
    %v1195 = vunpack.c.l.b16 %v215
    %v1196 = vunpack.c.l.b16 %v216
    %v1197 = vunpack.c.l.b16 %v217
    %v1198 = vunpack.c.l.b16 %v218
    %v1199 = vunpack.c.l.b16 %v219
    %v1200 = vunpack.c.l.b16 %v220
    %v1201 = vunpack.c.l.b16 %v221
    %v1202 = vunpack.c.l.b16 %v222
    %v1203 = vunpack.c.l.b16 %v223
    %v1204 = vunpack.c.l.b16 %v224
    %v1205 = vunpack.c.l.b16 %v225
    %v1206 = vunpack.c.l.b16 %v226
    %v1207 = vunpack.c.l.b16 %v227
    %v1208 = vunpack.c.l.b16 %v228
    %v1209 = vunpack.c.l.b16 %v229
    %v1210 = vunpack.c.l.b16 %v230
    %v1211 = vunpack.c.l.b16 %v231
    %v1212 = vunpack.c.l.b16 %v232
    %v1213 = vunpack.c.l.b16 %v233
    %v1214 = vunpack.c.l.b16 %v234
    %v1215 = vunpack.c.l.b16 %v235
    %v1216 = vunpack.c.l.b16 %v236
    %v1217 = vunpack.c.l.b16 %v237
    %v1218 = vunpack.c.l.b16 %v238
    %v1219 = vunpack.c.l.b16 %v239
    %v1220 = vunpack.c.l.b16 %v240
    %v1221 = vunpack.c.l.b16 %v241
    %v1222 = vunpack.c.l.b16 %v242
    %v1223 = vunpack.c.l.b16 %v243
    %v1224 = vunpack.c.l.b16 %v244
    %v1225 = vunpack.c.l.b16 %v245
    %v1226 = vunpack.c.l.b16 %v246
    %v1227 = vunpack.c.l.b16 %v247
    %v1228 = vunpack.c.l.b16 %v248
    %v1229 = vunpack.c.l.b16 %v249
    %v1230 = vunpack.c.l.b16 %v250
    %v1231 = vunpack.c.l.b16 %v251
    %v1232 = vunpack.c.l.b16 %v252
    %v1233 = vunpack.c.l.b16 %v253
    %v1234 = vunpack.c.l.b16 %v254
    %v1235 = vunpack.c.l.b16 %v255
    %v1236 = vunpack.c.l.b16 %v256
    %v1237 = vunpack.c.l.b16 %v257
    %v1238 = vunpack.c.l.b16 %v258
    %v1239 = vunpack.c.l.b16 %v259
    %v1240 = vunpack.c.l.b16 %v260
    %v1241 = vunpack.c.l.b16 %v261
    %v1242 = vunpack.c.l.b16 %v262
    %v1243 = vunpack.c.l.b16 %v263
    %v1244 = vunpack.c.l.b16 %v264
    %v1245 = vunpack.c.l.b16 %v265
    %v1246 = vunpack.c.l.b16 %v266
    %v1247 = vunpack.c.l.b16 %v267
    %v1248 = vunpack.c.l.b16 %v268
    %v1249 = vunpack.c.l.b16 %v269
    %v1250 = vunpack.c.l.b16 %v270
    %v1251 = vunpack.c.l.b16 %v271
    %v1252 = vunpack.c.l.b16 %v272
    %v1253 = vunpack.c.l.b16 %v273
    %v1254 = vunpack.c.l.b16 %v274
    %v1255 = vunpack.c.l.b16 %v275
    %v1256 = vunpack.c.l.b16 %v276
    %v1257 = vunpack.c.l.b16 %v277
    %v1258 = vunpack.c.l.b16 %v278
    %v1259 = vunpack.c.l.b16 %v279
    %v1260 = vunpack.c.l.b16 %v280
    %v1261 = vunpack.c.l.b16 %v281
    %v1262 = vunpack.c.l.b16 %v282
    %v1263 = vunpack.c.l.b16 %v283
    %v1264 = vunpack.c.l.b16 %v284
    %v1265 = vunpack.c.l.b16 %v285
    %v1266 = vunpack.c.l.b16 %v286
    %v1267 = vunpack.c.l.b16 %v287
    %v1268 = vunpack.c.l.b16 %v288
    %v1269 = vunpack.c.l.b16 %v289
    %v1270 = vunpack.c.l.b16 %v290
    %v1271 = vunpack.c.l.b16 %v291
    %v1272 = vunpack.c.l.b16 %v292
    %v1273 = vunpack.c.l.b16 %v293
    %v1274 = vunpack.c.l.b16 %v294
    %v1275 = vunpack.c.l.b16 %v295
    %v1276 = vunpack.c.l.b16 %v296
    %v1277 = vunpack.c.l.b16 %v297
    %v1278 = vunpack.c.l.b16 %v298
    %v1279 = vunpack.c.l.b16 %v299
    %v1280 = vunpack.c.l.b16 %v300
    %v1281 = vunpack.c.l.b16 %v301
    %v1282 = vunpack.c.l.b16 %v302
    %v1283 = vunpack.c.l.b16 %v303
    %v1284 = vunpack.c.l.b16 %v304
    %v1285 = vunpack.c.l.b16 %v305
    %v1286 = vunpack.c.l.b16 %v306
    %v1287 = vunpack.c.l.b16 %v307
    %v1288 = vunpack.c.l.b16 %v308
    %v1289 = vunpack.c.l.b16 %v309
    %v1290 = vunpack.c.l.b16 %v310
    %v1291 = vunpack.c.l.b16 %v311
    %v1292 = vunpack.c.l.b16 %v312
    %v1293 = vunpack.c.l.b16 %v313
    %v1294 = vunpack.c.l.b16 %v314
    %v1295 = vunpack.c.l.b16 %v315
    %v1296 = vunpack.c.l.b16 %v316
    %v1297 = vunpack.c.l.b16 %v317
    %v1298 = vunpack.c.l.b16 %v318
    %v1299 = vunpack.c.l.b16 %v319
    %v1300 = vunpack.c.l.b16 %v320
    %v1301 = vunpack.c.l.b16 %v321
    %v1302 = vunpack.c.l.b16 %v322
    %v1303 = vunpack.c.l.b16 %v323
    %v1304 = vunpack.c.l.b16 %v324
    %v1305 = vunpack.c.l.b16 %v325
    %v1306 = vunpack.c.l.b16 %v326
    %v1307 = vunpack.c.l.b16 %v327
    %v1308 = vunpack.c.l.b16 %v328
    %v1309 = vunpack.c.l.b16 %v329
    %v1310 = vunpack.c.l.b16 %v330
    %v1311 = vunpack.c.l.b16 %v331
    %v1312 = vunpack.c.l.b16 %v332
    %v1313 = vunpack.c.l.b16 %v333
    %v1314 = vunpack.c.l.b16 %v334
    %v1315 = vunpack.c.l.b16 %v335
    %v1316 = vunpack.c.l.b16 %v336
    %v1317 = vunpack.c.l.b16 %v337
    %v1318 = vunpack.c.l.b16 %v338
    %v1319 = vunpack.c.l.b16 %v339
    %v1320 = vunpack.c.l.b16 %v340
    %v1321 = vunpack.c.l.b16 %v341
    %v1322 = vunpack.c.l.b16 %v342
    %v1323 = vunpack.c.l.b16 %v343
    %v1324 = vunpack.c.l.b16 %v344
    %v1325 = vunpack.c.l.b16 %v345
    %v1326 = vunpack.c.l.b16 %v346
    %v1327 = vunpack.c.l.b16 %v347
    %v1328 = vunpack.c.l.b16 %v348
    %v1329 = vunpack.c.l.b16 %v349
    %v1330 = vunpack.c.l.b16 %v350
    %v1331 = vunpack.c.l.b16 %v351
    %v1332 = vunpack.c.l.b16 %v352
    %v1333 = vunpack.c.l.b16 %v353
    %v1334 = vunpack.c.l.b16 %v354
    %v1335 = vunpack.c.l.b16 %v355
    %v1336 = vunpack.c.l.b16 %v356
    %v1337 = vunpack.c.l.b16 %v357
    %v1338 = vunpack.c.l.b16 %v358
    %v1339 = vunpack.c.l.b16 %v359
    %v1340 = vunpack.c.l.b16 %v360
    %v1341 = vunpack.c.l.b16 %v361
    %v1342 = vunpack.c.l.b16 %v362
    %v1343 = vunpack.c.l.b16 %v363
    %v1344 = vunpack.c.l.b16 %v364
    %v1345 = vunpack.c.l.b16 %v365
    %v1346 = vunpack.c.l.b16 %v366
    %v1347 = vunpack.c.l.b16 %v367
    %v1348 = vunpack.c.l.b16 %v368
    %v1349 = vunpack.c.l.b16 %v369
    %v1350 = vunpack.c.l.b16 %v370
    %v1351 = vunpack.c.l.b16 %v371
    %v1352 = vunpack.c.l.b16 %v372
    %v1353 = vunpack.c.l.b16 %v373
    %v1354 = vunpack.c.l.b16 %v374
    %v1355 = vunpack.c.l.b16 %v375
    %v1356 = vunpack.c.l.b16 %v376
    %v1357 = vunpack.c.l.b16 %v377
    %v1358 = vunpack.c.l.b16 %v378
    %v1359 = vunpack.c.l.b16 %v379
    %v1360 = vunpack.c.l.b16 %v380
    %v1361 = vunpack.c.l.b16 %v381
    %v1362 = vunpack.c.l.b16 %v382
    %v1363 = vunpack.c.l.b16 %v383
    %v1364 = vunpack.c.l.b16 %v384
    %v1365 = vunpack.c.l.b16 %v385
    %v1366 = vunpack.c.l.b16 %v386
    %v1367 = vunpack.c.l.b16 %v387
    %v1368 = vunpack.c.l.b16 %v388
    %v1369 = vunpack.c.l.b16 %v389
    %v1370 = vunpack.c.l.b16 %v390
    %v1371 = vunpack.c.l.b16 %v391
    %v1372 = vunpack.c.l.b16 %v392
    %v1373 = vunpack.c.l.b16 %v393
    %v1374 = vunpack.c.l.b16 %v394
    %v1375 = vunpack.c.l.b16 %v395
    %v1376 = vunpack.c.l.b16 %v396
    %v1377 = vunpack.c.l.b16 %v397
    %v1378 = vunpack.c.l.b16 %v398
    %v1379 = vunpack.c.l.b16 %v399
    %v1380 = vunpack.c.l.b16 %v400
    %v1381 = vunpack.c.l.b16 %v401
    %v1382 = vunpack.c.l.b16 %v402
    %v1383 = vunpack.c.l.b16 %v403
    %v1384 = vunpack.c.l.b16 %v404
    %v1385 = vunpack.c.l.b16 %v405
    %v1386 = vunpack.c.l.b16 %v406
    %v1387 = vunpack.c.l.b16 %v407
    %v1388 = vunpack.c.l.b16 %v408
    %v1389 = vunpack.c.l.b16 %v409
    %v1390 = vunpack.c.l.b16 %v410
    %v1391 = vunpack.c.l.b16 %v411
    %v1392 = vunpack.c.l.b16 %v412
    %v1393 = vunpack.c.l.b16 %v413
    %v1394 = vunpack.c.l.b16 %v414
    %v1395 = vunpack.c.l.b16 %v415
    %v1396 = vunpack.c.l.b16 %v416
    %v1397 = vunpack.c.l.b16 %v417
    %v1398 = vpack.c.b16 %v1007, %v1006
    %v1399 = vpack.c.b16 %v1009, %v1008
    %v1400 = vpack.c.b16 %v1011, %v1010
    %v1401 = vpack.c.b16 %v1013, %v1012
    %v1402 = vpack.c.b16 %v1015, %v1014
    %v1403 = vpack.c.b16 %v1017, %v1016
    %v1404 = vpack.c.b16 %v1019, %v1018
    %v1405 = vpack.c.b16 %v1021, %v1020
    %v1406 = vpack.c.b16 %v1023, %v1022
    %v1407 = vpack.c.b16 %v1025, %v1024
    %v1408 = vpack.c.b16 %v1027, %v1026
    %v1409 = vpack.c.b16 %v1029, %v1028
    %v1410 = vpack.c.b16 %v1031, %v1030
    %v1411 = vpack.c.b16 %v1033, %v1032
    %v1412 = vpack.c.b16 %v1035, %v1034
    %v1413 = vpack.c.b16 %v1037, %v1036
    %v1414 = vpack.c.b16 %v1039, %v1038
    %v1415 = vpack.c.b16 %v1041, %v1040
    %v1416 = vpack.c.b16 %v1043, %v1042
    %v1417 = vpack.c.b16 %v1045, %v1044
    %v1418 = vpack.c.b16 %v1047, %v1046
    %v1419 = vpack.c.b16 %v1049, %v1048
    %v1420 = vpack.c.b16 %v1051, %v1050
    %v1421 = vpack.c.b16 %v1053, %v1052
    %v1422 = vpack.c.b16 %v1055, %v1054
    %v1423 = vpack.c.b16 %v1057, %v1056
    %v1424 = vpack.c.b16 %v1059, %v1058
    %v1425 = vpack.c.b16 %v1061, %v1060
    %v1426 = vpack.c.b16 %v1063, %v1062
    %v1427 = vpack.c.b16 %v1065, %v1064
    %v1428 = vpack.c.b16 %v1067, %v1066
    %v1429 = vpack.c.b16 %v1069, %v1068
    %v1430 = vpack.c.b16 %v1071, %v1070
    %v1431 = vpack.c.b16 %v1073, %v1072
    %v1432 = vpack.c.b16 %v1075, %v1074
    %v1433 = vpack.c.b16 %v1077, %v1076
    %v1434 = vpack.c.b16 %v1079, %v1078
    %v1435 = vpack.c.b16 %v1081, %v1080
    %v1436 = vpack.c.b16 %v1083, %v1082
    %v1437 = vpack.c.b16 %v1085, %v1084
    %v1438 = vpack.c.b16 %v1087, %v1086
    %v1439 = vpack.c.b16 %v1089, %v1088
    %v1440 = vpack.c.b16 %v1091, %v1090
    %v1441 = vpack.c.b16 %v1093, %v1092
    %v1442 = vpack.c.b16 %v1095, %v1094
    %v1443 = vpack.c.b16 %v1097, %v1096
    %v1444 = vpack.c.b16 %v1099, %v1098
    %v1445 = vpack.c.b16 %v1101, %v1100
    %v1446 = vpack.c.b16 %v1103, %v1102
    %v1447 = vpack.c.b16 %v1105, %v1104
    %v1448 = vpack.c.b16 %v1107, %v1106
    %v1449 = vpack.c.b16 %v1109, %v1108
    %v1450 = vpack.c.b16 %v1111, %v1110
    %v1451 = vpack.c.b16 %v1113, %v1112
    %v1452 = vpack.c.b16 %v1115, %v1114
    %v1453 = vpack.c.b16 %v1117, %v1116
    %v1454 = vpack.c.b16 %v1119, %v1118
    %v1455 = vpack.c.b16 %v1121, %v1120
    %v1456 = vpack.c.b16 %v1123, %v1122
    %v1457 = vpack.c.b16 %v1125, %v1124
    %v1458 = vpack.c.b16 %v1127, %v1126
    %v1459 = vpack.c.b16 %v1129, %v1128
    %v1460 = vpack.c.b16 %v1131, %v1130
    %v1461 = vpack.c.b16 %v1133, %v1132
    %v1462 = vpack.c.b16 %v1135, %v1134
    %v1463 = vpack.c.b16 %v1137, %v1136
    %v1464 = vpack.c.b16 %v1139, %v1138
    %v1465 = vpack.c.b16 %v1141, %v1140
    %v1466 = vpack.c.b16 %v1143, %v1142
    %v1467 = vpack.c.b16 %v1145, %v1144
    %v1468 = vpack.c.b16 %v1147, %v1146
    %v1469 = vpack.c.b16 %v1149, %v1148
    %v1470 = vpack.c.b16 %v1151, %v1150
    %v1471 = vpack.c.b16 %v1153, %v1152
    %v1472 = vpack.c.b16 %v1155, %v1154
    %v1473 = vpack.c.b16 %v1157, %v1156
    %v1474 = vpack.c.b16 %v1159, %v1158
    %v1475 = vpack.c.b16 %v1161, %v1160
    %v1476 = vpack.c.b16 %v1163, %v1162
    %v1477 = vpack.c.b16 %v1165, %v1164
    %v1478 = vpack.c.b16 %v1167, %v1166
    %v1479 = vpack.c.b16 %v1169, %v1168
    %v1480 = vpack.c.b16 %v1171, %v1170
    %v1481 = vpack.c.b16 %v1173, %v1172
    %v1482 = vpack.c.b16 %v1175, %v1174
    %v1483 = vpack.c.b16 %v1177, %v1176
    %v1484 = vpack.c.b16 %v1179, %v1178
    %v1485 = vpack.c.b16 %v1181, %v1180
    %v1486 = vpack.c.b16 %v1183, %v1182
    %v1487 = vpack.c.b16 %v1185, %v1184
    %v1488 = vpack.c.b16 %v1187, %v1186
    %v1489 = vpack.c.b16 %v1189, %v1188
    %v1490 = vpack.c.b16 %v1191, %v1190
    %v1491 = vpack.c.b16 %v1193, %v1192
    %v1492 = vpack.c.b16 %v1195, %v1194
    %v1493 = vpack.c.b16 %v1197, %v1196
    %v1494 = vpack.c.b16 %v1199, %v1198
    %v1495 = vpack.c.b16 %v1201, %v1200
    %v1496 = vpack.c.b16 %v1203, %v1202
    %v1497 = vpack.c.b16 %v1205, %v1204
    %v1498 = vpack.c.b16 %v1207, %v1206
    %v1499 = vpack.c.b16 %v1209, %v1208
    %v1500 = vpack.c.b16 %v1211, %v1210
    %v1501 = vpack.c.b16 %v1213, %v1212
    %v1502 = vpack.c.b16 %v1215, %v1214
    %v1503 = vpack.c.b16 %v1217, %v1216
    %v1504 = vpack.c.b16 %v1219, %v1218
    %v1505 = vpack.c.b16 %v1221, %v1220
    %v1506 = vpack.c.b16 %v1223, %v1222
    %v1507 = vpack.c.b16 %v1225, %v1224
    %v1508 = vpack.c.b16 %v1227, %v1226
    %v1509 = vpack.c.b16 %v1229, %v1228
    %v1510 = vpack.c.b16 %v1231, %v1230
    %v1511 = vpack.c.b16 %v1233, %v1232
    %v1512 = vpack.c.b16 %v1235, %v1234
    %v1513 = vpack.c.b16 %v1237, %v1236
    %v1514 = vpack.c.b16 %v1239, %v1238
    %v1515 = vpack.c.b16 %v1241, %v1240
    %v1516 = vpack.c.b16 %v1243, %v1242
    %v1517 = vpack.c.b16 %v1245, %v1244
    %v1518 = vpack.c.b16 %v1247, %v1246
    %v1519 = vpack.c.b16 %v1249, %v1248
    %v1520 = vpack.c.b16 %v1251, %v1250
    %v1521 = vpack.c.b16 %v1253, %v1252
    %v1522 = vpack.c.b16 %v1255, %v1254
    %v1523 = vpack.c.b16 %v1257, %v1256
    %v1524 = vpack.c.b16 %v1259, %v1258
    %v1525 = vpack.c.b16 %v1261, %v1260
    %v1526 = vpack.c.b16 %v1263, %v1262
    %v1527 = vpack.c.b16 %v1265, %v1264
    %v1528 = vpack.c.b16 %v1267, %v1266
    %v1529 = vpack.c.b16 %v1269, %v1268
    %v1530 = vpack.c.b16 %v1271, %v1270
    %v1531 = vpack.c.b16 %v1273, %v1272
    %v1532 = vpack.c.b16 %v1275, %v1274
    %v1533 = vpack.c.b16 %v1277, %v1276
    %v1534 = vpack.c.b16 %v1279, %v1278
    %v1535 = vpack.c.b16 %v1281, %v1280
    %v1536 = vpack.c.b16 %v1283, %v1282
    %v1537 = vpack.c.b16 %v1285, %v1284
    %v1538 = vpack.c.b16 %v1287, %v1286
    %v1539 = vpack.c.b16 %v1289, %v1288
    %v1540 = vpack.c.b16 %v1291, %v1290
    %v1541 = vpack.c.b16 %v1293, %v1292
    %v1542 = vpack.c.b16 %v1295, %v1294
    %v1543 = vpack.c.b16 %v1297, %v1296
    %v1544 = vpack.c.b16 %v1299, %v1298
    %v1545 = vpack.c.b16 %v1301, %v1300
    %v1546 = vpack.c.b16 %v1303, %v1302
    %v1547 = vpack.c.b16 %v1305, %v1304
    %v1548 = vpack.c.b16 %v1307, %v1306
    %v1549 = vpack.c.b16 %v1309, %v1308
    %v1550 = vpack.c.b16 %v1311, %v1310
    %v1551 = vpack.c.b16 %v1313, %v1312
    %v1552 = vpack.c.b16 %v1315, %v1314
    %v1553 = vpack.c.b16 %v1317, %v1316
    %v1554 = vpack.c.b16 %v1319, %v1318
    %v1555 = vpack.c.b16 %v1321, %v1320
    %v1556 = vpack.c.b16 %v1323, %v1322
    %v1557 = vpack.c.b16 %v1325, %v1324
    %v1558 = vpack.c.b16 %v1327, %v1326
    %v1559 = vpack.c.b16 %v1329, %v1328
    %v1560 = vpack.c.b16 %v1331, %v1330
    %v1561 = vpack.c.b16 %v1333, %v1332
    %v1562 = vpack.c.b16 %v1335, %v1334
    %v1563 = vpack.c.b16 %v1337, %v1336
    %v1564 = vpack.c.b16 %v1339, %v1338
    %v1565 = vpack.c.b16 %v1341, %v1340
    %v1566 = vpack.c.b16 %v1343, %v1342
    %v1567 = vpack.c.b16 %v1345, %v1344
    %v1568 = vpack.c.b16 %v1347, %v1346
    %v1569 = vpack.c.b16 %v1349, %v1348
    %v1570 = vpack.c.b16 %v1351, %v1350
    %v1571 = vpack.c.b16 %v1353, %v1352
    %v1572 = vpack.c.b16 %v1355, %v1354
    %v1573 = vpack.c.b16 %v1357, %v1356
    %v1574 = vpack.c.b16 %v1359, %v1358
    %v1575 = vpack.c.b16 %v1361, %v1360
    %v1576 = vpack.c.b16 %v1363, %v1362
    %v1577 = vpack.c.b16 %v1365, %v1364
    %v1578 = vpack.c.b16 %v1367, %v1366
    %v1579 = vpack.c.b16 %v1369, %v1368
    %v1580 = vpack.c.b16 %v1371, %v1370
    %v1581 = vpack.c.b16 %v1373, %v1372
    %v1582 = vpack.c.b16 %v1375, %v1374
    %v1583 = vpack.c.b16 %v1377, %v1376
    %v1584 = vpack.c.b16 %v1379, %v1378
    %v1585 = vpack.c.b16 %v1381, %v1380
    %v1586 = vpack.c.b16 %v1383, %v1382
    %v1587 = vpack.c.b16 %v1385, %v1384
    %v1588 = vpack.c.b16 %v1387, %v1386
    %v1589 = vpack.c.b16 %v1389, %v1388
    %v1590 = vpack.c.b16 %v1391, %v1390
    %v1591 = vpack.c.b16 %v1393, %v1392
    %v1592 = vpack.c.b16 %v1395, %v1394
    %v1593 = vpack.c.b16 %v1397, %v1396
    %vm1790 = vcmask 523264
    %v1792 = vsel %vm1790, %v589, 0
    %1794 = vmatprep.subr.bf16.mxu0 0
    %1795 = vmatpush1.bf16.msra.mxu0 %v1405
    %1796 = vmatprep.subr.bf16.mxu0 0
    %1797 = vmatpush1.bf16.msra.mxu0 %v1404
    %1798 = vmatprep.subr.bf16.mxu0 0
    %1799 = vmatpush1.bf16.msra.mxu0 %v1403
    %1800 = vmatprep.subr.bf16.mxu0 0
    %1801 = vmatpush1.bf16.msra.mxu0 %v1402
    %1802 = vmatprep.subr.bf16.mxu0 0
    %1803 = vmatpush1.bf16.msra.mxu0 %v1401
    %1804 = vmatprep.subr.bf16.mxu0 0
    %1805 = vmatpush1.bf16.msra.mxu0 %v1400
    %1806 = vmatprep.subr.bf16.mxu0 0
    %1807 = vmatpush1.bf16.msra.mxu0 %v1399
    %1808 = vmatprep.subr.bf16.mxu0 0
    %1809 = vmatpush1.bf16.msra.mxu0 %v1398
    %1810 = vmatprep.subr.bf16.mxu0 0
    %1811 = vmatpush2.bf16.msra.mxu0 %v1413
    %1812 = vmatprep.subr.bf16.mxu0 0
    %1813 = vmatpush2.bf16.msra.mxu0 %v1412
    %1814 = vmatprep.subr.bf16.mxu0 0
    %1815 = vmatpush2.bf16.msra.mxu0 %v1411
    %1816 = vmatprep.subr.bf16.mxu0 0
    %1817 = vmatpush2.bf16.msra.mxu0 %v1410
    %1818 = vmatprep.subr.bf16.mxu0 0
    %1819 = vmatpush2.bf16.msra.mxu0 %v1409
    %1820 = vmatprep.subr.bf16.mxu0 0
    %1821 = vmatpush2.bf16.msra.mxu0 %v1408
    %1822 = vmatprep.subr.bf16.mxu0 0
    %1823 = vmatpush2.bf16.msra.mxu0 %v1407
    %1824 = vmatprep.subr.bf16.mxu0 0
    %1825 = vmatpush2.bf16.msra.mxu0 %v1406
    %1826 = vmatprep.mubr.bf16.mxu0 %v466
    %1827 = vmatmul.mubr.bf16.gmra.mxu0 %v452
    %v1828 = vpop.f32.mrf.mxu0
    %v1829 = vadd.f32 %v423, %v1828
    %v1830 = vpop.f32.mrf.mxu0
    %v1831 = vpop.f32.mrf.mxu0
    %v1832 = vpop.f32.mrf.mxu0
    %1833 = vdwg.mxu0
    %1834 = vmatprep.subr.bf16.mxu0 0
    %1835 = vmatpush1.bf16.msra.mxu0 %v1421
    %1836 = vmatprep.subr.bf16.mxu0 0
    %1837 = vmatpush1.bf16.msra.mxu0 %v1420
    %1838 = vmatprep.subr.bf16.mxu0 0
    %1839 = vmatpush1.bf16.msra.mxu0 %v1419
    %1840 = vmatprep.subr.bf16.mxu0 0
    %1841 = vmatpush1.bf16.msra.mxu0 %v1418
    %1842 = vmatprep.subr.bf16.mxu0 0
    %1843 = vmatpush1.bf16.msra.mxu0 %v1417
    %1844 = vmatprep.subr.bf16.mxu0 0
    %1845 = vmatpush1.bf16.msra.mxu0 %v1416
    %1846 = vmatprep.subr.bf16.mxu0 0
    %1847 = vmatpush1.bf16.msra.mxu0 %v1415
    %1848 = vmatprep.subr.bf16.mxu0 0
    %1849 = vmatpush1.bf16.msra.mxu0 %v1414
    %1850 = vmatprep.subr.bf16.mxu0 0
    %1851 = vmatpush2.bf16.msra.mxu0 %v1429
    %1852 = vmatprep.subr.bf16.mxu0 0
    %1853 = vmatpush2.bf16.msra.mxu0 %v1428
    %1854 = vmatprep.subr.bf16.mxu0 0
    %1855 = vmatpush2.bf16.msra.mxu0 %v1427
    %1856 = vmatprep.subr.bf16.mxu0 0
    %1857 = vmatpush2.bf16.msra.mxu0 %v1426
    %1858 = vmatprep.subr.bf16.mxu0 0
    %1859 = vmatpush2.bf16.msra.mxu0 %v1425
    %1860 = vmatprep.subr.bf16.mxu0 0
    %1861 = vmatpush2.bf16.msra.mxu0 %v1424
    %1862 = vmatprep.subr.bf16.mxu0 0
    %1863 = vmatpush2.bf16.msra.mxu0 %v1423
    %1864 = vmatprep.subr.bf16.mxu0 0
    %1865 = vmatpush2.bf16.msra.mxu0 %v1422
    %1866 = vmatprep.mubr.bf16.mxu0 %v476
    %1867 = vmatmul.mubr.bf16.gmra.mxu0 %v474
    %v1868 = vpop.f32.mrf.mxu0
    %v1869 = vadd.f32 %v1829, %v1868
    %v1870 = vpop.f32.mrf.mxu0
    %v1871 = vpop.f32.mrf.mxu0
    %v1872 = vpop.f32.mrf.mxu0
    %1873 = vdwg.mxu0
    %1874 = vmatprep.subr.bf16.mxu0 0
    %1875 = vmatpush1.bf16.msra.mxu0 %v1437
    %1876 = vmatprep.subr.bf16.mxu0 0
    %1877 = vmatpush1.bf16.msra.mxu0 %v1436
    %1878 = vmatprep.subr.bf16.mxu0 0
    %1879 = vmatpush1.bf16.msra.mxu0 %v1435
    %1880 = vmatprep.subr.bf16.mxu0 0
    %1881 = vmatpush1.bf16.msra.mxu0 %v1434
    %1882 = vmatprep.subr.bf16.mxu0 0
    %1883 = vmatpush1.bf16.msra.mxu0 %v1433
    %1884 = vmatprep.subr.bf16.mxu0 0
    %1885 = vmatpush1.bf16.msra.mxu0 %v1432
    %1886 = vmatprep.subr.bf16.mxu0 0
    %1887 = vmatpush1.bf16.msra.mxu0 %v1431
    %1888 = vmatprep.subr.bf16.mxu0 0
    %1889 = vmatpush1.bf16.msra.mxu0 %v1430
    %1890 = vmatprep.subr.bf16.mxu0 0
    %1891 = vmatpush2.bf16.msra.mxu0 %v1445
    %1892 = vmatprep.subr.bf16.mxu0 0
    %1893 = vmatpush2.bf16.msra.mxu0 %v1444
    %1894 = vmatprep.subr.bf16.mxu0 0
    %1895 = vmatpush2.bf16.msra.mxu0 %v1443
    %1896 = vmatprep.subr.bf16.mxu0 0
    %1897 = vmatpush2.bf16.msra.mxu0 %v1442
    %1898 = vmatprep.subr.bf16.mxu0 0
    %1899 = vmatpush2.bf16.msra.mxu0 %v1441
    %1900 = vmatprep.subr.bf16.mxu0 0
    %1901 = vmatpush2.bf16.msra.mxu0 %v1440
    %1902 = vmatprep.subr.bf16.mxu0 0
    %1903 = vmatpush2.bf16.msra.mxu0 %v1439
    %1904 = vmatprep.subr.bf16.mxu0 0
    %1905 = vmatpush2.bf16.msra.mxu0 %v1438
    %1906 = vmatprep.mubr.bf16.mxu0 %v473
    %1907 = vmatmul.mubr.bf16.gmra.mxu0 %v459
    %v1908 = vpop.f32.mrf.mxu0
    %v1909 = vadd.f32 %v1869, %v1908
    %v1910 = vpop.f32.mrf.mxu0
    %v1911 = vpop.f32.mrf.mxu0
    %v1912 = vpop.f32.mrf.mxu0
    %1913 = vdwg.mxu0
    %1914 = vmatprep.subr.bf16.mxu0 0
    %1915 = vmatpush1.bf16.msra.mxu0 %v1453
    %1916 = vmatprep.subr.bf16.mxu0 0
    %1917 = vmatpush1.bf16.msra.mxu0 %v1452
    %1918 = vmatprep.subr.bf16.mxu0 0
    %1919 = vmatpush1.bf16.msra.mxu0 %v1451
    %1920 = vmatprep.subr.bf16.mxu0 0
    %1921 = vmatpush1.bf16.msra.mxu0 %v1450
    %1922 = vmatprep.subr.bf16.mxu0 0
    %1923 = vmatpush1.bf16.msra.mxu0 %v1449
    %1924 = vmatprep.subr.bf16.mxu0 0
    %1925 = vmatpush1.bf16.msra.mxu0 %v1448
    %1926 = vmatprep.subr.bf16.mxu0 0
    %1927 = vmatpush1.bf16.msra.mxu0 %v1447
    %1928 = vmatprep.subr.bf16.mxu0 0
    %1929 = vmatpush1.bf16.msra.mxu0 %v1446
    %1930 = vmatprep.subr.bf16.mxu0 0
    %1931 = vmatpush2.bf16.msra.mxu0 %v1461
    %1932 = vmatprep.subr.bf16.mxu0 0
    %1933 = vmatpush2.bf16.msra.mxu0 %v1460
    %1934 = vmatprep.subr.bf16.mxu0 0
    %1935 = vmatpush2.bf16.msra.mxu0 %v1459
    %1936 = vmatprep.subr.bf16.mxu0 0
    %1937 = vmatpush2.bf16.msra.mxu0 %v1458
    %1938 = vmatprep.subr.bf16.mxu0 0
    %1939 = vmatpush2.bf16.msra.mxu0 %v1457
    %1940 = vmatprep.subr.bf16.mxu0 0
    %1941 = vmatpush2.bf16.msra.mxu0 %v1456
    %1942 = vmatprep.subr.bf16.mxu0 0
    %1943 = vmatpush2.bf16.msra.mxu0 %v1455
    %1944 = vmatprep.subr.bf16.mxu0 0
    %1945 = vmatpush2.bf16.msra.mxu0 %v1454
    %1946 = vmatprep.mubr.bf16.mxu0 %v477
    %1947 = vmatmul.mubr.bf16.gmra.mxu0 %v475
    %v1948 = vpop.f32.mrf.mxu0
    %v1949 = vadd.f32 %v1909, %v1948
    %v1950 = vpop.f32.mrf.mxu0
    %v1951 = vpop.f32.mrf.mxu0
    %v1952 = vpop.f32.mrf.mxu0
    %1953 = vdwg.mxu0
    %1954 = vmatprep.subr.bf16.mxu0 0
    %1955 = vmatpush1.bf16.msra.mxu0 %v1469
    %1956 = vmatprep.subr.bf16.mxu0 0
    %1957 = vmatpush1.bf16.msra.mxu0 %v1468
    %1958 = vmatprep.subr.bf16.mxu0 0
    %1959 = vmatpush1.bf16.msra.mxu0 %v1467
    %1960 = vmatprep.subr.bf16.mxu0 0
    %1961 = vmatpush1.bf16.msra.mxu0 %v1466
    %1962 = vmatprep.subr.bf16.mxu0 0
    %1963 = vmatpush1.bf16.msra.mxu0 %v1465
    %1964 = vmatprep.subr.bf16.mxu0 0
    %1965 = vmatpush1.bf16.msra.mxu0 %v1464
    %1966 = vmatprep.subr.bf16.mxu0 0
    %1967 = vmatpush1.bf16.msra.mxu0 %v1463
    %1968 = vmatprep.subr.bf16.mxu0 0
    %1969 = vmatpush1.bf16.msra.mxu0 %v1462
    %1970 = vmatprep.subr.bf16.mxu0 0
    %1971 = vmatpush2.bf16.msra.mxu0 %v1477
    %1972 = vmatprep.subr.bf16.mxu0 0
    %1973 = vmatpush2.bf16.msra.mxu0 %v1476
    %1974 = vmatprep.subr.bf16.mxu0 0
    %1975 = vmatpush2.bf16.msra.mxu0 %v1475
    %1976 = vmatprep.subr.bf16.mxu0 0
    %1977 = vmatpush2.bf16.msra.mxu0 %v1474
    %1978 = vmatprep.subr.bf16.mxu0 0
    %1979 = vmatpush2.bf16.msra.mxu0 %v1473
    %1980 = vmatprep.subr.bf16.mxu0 0
    %1981 = vmatpush2.bf16.msra.mxu0 %v1472
    %1982 = vmatprep.subr.bf16.mxu0 0
    %1983 = vmatpush2.bf16.msra.mxu0 %v1471
    %1984 = vmatprep.subr.bf16.mxu0 0
    %1985 = vmatpush2.bf16.msra.mxu0 %v1470
    %1986 = vmatprep.mubr.bf16.mxu0 %v515
    %1987 = vmatmul.mubr.bf16.gmra.mxu0 %v501
    %v1988 = vpop.f32.mrf.mxu0
    %v1989 = vadd.f32 %v1949, %v1988
    %v1990 = vpop.f32.mrf.mxu0
    %v1991 = vpop.f32.mrf.mxu0
    %v1992 = vpop.f32.mrf.mxu0
    %1993 = vdwg.mxu0
    %1994 = vmatprep.subr.bf16.mxu0 0
    %1995 = vmatpush1.bf16.msra.mxu0 %v1485
    %1996 = vmatprep.subr.bf16.mxu0 0
    %1997 = vmatpush1.bf16.msra.mxu0 %v1484
    %1998 = vmatprep.subr.bf16.mxu0 0
    %1999 = vmatpush1.bf16.msra.mxu0 %v1483
    %2000 = vmatprep.subr.bf16.mxu0 0
    %2001 = vmatpush1.bf16.msra.mxu0 %v1482
    %2002 = vmatprep.subr.bf16.mxu0 0
    %2003 = vmatpush1.bf16.msra.mxu0 %v1481
    %2004 = vmatprep.subr.bf16.mxu0 0
    %2005 = vmatpush1.bf16.msra.mxu0 %v1480
    %2006 = vmatprep.subr.bf16.mxu0 0
    %2007 = vmatpush1.bf16.msra.mxu0 %v1479
    %2008 = vmatprep.subr.bf16.mxu0 0
    %2009 = vmatpush1.bf16.msra.mxu0 %v1478
    %2010 = vmatprep.subr.bf16.mxu0 0
    %2011 = vmatpush2.bf16.msra.mxu0 %v1493
    %2012 = vmatprep.subr.bf16.mxu0 0
    %2013 = vmatpush2.bf16.msra.mxu0 %v1492
    %2014 = vmatprep.subr.bf16.mxu0 0
    %2015 = vmatpush2.bf16.msra.mxu0 %v1491
    %2016 = vmatprep.subr.bf16.mxu0 0
    %2017 = vmatpush2.bf16.msra.mxu0 %v1490
    %2018 = vmatprep.subr.bf16.mxu0 0
    %2019 = vmatpush2.bf16.msra.mxu0 %v1489
    %2020 = vmatprep.subr.bf16.mxu0 0
    %2021 = vmatpush2.bf16.msra.mxu0 %v1488
    %2022 = vmatprep.subr.bf16.mxu0 0
    %2023 = vmatpush2.bf16.msra.mxu0 %v1487
    %2024 = vmatprep.subr.bf16.mxu0 0
    %2025 = vmatpush2.bf16.msra.mxu0 %v1486
    %2026 = vmatprep.mubr.bf16.mxu0 %v525
    %2027 = vmatmul.mubr.bf16.gmra.mxu0 %v523
    %v2028 = vpop.f32.mrf.mxu0
    %v2029 = vadd.f32 %v1989, %v2028
    %v2030 = vpop.f32.mrf.mxu0
    %v2031 = vpop.f32.mrf.mxu0
    %v2032 = vpop.f32.mrf.mxu0
    %2033 = vdwg.mxu0
    %2034 = vmatprep.subr.bf16.mxu0 0
    %2035 = vmatpush1.bf16.msra.mxu0 %v1501
    %2036 = vmatprep.subr.bf16.mxu0 0
    %2037 = vmatpush1.bf16.msra.mxu0 %v1500
    %2038 = vmatprep.subr.bf16.mxu0 0
    %2039 = vmatpush1.bf16.msra.mxu0 %v1499
    %2040 = vmatprep.subr.bf16.mxu0 0
    %2041 = vmatpush1.bf16.msra.mxu0 %v1498
    %2042 = vmatprep.subr.bf16.mxu0 0
    %2043 = vmatpush1.bf16.msra.mxu0 %v1497
    %2044 = vmatprep.subr.bf16.mxu0 0
    %2045 = vmatpush1.bf16.msra.mxu0 %v1496
    %2046 = vmatprep.subr.bf16.mxu0 0
    %2047 = vmatpush1.bf16.msra.mxu0 %v1495
    %2048 = vmatprep.subr.bf16.mxu0 0
    %2049 = vmatpush1.bf16.msra.mxu0 %v1494
    %2050 = vmatprep.subr.bf16.mxu0 0
    %2051 = vmatpush2.bf16.msra.mxu0 %v1509
    %2052 = vmatprep.subr.bf16.mxu0 0
    %2053 = vmatpush2.bf16.msra.mxu0 %v1508
    %2054 = vmatprep.subr.bf16.mxu0 0
    %2055 = vmatpush2.bf16.msra.mxu0 %v1507
    %2056 = vmatprep.subr.bf16.mxu0 0
    %2057 = vmatpush2.bf16.msra.mxu0 %v1506
    %2058 = vmatprep.subr.bf16.mxu0 0
    %2059 = vmatpush2.bf16.msra.mxu0 %v1505
    %2060 = vmatprep.subr.bf16.mxu0 0
    %2061 = vmatpush2.bf16.msra.mxu0 %v1504
    %2062 = vmatprep.subr.bf16.mxu0 0
    %2063 = vmatpush2.bf16.msra.mxu0 %v1503
    %2064 = vmatprep.subr.bf16.mxu0 0
    %2065 = vmatpush2.bf16.msra.mxu0 %v1502
    %2066 = vmatprep.mubr.bf16.mxu0 %v522
    %2067 = vmatmul.mubr.bf16.gmra.mxu0 %v508
    %v2068 = vpop.f32.mrf.mxu0
    %v2069 = vadd.f32 %v2029, %v2068
    %v2070 = vpop.f32.mrf.mxu0
    %v2071 = vpop.f32.mrf.mxu0
    %v2072 = vpop.f32.mrf.mxu0
    %2073 = vdwg.mxu0
    %2074 = vmatprep.subr.bf16.mxu0 0
    %2075 = vmatpush1.bf16.msra.mxu0 %v1517
    %2076 = vmatprep.subr.bf16.mxu0 0
    %2077 = vmatpush1.bf16.msra.mxu0 %v1516
    %2078 = vmatprep.subr.bf16.mxu0 0
    %2079 = vmatpush1.bf16.msra.mxu0 %v1515
    %2080 = vmatprep.subr.bf16.mxu0 0
    %2081 = vmatpush1.bf16.msra.mxu0 %v1514
    %2082 = vmatprep.subr.bf16.mxu0 0
    %2083 = vmatpush1.bf16.msra.mxu0 %v1513
    %2084 = vmatprep.subr.bf16.mxu0 0
    %2085 = vmatpush1.bf16.msra.mxu0 %v1512
    %2086 = vmatprep.subr.bf16.mxu0 0
    %2087 = vmatpush1.bf16.msra.mxu0 %v1511
    %2088 = vmatprep.subr.bf16.mxu0 0
    %2089 = vmatpush1.bf16.msra.mxu0 %v1510
    %2090 = vmatprep.subr.bf16.mxu0 0
    %2091 = vmatpush2.bf16.msra.mxu0 %v1525
    %2092 = vmatprep.subr.bf16.mxu0 0
    %2093 = vmatpush2.bf16.msra.mxu0 %v1524
    %2094 = vmatprep.subr.bf16.mxu0 0
    %2095 = vmatpush2.bf16.msra.mxu0 %v1523
    %2096 = vmatprep.subr.bf16.mxu0 0
    %2097 = vmatpush2.bf16.msra.mxu0 %v1522
    %2098 = vmatprep.subr.bf16.mxu0 0
    %2099 = vmatpush2.bf16.msra.mxu0 %v1521
    %2100 = vmatprep.subr.bf16.mxu0 0
    %2101 = vmatpush2.bf16.msra.mxu0 %v1520
    %2102 = vmatprep.subr.bf16.mxu0 0
    %2103 = vmatpush2.bf16.msra.mxu0 %v1519
    %2104 = vmatprep.subr.bf16.mxu0 0
    %2105 = vmatpush2.bf16.msra.mxu0 %v1518
    %2106 = vmatprep.mubr.bf16.mxu0 %v526
    %2107 = vmatmul.mubr.bf16.gmra.mxu0 %v524
    %v2108 = vpop.f32.mrf.mxu0
    %v2109 = vadd.f32 %v2069, %v2108
    %v2110 = vpop.f32.mrf.mxu0
    %v2111 = vpop.f32.mrf.mxu0
    %v2112 = vpop.f32.mrf.mxu0
    %2113 = vdwg.mxu0
    %2114 = vmatprep.subr.bf16.mxu0 0
    %2115 = vmatpush1.bf16.msra.mxu0 %v1533
    %2116 = vmatprep.subr.bf16.mxu0 0
    %2117 = vmatpush1.bf16.msra.mxu0 %v1532
    %2118 = vmatprep.subr.bf16.mxu0 0
    %2119 = vmatpush1.bf16.msra.mxu0 %v1531
    %2120 = vmatprep.subr.bf16.mxu0 0
    %2121 = vmatpush1.bf16.msra.mxu0 %v1530
    %2122 = vmatprep.subr.bf16.mxu0 0
    %2123 = vmatpush1.bf16.msra.mxu0 %v1529
    %2124 = vmatprep.subr.bf16.mxu0 0
    %2125 = vmatpush1.bf16.msra.mxu0 %v1528
    %2126 = vmatprep.subr.bf16.mxu0 0
    %2127 = vmatpush1.bf16.msra.mxu0 %v1527
    %2128 = vmatprep.subr.bf16.mxu0 0
    %2129 = vmatpush1.bf16.msra.mxu0 %v1526
    %2130 = vmatprep.subr.bf16.mxu0 0
    %2131 = vmatpush2.bf16.msra.mxu0 %v1541
    %2132 = vmatprep.subr.bf16.mxu0 0
    %2133 = vmatpush2.bf16.msra.mxu0 %v1540
    %2134 = vmatprep.subr.bf16.mxu0 0
    %2135 = vmatpush2.bf16.msra.mxu0 %v1539
    %2136 = vmatprep.subr.bf16.mxu0 0
    %2137 = vmatpush2.bf16.msra.mxu0 %v1538
    %2138 = vmatprep.subr.bf16.mxu0 0
    %2139 = vmatpush2.bf16.msra.mxu0 %v1537
    %2140 = vmatprep.subr.bf16.mxu0 0
    %2141 = vmatpush2.bf16.msra.mxu0 %v1536
    %2142 = vmatprep.subr.bf16.mxu0 0
    %2143 = vmatpush2.bf16.msra.mxu0 %v1535
    %2144 = vmatprep.subr.bf16.mxu0 0
    %2145 = vmatpush2.bf16.msra.mxu0 %v1534
    %2146 = vmatprep.mubr.bf16.mxu0 %v564
    %2147 = vmatmul.mubr.bf16.gmra.mxu0 %v550
    %v2148 = vpop.f32.mrf.mxu0
    %v2149 = vadd.f32 %v2109, %v2148
    %v2150 = vpop.f32.mrf.mxu0
    %v2151 = vpop.f32.mrf.mxu0
    %v2152 = vpop.f32.mrf.mxu0
    %2153 = vdwg.mxu0
    %2154 = vmatprep.subr.bf16.mxu0 0
    %2155 = vmatpush1.bf16.msra.mxu0 %v1549
    %2156 = vmatprep.subr.bf16.mxu0 0
    %2157 = vmatpush1.bf16.msra.mxu0 %v1548
    %2158 = vmatprep.subr.bf16.mxu0 0
    %2159 = vmatpush1.bf16.msra.mxu0 %v1547
    %2160 = vmatprep.subr.bf16.mxu0 0
    %2161 = vmatpush1.bf16.msra.mxu0 %v1546
    %2162 = vmatprep.subr.bf16.mxu0 0
    %2163 = vmatpush1.bf16.msra.mxu0 %v1545
    %2164 = vmatprep.subr.bf16.mxu0 0
    %2165 = vmatpush1.bf16.msra.mxu0 %v1544
    %2166 = vmatprep.subr.bf16.mxu0 0
    %2167 = vmatpush1.bf16.msra.mxu0 %v1543
    %2168 = vmatprep.subr.bf16.mxu0 0
    %2169 = vmatpush1.bf16.msra.mxu0 %v1542
    %2170 = vmatprep.subr.bf16.mxu0 0
    %2171 = vmatpush2.bf16.msra.mxu0 %v1557
    %2172 = vmatprep.subr.bf16.mxu0 0
    %2173 = vmatpush2.bf16.msra.mxu0 %v1556
    %2174 = vmatprep.subr.bf16.mxu0 0
    %2175 = vmatpush2.bf16.msra.mxu0 %v1555
    %2176 = vmatprep.subr.bf16.mxu0 0
    %2177 = vmatpush2.bf16.msra.mxu0 %v1554
    %2178 = vmatprep.subr.bf16.mxu0 0
    %2179 = vmatpush2.bf16.msra.mxu0 %v1553
    %2180 = vmatprep.subr.bf16.mxu0 0
    %2181 = vmatpush2.bf16.msra.mxu0 %v1552
    %2182 = vmatprep.subr.bf16.mxu0 0
    %2183 = vmatpush2.bf16.msra.mxu0 %v1551
    %2184 = vmatprep.subr.bf16.mxu0 0
    %2185 = vmatpush2.bf16.msra.mxu0 %v1550
    %2186 = vmatprep.mubr.bf16.mxu0 %v574
    %2187 = vmatmul.mubr.bf16.gmra.mxu0 %v572
    %v2188 = vpop.f32.mrf.mxu0
    %v2189 = vadd.f32 %v2149, %v2188
    %v2190 = vpop.f32.mrf.mxu0
    %v2191 = vpop.f32.mrf.mxu0
    %v2192 = vpop.f32.mrf.mxu0
    %2193 = vdwg.mxu0
    %2194 = vmatprep.subr.bf16.mxu0 0
    %2195 = vmatpush1.bf16.msra.mxu0 %v1565
    %2196 = vmatprep.subr.bf16.mxu0 0
    %2197 = vmatpush1.bf16.msra.mxu0 %v1564
    %2198 = vmatprep.subr.bf16.mxu0 0
    %2199 = vmatpush1.bf16.msra.mxu0 %v1563
    %2200 = vmatprep.subr.bf16.mxu0 0
    %2201 = vmatpush1.bf16.msra.mxu0 %v1562
    %2202 = vmatprep.subr.bf16.mxu0 0
    %2203 = vmatpush1.bf16.msra.mxu0 %v1561
    %2204 = vmatprep.subr.bf16.mxu0 0
    %2205 = vmatpush1.bf16.msra.mxu0 %v1560
    %2206 = vmatprep.subr.bf16.mxu0 0
    %2207 = vmatpush1.bf16.msra.mxu0 %v1559
    %2208 = vmatprep.subr.bf16.mxu0 0
    %2209 = vmatpush1.bf16.msra.mxu0 %v1558
    %2210 = vmatprep.subr.bf16.mxu0 0
    %2211 = vmatpush2.bf16.msra.mxu0 %v1573
    %2212 = vmatprep.subr.bf16.mxu0 0
    %2213 = vmatpush2.bf16.msra.mxu0 %v1572
    %2214 = vmatprep.subr.bf16.mxu0 0
    %2215 = vmatpush2.bf16.msra.mxu0 %v1571
    %2216 = vmatprep.subr.bf16.mxu0 0
    %2217 = vmatpush2.bf16.msra.mxu0 %v1570
    %2218 = vmatprep.subr.bf16.mxu0 0
    %2219 = vmatpush2.bf16.msra.mxu0 %v1569
    %2220 = vmatprep.subr.bf16.mxu0 0
    %2221 = vmatpush2.bf16.msra.mxu0 %v1568
    %2222 = vmatprep.subr.bf16.mxu0 0
    %2223 = vmatpush2.bf16.msra.mxu0 %v1567
    %2224 = vmatprep.subr.bf16.mxu0 0
    %2225 = vmatpush2.bf16.msra.mxu0 %v1566
    %2226 = vmatprep.mubr.bf16.mxu0 %v571
    %2227 = vmatmul.mubr.bf16.gmra.mxu0 %v557
    %v2228 = vpop.f32.mrf.mxu0
    %v2229 = vadd.f32 %v2189, %v2228
    %v2230 = vpop.f32.mrf.mxu0
    %v2231 = vpop.f32.mrf.mxu0
    %v2232 = vpop.f32.mrf.mxu0
    %2233 = vdwg.mxu0
    %2234 = vmatprep.subr.bf16.mxu0 0
    %2235 = vmatpush1.bf16.msra.mxu0 %v1581
    %2236 = vmatprep.subr.bf16.mxu0 0
    %2237 = vmatpush1.bf16.msra.mxu0 %v1580
    %2238 = vmatprep.subr.bf16.mxu0 0
    %2239 = vmatpush1.bf16.msra.mxu0 %v1579
    %2240 = vmatprep.subr.bf16.mxu0 0
    %2241 = vmatpush1.bf16.msra.mxu0 %v1578
    %2242 = vmatprep.subr.bf16.mxu0 0
    %2243 = vmatpush1.bf16.msra.mxu0 %v1577
    %2244 = vmatprep.subr.bf16.mxu0 0
    %2245 = vmatpush1.bf16.msra.mxu0 %v1576
    %2246 = vmatprep.subr.bf16.mxu0 0
    %2247 = vmatpush1.bf16.msra.mxu0 %v1575
    %2248 = vmatprep.subr.bf16.mxu0 0
    %2249 = vmatpush1.bf16.msra.mxu0 %v1574
    %2250 = vmatprep.subr.bf16.mxu0 0
    %2251 = vmatpush2.bf16.msra.mxu0 %v1589
    %2252 = vmatprep.subr.bf16.mxu0 0
    %2253 = vmatpush2.bf16.msra.mxu0 %v1588
    %2254 = vmatprep.subr.bf16.mxu0 0
    %2255 = vmatpush2.bf16.msra.mxu0 %v1587
    %2256 = vmatprep.subr.bf16.mxu0 0
    %2257 = vmatpush2.bf16.msra.mxu0 %v1586
    %2258 = vmatprep.subr.bf16.mxu0 0
    %2259 = vmatpush2.bf16.msra.mxu0 %v1585
    %2260 = vmatprep.subr.bf16.mxu0 0
    %2261 = vmatpush2.bf16.msra.mxu0 %v1584
    %2262 = vmatprep.subr.bf16.mxu0 0
    %2263 = vmatpush2.bf16.msra.mxu0 %v1583
    %2264 = vmatprep.subr.bf16.mxu0 0
    %2265 = vmatpush2.bf16.msra.mxu0 %v1582
    %2266 = vmatprep.mubr.bf16.mxu0 %v575
    %2267 = vmatmul.mubr.bf16.gmra.mxu0 %v573
    %v2268 = vpop.f32.mrf.mxu0
    %v2269 = vadd.f32 %v2229, %v2268
    %v2270 = vpop.f32.mrf.mxu0
    %v2271 = vpop.f32.mrf.mxu0
    %v2272 = vpop.f32.mrf.mxu0
    %2273 = vdwg.mxu0
    %2274 = vmatprep.subr.bf16.mxu0 0
    %2275 = vmatpush1.bf16.msra.mxu0 0
    %2276 = vmatprep.subr.bf16.mxu0 0
    %2277 = vmatpush1.bf16.msra.mxu0 0
    %2278 = vmatprep.subr.bf16.mxu0 0
    %2279 = vmatpush1.bf16.msra.mxu0 0
    %2280 = vmatprep.subr.bf16.mxu0 0
    %2281 = vmatpush1.bf16.msra.mxu0 0
    %2282 = vmatprep.subr.bf16.mxu0 0
    %2283 = vmatpush1.bf16.msra.mxu0 %v1593
    %2284 = vmatprep.subr.bf16.mxu0 0
    %2285 = vmatpush1.bf16.msra.mxu0 %v1592
    %2286 = vmatprep.subr.bf16.mxu0 0
    %2287 = vmatpush1.bf16.msra.mxu0 %v1591
    %2288 = vmatprep.subr.bf16.mxu0 0
    %2289 = vmatpush1.bf16.msra.mxu0 %v1590
    %2290 = vmatprep.subr.bf16.mxu0 0
    %2291 = vmatpush2.bf16.msra.mxu0 0
    %2292 = vmatprep.subr.bf16.mxu0 0
    %2293 = vmatpush2.bf16.msra.mxu0 0
    %2294 = vmatprep.subr.bf16.mxu0 0
    %2295 = vmatpush2.bf16.msra.mxu0 0
    %2296 = vmatprep.subr.bf16.mxu0 0
    %2297 = vmatpush2.bf16.msra.mxu0 0
    %2298 = vmatprep.subr.bf16.mxu0 0
    %2299 = vmatpush2.bf16.msra.mxu0 0
    %2300 = vmatprep.subr.bf16.mxu0 0
    %2301 = vmatpush2.bf16.msra.mxu0 0
    %2302 = vmatprep.subr.bf16.mxu0 0
    %2303 = vmatpush2.bf16.msra.mxu0 0
    %2304 = vmatprep.subr.bf16.mxu0 0
    %2305 = vmatpush2.bf16.msra.mxu0 0
    %2306 = vmatprep.mubr.bf16.mxu0 0
    %2307 = vmatmul.mubr.bf16.gmra.mxu0 %v1792
    %v2308 = vpop.f32.mrf.mxu0
    %v2309 = vadd.f32 %v2269, %v2308
    %v2310 = vpop.f32.mrf.mxu0
    %v2311 = vpop.f32.mrf.mxu0
    %v2312 = vpop.f32.mrf.mxu0
    %2313 = vdwg.mxu0
    %v2314 = vmax.f32 %v2309, 0.0
    %v2315 = vld [vmem:[%s3] sm:$0xff]
    %v2316 = vld [vmem:[%s3 + $0x8] sm:$0xff]
    %v2317 = vld [vmem:[%s3 + $0x10] sm:$0xff]
    %v2318 = vld [vmem:[%s3 + $0x18] sm:$0xff]
    %v2319 = vld [vmem:[%s3 + $0x20] sm:$0xff]
    %v2320 = vld [vmem:[%s3 + $0x28] sm:$0xff]
    %v2321 = vld [vmem:[%s3 + $0x30] sm:$0xff]
    %v2322 = vld [vmem:[%s3 + $0x38] sm:$0xff]
    %v2323 = vld [vmem:[%s3 + $0x40] sm:$0xff]
    %v2324 = vld [vmem:[%s3 + $0x48] sm:$0xff]
    %v2325 = vld [vmem:[%s3 + $0x50] sm:$0xff]
    %v2326 = vld [vmem:[%s3 + $0x58] sm:$0xff]
    %v2327 = vld [vmem:[%s3 + $0x60] sm:$0xff]
    %v2328 = vld [vmem:[%s3 + $0x68] sm:$0xff]
    %v2329 = vld [vmem:[%s3 + $0x70] sm:$0xff]
    %v2330 = vld [vmem:[%s3 + $0x78] sm:$0xff]
    %v2331 = vld [vmem:[%s4] sm:$0x1]
    %v2333 = vlaneseq
    %v2334 = vshrl.u32 %v2333, 7
    %v2335 = vsub.s32 0, %v2334
    %v2336 = vrot.slane %v2331, %v2335
    %2338 = vmatprep.subr.mxu0 0.0
    %2339 = vmatpush1.msra.mxu0 %v2330
    %2340 = vmatprep.subr.mxu0 0.0
    %2341 = vmatpush1.msra.mxu0 %v2329
    %2342 = vmatprep.subr.mxu0 0.0
    %2343 = vmatpush1.msra.mxu0 %v2328
    %2344 = vmatprep.subr.mxu0 0.0
    %2345 = vmatpush1.msra.mxu0 %v2327
    %2346 = vmatprep.subr.mxu0 0.0
    %2347 = vmatpush1.msra.mxu0 %v2326
    %2348 = vmatprep.subr.mxu0 0.0
    %2349 = vmatpush1.msra.mxu0 %v2325
    %2350 = vmatprep.subr.mxu0 0.0
    %2351 = vmatpush1.msra.mxu0 %v2324
    %2352 = vmatprep.subr.mxu0 0.0
    %2353 = vmatpush1.msra.mxu0 %v2323
    %2354 = vmatprep.subr.mxu0 0.0
    %2355 = vmatpush1.msra.mxu0 %v2322
    %2356 = vmatprep.subr.mxu0 0.0
    %2357 = vmatpush1.msra.mxu0 %v2321
    %2358 = vmatprep.subr.mxu0 0.0
    %2359 = vmatpush1.msra.mxu0 %v2320
    %2360 = vmatprep.subr.mxu0 0.0
    %2361 = vmatpush1.msra.mxu0 %v2319
    %2362 = vmatprep.subr.mxu0 0.0
    %2363 = vmatpush1.msra.mxu0 %v2318
    %2364 = vmatprep.subr.mxu0 0.0
    %2365 = vmatpush1.msra.mxu0 %v2317
    %2366 = vmatprep.subr.mxu0 0.0
    %2367 = vmatpush1.msra.mxu0 %v2316
    %2368 = vmatprep.subr.mxu0 0.0
    %2369 = vmatpush1.msra.mxu0 %v2315
    %2370 = vmatprep.subr.mxu0 0.0
    %2371 = vmatpush2.msra.mxu0 0.0
    %2372 = vmatprep.subr.mxu0 0.0
    %2373 = vmatpush2.msra.mxu0 0.0
    %2374 = vmatprep.subr.mxu0 0.0
    %2375 = vmatpush2.msra.mxu0 0.0
    %2376 = vmatprep.subr.mxu0 0.0
    %2377 = vmatpush2.msra.mxu0 0.0
    %2378 = vmatprep.subr.mxu0 0.0
    %2379 = vmatpush2.msra.mxu0 0.0
    %2380 = vmatprep.subr.mxu0 0.0
    %2381 = vmatpush2.msra.mxu0 0.0
    %2382 = vmatprep.subr.mxu0 0.0
    %2383 = vmatpush2.msra.mxu0 0.0
    %2384 = vmatprep.subr.mxu0 0.0
    %2385 = vmatpush2.msra.mxu0 0.0
    %2386 = vmatprep.subr.mxu0 0.0
    %2387 = vmatpush2.msra.mxu0 0.0
    %2388 = vmatprep.subr.mxu0 0.0
    %2389 = vmatpush2.msra.mxu0 0.0
    %2390 = vmatprep.subr.mxu0 0.0
    %2391 = vmatpush2.msra.mxu0 0.0
    %2392 = vmatprep.subr.mxu0 0.0
    %2393 = vmatpush2.msra.mxu0 0.0
    %2394 = vmatprep.subr.mxu0 0.0
    %2395 = vmatpush2.msra.mxu0 0.0
    %2396 = vmatprep.subr.mxu0 0.0
    %2397 = vmatpush2.msra.mxu0 0.0
    %2398 = vmatprep.subr.mxu0 0.0
    %2399 = vmatpush2.msra.mxu0 0.0
    %2400 = vmatprep.subr.mxu0 0.0
    %2401 = vmatpush2.msra.mxu0 0.0
    %2402 = vmatprep.mubr.f32.mxu0 0.0
    %2403 = vmatmul.mubr.f32.gmra.mxu0 %v2314
    %v2404 = vpop.f32.mrf.mxu0
    %v2405 = vadd.f32 %v2336, %v2404
    %v2406 = vpop.f32.mrf.mxu0
    %2407 = vdwg.mxu0
    %vm2408 = vcmask 74752
    %2409 = vst.msk [vmem:[#allocation2] sm:$0x3] %vm2408, %v2405
    // Predicated region
    $region22: #{cnn_fmnist_forward.5} parent=1 // pred_check
      _
    $region23: #{cnn_fmnist_forward.5} parent=1 // pred_check_branch
      %2411 = sbr.rel (0) target = $region25
    $region24: #{cnn_fmnist_forward.5} parent=1 // pred_region
      %s2413 = ssub.s32 32, 32
      %2414 = vsyncadd [#allocation3], %s2413
      %s2416 = sshll.u32 [#allocation2], 4
      %s2417 = int_to_ptr.vmem [resolvable:$true] %s2416
      %2419 = dma.vmem_to_hbm [thread:$0]  %s2417, 32, %s5, [#allocation3]
    $region25: #{cnn_fmnist_forward.5} parent=1 // pred_fallthru
      _
    // Predicated region
    $region26: #{cnn_fmnist_forward.5} parent=1 // pred_check
      _
    $region27: #{cnn_fmnist_forward.5} parent=1 // pred_check_branch
      %2421 = sbr.rel (0) target = $region29
    $region28: #{cnn_fmnist_forward.5} parent=1 // pred_region
      %2422 = dma.done [#allocation3], 32
    $region29: #{cnn_fmnist_forward.5} parent=1 // pred_fallthru
      _
    %2423 = vsyncpa [#allocation3], 1

</llo_original>
